<compile_context>
chip_gen: v6e
topology: v6e:2x2x1
jax: 0.10.0
libtpu: 0.0.40
codegen_flags: <defaults>
</compile_context>

<pallas_src>
import functools
import math

import jax
import jax.numpy as jnp
from jax.experimental import pallas as pl
from jax.experimental.pallas import tpu as pltpu

LN_EPS = 1e-12          # PLUS-TFM LayerNorm variance_epsilon
_SQRT2 = math.sqrt(2.0)


# ----------------------------- in-kernel helpers -----------------------------

def _layer_norm(x, gamma, beta):
    # f32 statistics
    mu = jnp.mean(x, axis=-1, keepdims=True)
    var = jnp.mean(jnp.square(x - mu), axis=-1, keepdims=True)
    return gamma * ((x - mu) * jax.lax.rsqrt(var + LN_EPS)) + beta


def _gelu(x):
    # exact (erf-based) GELU, as used by PLUS-TFM
    return x * 0.5 * (1.0 + jax.lax.erf(x / _SQRT2))


# --------------------------------- kernel ------------------------------------

def encoder_kernel(num_heads,
                   e_ref, nm_ref, eg_ref, eb_ref,
                   wqkv_ref, bqkv_ref, wo_ref, bo_ref,
                   g1_ref, be1_ref, w1_ref, b1_ref,
                   w2_ref, b2_ref, g2_ref, be2_ref,
                   wc_ref, bc_ref,
                   cls_ref,
                   h_ref):
    """Grid = (batch_block, layer).  h_ref is a persistent VMEM scratch holding the
    (Bt*S, H) f32 hidden-state carry across the layer axis; cls_ref (Bt,1,Cpad) is
    written only on the last layer."""
    layer = pl.program_id(1)
    n_layers = pl.num_programs(1)

    Bt, S, H = e_ref.shape
    T = Bt * S
    nH = num_heads
    dh = H // nH
    NB = nH * Bt
    scale = 1.0 / math.sqrt(dh)

    # ---- layer 0: embedding LayerNorm into the resident carry --------------------
    @pl.when(layer == 0)
    def _():
        x0 = e_ref[...].astype(jnp.float32).reshape(T, H)
        h_ref[...] = _layer_norm(x0, eg_ref[...], eb_ref[...])

    x = h_ref[...]                               # (T, H) f32, resident across layers
    xb = x.astype(jnp.bfloat16)

    # ---- multi-head self-attention ------------------------------------------------
    # fused (H, 3H) QKV projection over all Bt*S rows (one big MXU matmul)
    qkv = (jnp.dot(xb, wqkv_ref[0], preferred_element_type=jnp.float32)
           + bqkv_ref[0]).astype(jnp.bfloat16)                           # (T, 3H)

    def split_heads(off):
        # per-head lane slices stacked on a leading head axis -> (nH, T, dh)
        return jnp.stack(
            [qkv[:, off + n * dh: off + (n + 1) * dh] for n in range(nH)], axis=0)

    # fold attention scale into q (touches T*H elems, not NB*S*S); then split the
    # merged (Bt*S) rows back into a per-sequence attention batch of size nH*Bt.
    q3 = (split_heads(0) * scale).reshape(NB, S, dh)                     # (NB, S, dh)
    k3 = split_heads(H).reshape(NB, S, dh)
    v3 = split_heads(2 * H).reshape(NB, S, dh)

    s = jnp.einsum('nqd,nkd->nqk', q3, k3,
                   preferred_element_type=jnp.float32)                   # (NB, S, S)
    # additive padding mask per sequence: (Bt,1,S) broadcast over heads/queries
    s = (s.reshape(nH, Bt, S, S) + nm_ref[...][None, :, :, :]).reshape(NB, S, S)
    s = s - jnp.max(s, axis=-1, keepdims=True)
    p = jnp.exp(s)
    p = p * pl.reciprocal(jnp.sum(p, axis=-1, keepdims=True), approx=True)

    ctx = jnp.einsum('nqk,nkd->nqd', p.astype(jnp.bfloat16), v3,
                     preferred_element_type=jnp.float32)                 # (NB, S, dh)

    # output projection: contract the head axis against head-split Wo (nH, dh, H),
    # no concat relayout back to (T, H).
    ctx_h = ctx.reshape(nH, T, dh).astype(jnp.bfloat16)
    proj = jnp.einsum('ntd,ndh->nth', ctx_h, wo_ref[0],
                      preferred_element_type=jnp.float32)                # (nH, T, H)
    attn = jnp.sum(proj, axis=0) + bo_ref[0]                             # (T, H)

    h1 = _layer_norm(x + attn, g1_ref[0], be1_ref[0])

    # ---- feed-forward --------------------------------------------------------------
    f = jnp.dot(h1.astype(jnp.bfloat16), w1_ref[0],
                preferred_element_type=jnp.float32) + b1_ref[0]          # (T, FF)
    f = _gelu(f)
    y = jnp.dot(f.astype(jnp.bfloat16), w2_ref[0],
                preferred_element_type=jnp.float32) + b2_ref[0]          # (T, H)

    new_h = _layer_norm(h1 + y, g2_ref[0], be2_ref[0])
    h_ref[...] = new_h

    # ---- classifier on the [CLS] token after the last layer ------------------------
    @pl.when(layer == n_layers - 1)
    def _():
        cls_tok = new_h.reshape(Bt, S, H)[:, 0, :]                       # (Bt, H)
        logits = jnp.dot(cls_tok, wc_ref[...],
                         preferred_element_type=jnp.float32) + bc_ref[...]
        cls_ref[...] = logits[:, None, :]                                # (Bt, 1, Cpad)


# ------------------------------ pallas wrapper --------------------------------

def _vmem_limit_bytes(S, H, FF, Bt, n_heads):
    """Generation-aware VMEM budget: working-set estimate, capped below the physical
    per-core VMEM (64 MiB on v7x, 128 MiB on v5e/v6e) with headroom for Mosaic scratch."""
    T = Bt * S
    nb = n_heads * Bt
    weights = 2 * 2 * (H * 3 * H + H * H + 2 * H * FF)        # double-buffered bf16 layer weights
    acts = 4 * (4 * T * H + T * 3 * H + 2 * T * FF
                + 2 * nb * S * S + n_heads * T * H)           # rough f32 temporaries
    est = weights + acts + (4 << 20)
    try:
        phys = int(pltpu.get_tpu_info().vmem_capacity_bytes)
    except Exception:
        phys = 64 << 20                                       # conservative (v7x per-core)
    cap = phys - (8 << 20)                                    # headroom
    return int(max(16 << 20, min(est, cap)))


def protein_chembert_forward(params, tokens, segments, input_mask, num_heads,
                             *, block_batch=None):
    B, S = tokens.shape
    H = params['tok_embed'].shape[1]
    FF = params['w1'].shape[2]
    L = params['wqkv'].shape[0]
    C = params['wc'].shape[1]
    dh = H // num_heads
    assert H % num_heads == 0
    assert S % 8 == 0, "sequence length must be a multiple of 8 (sublane tiling)"

    # Bt sequences per grid step: amortizes layer-weight DMA and grows MXU M = Bt*S.
    # On v7x prefer B//Bt >= 2 so the 'parallel' batch axis shards across both cores;
    # on v5e pick Bt so Bt*S is a multiple of 128 (256 on v6e/v7x) when possible.
    if block_batch is None:
        block_batch = 1
        for cand in (16, 8, 4, 2):
            if B % cand == 0 and B // cand >= 2:
                block_batch = cand
                break
    Bt = block_batch
    assert B % Bt == 0
    n_blocks = B // Bt

    C_pad = max(128, ((C + 127) // 128) * 128)

    # embedding gathers are glue (plain JAX); summed embeddings DMA'd in bf16
    e = (params['tok_embed'][tokens]
         + params['pos_embed'][jnp.arange(S)][None, :, :]
         + params['seg_embed'][segments]).astype(jnp.bfloat16)
    neg_mask = (-10000.0 * (1.0 - input_mask.astype(jnp.float32)))[:, None, :]   # (B,1,S)

    # head-split output projection weight: Wo[n*dh+d, h] -> wo_h[l, n, d, h]
    wo_h = params['wo'].reshape(L, num_heads, dh, H)
    # classifier padded to a lane-dense (128-wide) output block
    wc_p = jnp.zeros((H, C_pad), jnp.float32).at[:, :C].set(params['wc'])
    bc_p = jnp.zeros((1, C_pad), jnp.float32).at[:, :C].set(params['bc'])

    bmap = lambda b, l: (b, 0, 0)     # per-batch-block inputs (constant across layers)
    lmap = lambda b, l: (l, 0, 0)     # stacked per-layer weights (auto double-buffered)
    lmap4 = lambda b, l: (l, 0, 0, 0)
    c2 = lambda b, l: (0, 0)

    # NOTE: if per-layer compute is short relative to weight DMA, the big weight specs
    # (wqkv/w1/w2) can be given pipeline_mode=pl.Buffered(3); keep 2 when VMEM-bound.
    in_specs = [
        pl.BlockSpec((Bt, S, H), bmap),           # summed embeddings (bf16)
        pl.BlockSpec((Bt, 1, S), bmap),           # additive attention mask
        pl.BlockSpec((1, H), c2),                 # embedding LN gamma
        pl.BlockSpec((1, H), c2),                 # embedding LN beta
        pl.BlockSpec((1, H, 3 * H), lmap),        # fused Wqkv
        pl.BlockSpec((1, 1, 3 * H), lmap),        # fused bqkv
        pl.BlockSpec((1, num_heads, dh, H), lmap4),   # head-split Wo
        pl.BlockSpec((1, 1, H), lmap),            # bo
        pl.BlockSpec((1, 1, H), lmap),            # LN1 gamma
        pl.BlockSpec((1, 1, H), lmap),            # LN1 beta
        pl.BlockSpec((1, H, FF), lmap),           # W1
        pl.BlockSpec((1, 1, FF), lmap),           # b1
        pl.BlockSpec((1, FF, H), lmap),           # W2
        pl.BlockSpec((1, 1, H), lmap),            # b2
        pl.BlockSpec((1, 1, H), lmap),            # LN2 gamma
        pl.BlockSpec((1, 1, H), lmap),            # LN2 beta
        pl.BlockSpec((H, C_pad), c2),             # classifier W (lane-padded)
        pl.BlockSpec((1, C_pad), c2),             # classifier b (lane-padded)
    ]
    out_specs = pl.BlockSpec((Bt, 1, C_pad), bmap)     # [CLS] logits only

    logits = pl.pallas_call(
        functools.partial(encoder_kernel, num_heads),
        out_shape=jax.ShapeDtypeStruct((B, 1, C_pad), jnp.float32),
        grid_spec=pltpu.PrefetchScalarGridSpec(
            num_scalar_prefetch=0,
            grid=(n_blocks, L),                   # (batch_block, layer); layer innermost
            in_specs=in_specs,
            out_specs=out_specs,
            scratch_shapes=[pltpu.VMEM((Bt * S, H), jnp.float32)],   # hidden-state carry
        ),
        compiler_params=pltpu.CompilerParams(
            dimension_semantics=("parallel", "arbitrary"),
            vmem_limit_bytes=_vmem_limit_bytes(S, H, FF, Bt, num_heads)),
    )(e, neg_mask, params['emb_g'], params['emb_b'],
      params['wqkv'], params['bqkv'], wo_h, params['bo'],
      params['g1'], params['be1'], params['w1'], params['b1'],
      params['w2'], params['b2'], params['g2'], params['be2'],
      wc_p, bc_p)
    return logits[:, 0, :C]                       # (B, n_classes)


# ------------------------------- parameter init -------------------------------

def init_params(key, *, vocab, max_len, n_seg, hidden, ff, n_layers, n_cls):
    ks = iter(jax.random.split(key, 32))
    f32, bf16 = jnp.float32, jnp.bfloat16

    def nrm(shape, dtype=f32, scale=0.02):
        return (scale * jax.random.normal(next(ks), shape)).astype(dtype)

    return {
        'tok_embed': nrm((vocab, hidden)),
        'pos_embed': nrm((max_len, hidden)),
        'seg_embed': nrm((n_seg, hidden)),
        'emb_g': jnp.ones((1, hidden), f32),
        'emb_b': jnp.zeros((1, hidden), f32),
        # per-layer weights stacked on a leading L axis; big matrices stored bf16
        'wqkv': nrm((n_layers, hidden, 3 * hidden), bf16),
        'bqkv': jnp.zeros((n_layers, 1, 3 * hidden), f32),
        'wo': nrm((n_layers, hidden, hidden), bf16),
        'bo': jnp.zeros((n_layers, 1, hidden), f32),
        'g1': jnp.ones((n_layers, 1, hidden), f32),
        'be1': jnp.zeros((n_layers, 1, hidden), f32),
        'w1': nrm((n_layers, hidden, ff), bf16),
        'b1': jnp.zeros((n_layers, 1, ff), f32),
        'w2': nrm((n_layers, ff, hidden), bf16),
        'b2': jnp.zeros((n_layers, 1, hidden), f32),
        'g2': jnp.ones((n_layers, 1, hidden), f32),
        'be2': jnp.zeros((n_layers, 1, hidden), f32),
        'wc': nrm((hidden, n_cls)),
        'bc': jnp.zeros((1, n_cls), f32),
    }


# ----------------------------------- main -------------------------------------

if __name__ == "__main__":
    # small but lane-dense toy configuration (H = 128 = lane width)
    B, S, H = 4, 16, 128
    NUM_HEADS, FF = 4, 256
    VOCAB, MAX_LEN, N_SEG = 25, 32, 2
    N_LAYERS, N_CLS = 3, 3

    key = jax.random.PRNGKey(0)
    pkey, tkey, skey = jax.random.split(key, 3)

    params = init_params(pkey, vocab=VOCAB, max_len=MAX_LEN, n_seg=N_SEG,
                         hidden=H, ff=FF, n_layers=N_LAYERS, n_cls=N_CLS)

    tokens = jax.random.randint(tkey, (B, S), 0, VOCAB, dtype=jnp.int32)
    segments = jax.random.randint(skey, (B, S), 0, N_SEG, dtype=jnp.int32)
    input_mask = jnp.ones((B, S), jnp.int32).at[1, 12:].set(0).at[3, 10:].set(0)

    logits = protein_chembert_forward(params, tokens, segments, input_mask,
                                      NUM_HEADS, block_batch=2)
    jax.block_until_ready(logits)

    assert logits.shape == (B, N_CLS), logits.shape
    assert bool(jnp.all(jnp.isfinite(logits)))
    print("KERNEL_OK")
</pallas_src>

<mosaic_0001>
module attributes {stable_mosaic.version = 11 : i64} {
  func.func @encoder_kernel(%arg0: i32, %arg1: i32, %arg2: memref<2x16x128xbf16, #tpu.memory_space<vmem>>, %arg3: memref<2x1x16xf32, #tpu.memory_space<vmem>>, %arg4: memref<1x128xf32, #tpu.memory_space<vmem>>, %arg5: memref<1x128xf32, #tpu.memory_space<vmem>>, %arg6: memref<1x128x384xbf16, #tpu.memory_space<vmem>>, %arg7: memref<1x1x384xf32, #tpu.memory_space<vmem>>, %arg8: memref<1x4x32x128xbf16, #tpu.memory_space<vmem>>, %arg9: memref<1x1x128xf32, #tpu.memory_space<vmem>>, %arg10: memref<1x1x128xf32, #tpu.memory_space<vmem>>, %arg11: memref<1x1x128xf32, #tpu.memory_space<vmem>>, %arg12: memref<1x128x256xbf16, #tpu.memory_space<vmem>>, %arg13: memref<1x1x256xf32, #tpu.memory_space<vmem>>, %arg14: memref<1x256x128xbf16, #tpu.memory_space<vmem>>, %arg15: memref<1x1x128xf32, #tpu.memory_space<vmem>>, %arg16: memref<1x1x128xf32, #tpu.memory_space<vmem>>, %arg17: memref<1x1x128xf32, #tpu.memory_space<vmem>>, %arg18: memref<128x128xf32, #tpu.memory_space<vmem>>, %arg19: memref<1x128xf32, #tpu.memory_space<vmem>>, %arg20: memref<2x1x128xf32, #tpu.memory_space<vmem>>, %arg21: memref<32x128xf32, #tpu.memory_space<vmem>>) attributes {dimension_semantics = [#tpu.dimension_semantics<parallel>, #tpu.dimension_semantics<arbitrary>], iteration_bounds = array<i64: 2, 3>, scalar_prefetch = 0 : i64, scratch_operands = 1 : i64, tpu.core_type = #tpu.core_type<tc>, window_params = [{transform_indices = @transform_0, window_bounds = array<i64: 2, 16, 128>}, {transform_indices = @transform_1, window_bounds = array<i64: 2, 1, 16>}, {pipeline_mode = #tpu.pipeline_mode<synchronous>, transform_indices = @transform_2, window_bounds = array<i64: 1, 128>}, {pipeline_mode = #tpu.pipeline_mode<synchronous>, transform_indices = @transform_3, window_bounds = array<i64: 1, 128>}, {transform_indices = @transform_4, window_bounds = array<i64: 1, 128, 384>}, {transform_indices = @transform_5, window_bounds = array<i64: 1, 1, 384>}, {transform_indices = @transform_6, window_bounds = array<i64: 1, 4, 32, 128>}, {transform_indices = @transform_7, window_bounds = array<i64: 1, 1, 128>}, {transform_indices = @transform_8, window_bounds = array<i64: 1, 1, 128>}, {transform_indices = @transform_9, window_bounds = array<i64: 1, 1, 128>}, {transform_indices = @transform_10, window_bounds = array<i64: 1, 128, 256>}, {transform_indices = @transform_11, window_bounds = array<i64: 1, 1, 256>}, {transform_indices = @transform_12, window_bounds = array<i64: 1, 256, 128>}, {transform_indices = @transform_13, window_bounds = array<i64: 1, 1, 128>}, {transform_indices = @transform_14, window_bounds = array<i64: 1, 1, 128>}, {transform_indices = @transform_15, window_bounds = array<i64: 1, 1, 128>}, {pipeline_mode = #tpu.pipeline_mode<synchronous>, transform_indices = @transform_16, window_bounds = array<i64: 128, 128>}, {pipeline_mode = #tpu.pipeline_mode<synchronous>, transform_indices = @transform_17, window_bounds = array<i64: 1, 128>}, {transform_indices = @transform_18, window_bounds = array<i64: 2, 1, 128>}]} {
    %c0_i32 = arith.constant 0 : i32
    %0 = arith.cmpi eq, %arg1, %c0_i32 : i32
    %1 = arith.extui %0 : i1 to i32
    %c0_i32_0 = arith.constant 0 : i32
    %2 = arith.cmpi ne, %1, %c0_i32_0 : i32
    scf.if %2 {
      %c0_67 = arith.constant 0 : index
      %c0_68 = arith.constant 0 : index
      %c0_69 = arith.constant 0 : index
      %156 = vector.load %arg2[%c0_67, %c0_68, %c0_69] : memref<2x16x128xbf16, #tpu.memory_space<vmem>>, vector<2x16x128xbf16>
      %157 = arith.extf %156 : vector<2x16x128xbf16> to vector<2x16x128xf32>
      %158 = vector.shape_cast %157 : vector<2x16x128xf32> to vector<32x128xf32>
      %c0_70 = arith.constant 0 : index
      %c0_71 = arith.constant 0 : index
      %159 = vector.load %arg4[%c0_70, %c0_71] : memref<1x128xf32, #tpu.memory_space<vmem>>, vector<1x128xf32>
      %c0_72 = arith.constant 0 : index
      %c0_73 = arith.constant 0 : index
      %160 = vector.load %arg5[%c0_72, %c0_73] : memref<1x128xf32, #tpu.memory_space<vmem>>, vector<1x128xf32>
      %cst_74 = arith.constant dense<0.000000e+00> : vector<32xf32>
      %161 = vector.multi_reduction <add>, %158, %cst_74 [1] : vector<32x128xf32> to vector<32xf32>
      %162 = vector.shape_cast %161 : vector<32xf32> to vector<32x1xf32>
      %cst_75 = arith.constant 1.280000e+02 : f32
      %163 = vector.broadcast %cst_75 : f32 to vector<32x1xf32>
      %164 = arith.divf %162, %163 : vector<32x1xf32>
      %165 = vector.broadcast %164 : vector<32x1xf32> to vector<32x128xf32>
      %166 = arith.subf %158, %165 : vector<32x128xf32>
      %167 = arith.mulf %166, %166 : vector<32x128xf32>
      %cst_76 = arith.constant dense<0.000000e+00> : vector<32xf32>
      %168 = vector.multi_reduction <add>, %167, %cst_76 [1] : vector<32x128xf32> to vector<32xf32>
      %169 = vector.shape_cast %168 : vector<32xf32> to vector<32x1xf32>
      %cst_77 = arith.constant 1.280000e+02 : f32
      %170 = vector.broadcast %cst_77 : f32 to vector<32x1xf32>
      %171 = arith.divf %169, %170 : vector<32x1xf32>
      %172 = vector.broadcast %164 : vector<32x1xf32> to vector<32x128xf32>
      %173 = arith.subf %158, %172 : vector<32x128xf32>
      %cst_78 = arith.constant 9.99999996E-13 : f32
      %174 = vector.broadcast %cst_78 : f32 to vector<32x1xf32>
      %175 = arith.addf %171, %174 : vector<32x1xf32>
      %176 = math.rsqrt %175 : vector<32x1xf32>
      %177 = vector.broadcast %176 : vector<32x1xf32> to vector<32x128xf32>
      %178 = arith.mulf %173, %177 : vector<32x128xf32>
      %179 = vector.broadcast %159 : vector<1x128xf32> to vector<32x128xf32>
      %180 = arith.mulf %179, %178 : vector<32x128xf32>
      %181 = vector.broadcast %160 : vector<1x128xf32> to vector<32x128xf32>
      %182 = arith.addf %180, %181 : vector<32x128xf32>
      %c0_79 = arith.constant 0 : index
      %c0_80 = arith.constant 0 : index
      %183 = vector.load %arg21[%c0_79, %c0_80] : memref<32x128xf32, #tpu.memory_space<vmem>>, vector<32x128xf32>
      tpu.vector_store %arg21[%c0_79, %c0_80], %182 {strides = array<i32>} : memref<32x128xf32, #tpu.memory_space<vmem>>, vector<32x128xf32>,
    } else {
    }
    %c0 = arith.constant 0 : index
    %c0_1 = arith.constant 0 : index
    %3 = vector.load %arg21[%c0, %c0_1] : memref<32x128xf32, #tpu.memory_space<vmem>>, vector<32x128xf32>
    %4 = arith.truncf %3 : vector<32x128xf32> to vector<32x128xbf16>
    %c0_2 = arith.constant 0 : index
    %c0_3 = arith.constant 0 : index
    %c0_4 = arith.constant 0 : index
    %5 = vector.load %arg6[%c0_2, %c0_3, %c0_4] : memref<1x128x384xbf16, #tpu.memory_space<vmem>>, vector<1x128x384xbf16>
    %6 = vector.shape_cast %5 : vector<1x128x384xbf16> to vector<128x384xbf16>
    %cst = arith.constant dense<0.000000e+00> : vector<32x384xf32>
    %7 = tpu.matmul %4, %6, %cst {dimension_numbers = #tpu.dot_dimension_numbers<[1], [0], [0], [1], [0, 0, 1, 1], [], []>} : vector<32x128xbf16>, vector<128x384xbf16>, vector<32x384xf32> -> vector<32x384xf32>
    %c0_5 = arith.constant 0 : index
    %c0_6 = arith.constant 0 : index
    %c0_7 = arith.constant 0 : index
    %8 = vector.load %arg7[%c0_5, %c0_6, %c0_7] : memref<1x1x384xf32, #tpu.memory_space<vmem>>, vector<1x1x384xf32>
    %9 = vector.shape_cast %8 : vector<1x1x384xf32> to vector<1x384xf32>
    %10 = vector.broadcast %9 : vector<1x384xf32> to vector<32x384xf32>
    %11 = arith.addf %7, %10 : vector<32x384xf32>
    %12 = arith.truncf %11 : vector<32x384xf32> to vector<32x384xbf16>
    %13 = vector.extract_strided_slice %12 {offsets = [0, 0], sizes = [32, 32], strides = [1, 1]} : vector<32x384xbf16> to vector<32x32xbf16>
    %14 = vector.extract_strided_slice %12 {offsets = [0, 32], sizes = [32, 32], strides = [1, 1]} : vector<32x384xbf16> to vector<32x32xbf16>
    %15 = vector.extract_strided_slice %12 {offsets = [0, 64], sizes = [32, 32], strides = [1, 1]} : vector<32x384xbf16> to vector<32x32xbf16>
    %16 = vector.extract_strided_slice %12 {offsets = [0, 96], sizes = [32, 32], strides = [1, 1]} : vector<32x384xbf16> to vector<32x32xbf16>
    %17 = vector.shape_cast %13 : vector<32x32xbf16> to vector<1x32x32xbf16>
    %18 = vector.shape_cast %14 : vector<32x32xbf16> to vector<1x32x32xbf16>
    %19 = vector.shape_cast %15 : vector<32x32xbf16> to vector<1x32x32xbf16>
    %20 = vector.shape_cast %16 : vector<32x32xbf16> to vector<1x32x32xbf16>
    %21 = tpu.concatenate %17, %18, %19, %20 in 0 : vector<1x32x32xbf16>, vector<1x32x32xbf16>, vector<1x32x32xbf16>, vector<1x32x32xbf16> -> vector<4x32x32xbf16>
    %cst_8 = arith.constant 1.767580e-01 : bf16
    %22 = vector.broadcast %cst_8 : bf16 to vector<4x32x32xbf16>
    %23 = arith.mulf %21, %22 : vector<4x32x32xbf16>
    %24 = vector.shape_cast %23 : vector<4x32x32xbf16> to vector<8x16x32xbf16>
    %25 = vector.extract_strided_slice %12 {offsets = [0, 128], sizes = [32, 32], strides = [1, 1]} : vector<32x384xbf16> to vector<32x32xbf16>
    %26 = vector.extract_strided_slice %12 {offsets = [0, 160], sizes = [32, 32], strides = [1, 1]} : vector<32x384xbf16> to vector<32x32xbf16>
    %27 = vector.extract_strided_slice %12 {offsets = [0, 192], sizes = [32, 32], strides = [1, 1]} : vector<32x384xbf16> to vector<32x32xbf16>
    %28 = vector.extract_strided_slice %12 {offsets = [0, 224], sizes = [32, 32], strides = [1, 1]} : vector<32x384xbf16> to vector<32x32xbf16>
    %29 = vector.shape_cast %25 : vector<32x32xbf16> to vector<1x32x32xbf16>
    %30 = vector.shape_cast %26 : vector<32x32xbf16> to vector<1x32x32xbf16>
    %31 = vector.shape_cast %27 : vector<32x32xbf16> to vector<1x32x32xbf16>
    %32 = vector.shape_cast %28 : vector<32x32xbf16> to vector<1x32x32xbf16>
    %33 = tpu.concatenate %29, %30, %31, %32 in 0 : vector<1x32x32xbf16>, vector<1x32x32xbf16>, vector<1x32x32xbf16>, vector<1x32x32xbf16> -> vector<4x32x32xbf16>
    %34 = vector.shape_cast %33 : vector<4x32x32xbf16> to vector<8x16x32xbf16>
    %35 = vector.extract_strided_slice %12 {offsets = [0, 256], sizes = [32, 32], strides = [1, 1]} : vector<32x384xbf16> to vector<32x32xbf16>
    %36 = vector.extract_strided_slice %12 {offsets = [0, 288], sizes = [32, 32], strides = [1, 1]} : vector<32x384xbf16> to vector<32x32xbf16>
    %37 = vector.extract_strided_slice %12 {offsets = [0, 320], sizes = [32, 32], strides = [1, 1]} : vector<32x384xbf16> to vector<32x32xbf16>
    %38 = vector.extract_strided_slice %12 {offsets = [0, 352], sizes = [32, 32], strides = [1, 1]} : vector<32x384xbf16> to vector<32x32xbf16>
    %39 = vector.shape_cast %35 : vector<32x32xbf16> to vector<1x32x32xbf16>
    %40 = vector.shape_cast %36 : vector<32x32xbf16> to vector<1x32x32xbf16>
    %41 = vector.shape_cast %37 : vector<32x32xbf16> to vector<1x32x32xbf16>
    %42 = vector.shape_cast %38 : vector<32x32xbf16> to vector<1x32x32xbf16>
    %43 = tpu.concatenate %39, %40, %41, %42 in 0 : vector<1x32x32xbf16>, vector<1x32x32xbf16>, vector<1x32x32xbf16>, vector<1x32x32xbf16> -> vector<4x32x32xbf16>
    %44 = vector.shape_cast %43 : vector<4x32x32xbf16> to vector<8x16x32xbf16>
    "tpu.trace_start"() <{level = 10 : i32, message = "nqd,nkd->nqk"}> : () -> ()
    %cst_9 = arith.constant dense<0.000000e+00> : vector<8x16x16xf32>
    %45 = tpu.matmul %24, %34, %cst_9 {dimension_numbers = #tpu.dot_dimension_numbers<[2], [2], [1], [1], [0, 0, 0, 1, 1, 1], [0], [0]>} : vector<8x16x32xbf16>, vector<8x16x32xbf16>, vector<8x16x16xf32> -> vector<8x16x16xf32>
    "tpu.trace_stop"() : () -> ()
    %46 = vector.shape_cast %45 : vector<8x16x16xf32> to vector<4x2x16x16xf32>
    %c0_10 = arith.constant 0 : index
    %c0_11 = arith.constant 0 : index
    %c0_12 = arith.constant 0 : index
    %47 = vector.load %arg3[%c0_10, %c0_11, %c0_12] : memref<2x1x16xf32, #tpu.memory_space<vmem>>, vector<2x1x16xf32>
    %48 = vector.shape_cast %47 : vector<2x1x16xf32> to vector<1x2x1x16xf32>
    %49 = vector.broadcast %48 : vector<1x2x1x16xf32> to vector<4x2x16x16xf32>
    %50 = arith.addf %46, %49 : vector<4x2x16x16xf32>
    %51 = vector.shape_cast %50 : vector<4x2x16x16xf32> to vector<8x16x16xf32>
    %cst_13 = arith.constant dense<0xFF800000> : vector<8x16xf32>
    %52 = vector.multi_reduction <maximumf>, %51, %cst_13 [2] : vector<8x16x16xf32> to vector<8x16xf32>
    %53 = vector.shape_cast %52 : vector<8x16xf32> to vector<8x16x1xf32>
    %54 = vector.broadcast %53 : vector<8x16x1xf32> to vector<8x16x16xf32>
    %55 = arith.subf %51, %54 : vector<8x16x16xf32>
    %56 = math.exp %55 : vector<8x16x16xf32>
    %cst_14 = arith.constant dense<0.000000e+00> : vector<8x16xf32>
    %57 = vector.multi_reduction <add>, %56, %cst_14 [2] : vector<8x16x16xf32> to vector<8x16xf32>
    %58 = vector.shape_cast %57 : vector<8x16xf32> to vector<8x16x1xf32>
    %59 = tpu.reciprocal %58 {approx = true} : vector<8x16x1xf32> -> vector<8x16x1xf32>
    %60 = vector.broadcast %59 : vector<8x16x1xf32> to vector<8x16x16xf32>
    %61 = arith.mulf %56, %60 : vector<8x16x16xf32>
    %62 = arith.truncf %61 : vector<8x16x16xf32> to vector<8x16x16xbf16>
    "tpu.trace_start"() <{level = 10 : i32, message = "nqk,nkd->nqd"}> : () -> ()
    %cst_15 = arith.constant dense<0.000000e+00> : vector<8x16x32xf32>
    %63 = tpu.matmul %62, %44, %cst_15 {dimension_numbers = #tpu.dot_dimension_numbers<[2], [1], [1], [2], [0, 0, 0, 1, 1, 2], [0], [0]>} : vector<8x16x16xbf16>, vector<8x16x32xbf16>, vector<8x16x32xf32> -> vector<8x16x32xf32>
    "tpu.trace_stop"() : () -> ()
    %64 = vector.shape_cast %63 : vector<8x16x32xf32> to vector<4x32x32xf32>
    %65 = arith.truncf %64 : vector<4x32x32xf32> to vector<4x32x32xbf16>
    %c0_16 = arith.constant 0 : index
    %c0_17 = arith.constant 0 : index
    %c0_18 = arith.constant 0 : index
    %c0_19 = arith.constant 0 : index
    %66 = vector.load %arg8[%c0_16, %c0_17, %c0_18, %c0_19] : memref<1x4x32x128xbf16, #tpu.memory_space<vmem>>, vector<1x4x32x128xbf16>
    %67 = vector.shape_cast %66 : vector<1x4x32x128xbf16> to vector<4x32x128xbf16>
    "tpu.trace_start"() <{level = 10 : i32, message = "ntd,ndh->nth"}> : () -> ()
    %cst_20 = arith.constant dense<0.000000e+00> : vector<4x32x128xf32>
    %68 = tpu.matmul %65, %67, %cst_20 {dimension_numbers = #tpu.dot_dimension_numbers<[2], [1], [1], [2], [0, 0, 0, 1, 1, 2], [0], [0]>} : vector<4x32x32xbf16>, vector<4x32x128xbf16>, vector<4x32x128xf32> -> vector<4x32x128xf32>
    "tpu.trace_stop"() : () -> ()
    %cst_21 = arith.constant dense<0.000000e+00> : vector<32x128xf32>
    %69 = vector.multi_reduction <add>, %68, %cst_21 [0] : vector<4x32x128xf32> to vector<32x128xf32>
    %c0_22 = arith.constant 0 : index
    %c0_23 = arith.constant 0 : index
    %c0_24 = arith.constant 0 : index
    %70 = vector.load %arg9[%c0_22, %c0_23, %c0_24] : memref<1x1x128xf32, #tpu.memory_space<vmem>>, vector<1x1x128xf32>
    %71 = vector.shape_cast %70 : vector<1x1x128xf32> to vector<1x128xf32>
    %72 = vector.broadcast %71 : vector<1x128xf32> to vector<32x128xf32>
    %73 = arith.addf %69, %72 : vector<32x128xf32>
    %74 = arith.addf %3, %73 : vector<32x128xf32>
    %c0_25 = arith.constant 0 : index
    %c0_26 = arith.constant 0 : index
    %c0_27 = arith.constant 0 : index
    %75 = vector.load %arg10[%c0_25, %c0_26, %c0_27] : memref<1x1x128xf32, #tpu.memory_space<vmem>>, vector<1x1x128xf32>
    %76 = vector.shape_cast %75 : vector<1x1x128xf32> to vector<1x128xf32>
    %c0_28 = arith.constant 0 : index
    %c0_29 = arith.constant 0 : index
    %c0_30 = arith.constant 0 : index
    %77 = vector.load %arg11[%c0_28, %c0_29, %c0_30] : memref<1x1x128xf32, #tpu.memory_space<vmem>>, vector<1x1x128xf32>
    %78 = vector.shape_cast %77 : vector<1x1x128xf32> to vector<1x128xf32>
    %cst_31 = arith.constant dense<0.000000e+00> : vector<32xf32>
    %79 = vector.multi_reduction <add>, %74, %cst_31 [1] : vector<32x128xf32> to vector<32xf32>
    %80 = vector.shape_cast %79 : vector<32xf32> to vector<32x1xf32>
    %cst_32 = arith.constant 1.280000e+02 : f32
    %81 = vector.broadcast %cst_32 : f32 to vector<32x1xf32>
    %82 = arith.divf %80, %81 : vector<32x1xf32>
    %83 = vector.broadcast %82 : vector<32x1xf32> to vector<32x128xf32>
    %84 = arith.subf %74, %83 : vector<32x128xf32>
    %85 = arith.mulf %84, %84 : vector<32x128xf32>
    %cst_33 = arith.constant dense<0.000000e+00> : vector<32xf32>
    %86 = vector.multi_reduction <add>, %85, %cst_33 [1] : vector<32x128xf32> to vector<32xf32>
    %87 = vector.shape_cast %86 : vector<32xf32> to vector<32x1xf32>
    %cst_34 = arith.constant 1.280000e+02 : f32
    %88 = vector.broadcast %cst_34 : f32 to vector<32x1xf32>
    %89 = arith.divf %87, %88 : vector<32x1xf32>
    %90 = vector.broadcast %82 : vector<32x1xf32> to vector<32x128xf32>
    %91 = arith.subf %74, %90 : vector<32x128xf32>
    %cst_35 = arith.constant 9.99999996E-13 : f32
    %92 = vector.broadcast %cst_35 : f32 to vector<32x1xf32>
    %93 = arith.addf %89, %92 : vector<32x1xf32>
    %94 = math.rsqrt %93 : vector<32x1xf32>
    %95 = vector.broadcast %94 : vector<32x1xf32> to vector<32x128xf32>
    %96 = arith.mulf %91, %95 : vector<32x128xf32>
    %97 = vector.broadcast %76 : vector<1x128xf32> to vector<32x128xf32>
    %98 = arith.mulf %97, %96 : vector<32x128xf32>
    %99 = vector.broadcast %78 : vector<1x128xf32> to vector<32x128xf32>
    %100 = arith.addf %98, %99 : vector<32x128xf32>
    %101 = arith.truncf %100 : vector<32x128xf32> to vector<32x128xbf16>
    %c0_36 = arith.constant 0 : index
    %c0_37 = arith.constant 0 : index
    %c0_38 = arith.constant 0 : index
    %102 = vector.load %arg12[%c0_36, %c0_37, %c0_38] : memref<1x128x256xbf16, #tpu.memory_space<vmem>>, vector<1x128x256xbf16>
    %103 = vector.shape_cast %102 : vector<1x128x256xbf16> to vector<128x256xbf16>
    %cst_39 = arith.constant dense<0.000000e+00> : vector<32x256xf32>
    %104 = tpu.matmul %101, %103, %cst_39 {dimension_numbers = #tpu.dot_dimension_numbers<[1], [0], [0], [1], [0, 0, 1, 1], [], []>} : vector<32x128xbf16>, vector<128x256xbf16>, vector<32x256xf32> -> vector<32x256xf32>
    %c0_40 = arith.constant 0 : index
    %c0_41 = arith.constant 0 : index
    %c0_42 = arith.constant 0 : index
    %105 = vector.load %arg13[%c0_40, %c0_41, %c0_42] : memref<1x1x256xf32, #tpu.memory_space<vmem>>, vector<1x1x256xf32>
    %106 = vector.shape_cast %105 : vector<1x1x256xf32> to vector<1x256xf32>
    %107 = vector.broadcast %106 : vector<1x256xf32> to vector<32x256xf32>
    %108 = arith.addf %104, %107 : vector<32x256xf32>
    %cst_43 = arith.constant 5.000000e-01 : f32
    %109 = vector.broadcast %cst_43 : f32 to vector<32x256xf32>
    %110 = arith.mulf %108, %109 : vector<32x256xf32>
    %cst_44 = arith.constant 1.41421354 : f32
    %111 = vector.broadcast %cst_44 : f32 to vector<32x256xf32>
    %112 = arith.divf %108, %111 : vector<32x256xf32>
    %113 = math.erf %112 : vector<32x256xf32>
    %cst_45 = arith.constant 1.000000e+00 : f32
    %114 = vector.broadcast %cst_45 : f32 to vector<32x256xf32>
    %115 = arith.addf %114, %113 : vector<32x256xf32>
    %116 = arith.mulf %110, %115 : vector<32x256xf32>
    %117 = arith.truncf %116 : vector<32x256xf32> to vector<32x256xbf16>
    %c0_46 = arith.constant 0 : index
    %c0_47 = arith.constant 0 : index
    %c0_48 = arith.constant 0 : index
    %118 = vector.load %arg14[%c0_46, %c0_47, %c0_48] : memref<1x256x128xbf16, #tpu.memory_space<vmem>>, vector<1x256x128xbf16>
    %119 = vector.shape_cast %118 : vector<1x256x128xbf16> to vector<256x128xbf16>
    %cst_49 = arith.constant dense<0.000000e+00> : vector<32x128xf32>
    %120 = tpu.matmul %117, %119, %cst_49 {dimension_numbers = #tpu.dot_dimension_numbers<[1], [0], [0], [1], [0, 0, 1, 1], [], []>} : vector<32x256xbf16>, vector<256x128xbf16>, vector<32x128xf32> -> vector<32x128xf32>
    %c0_50 = arith.constant 0 : index
    %c0_51 = arith.constant 0 : index
    %c0_52 = arith.constant 0 : index
    %121 = vector.load %arg15[%c0_50, %c0_51, %c0_52] : memref<1x1x128xf32, #tpu.memory_space<vmem>>, vector<1x1x128xf32>
    %122 = vector.shape_cast %121 : vector<1x1x128xf32> to vector<1x128xf32>
    %123 = vector.broadcast %122 : vector<1x128xf32> to vector<32x128xf32>
    %124 = arith.addf %120, %123 : vector<32x128xf32>
    %125 = arith.addf %100, %124 : vector<32x128xf32>
    %c0_53 = arith.constant 0 : index
    %c0_54 = arith.constant 0 : index
    %c0_55 = arith.constant 0 : index
    %126 = vector.load %arg16[%c0_53, %c0_54, %c0_55] : memref<1x1x128xf32, #tpu.memory_space<vmem>>, vector<1x1x128xf32>
    %127 = vector.shape_cast %126 : vector<1x1x128xf32> to vector<1x128xf32>
    %c0_56 = arith.constant 0 : index
    %c0_57 = arith.constant 0 : index
    %c0_58 = arith.constant 0 : index
    %128 = vector.load %arg17[%c0_56, %c0_57, %c0_58] : memref<1x1x128xf32, #tpu.memory_space<vmem>>, vector<1x1x128xf32>
    %129 = vector.shape_cast %128 : vector<1x1x128xf32> to vector<1x128xf32>
    %cst_59 = arith.constant dense<0.000000e+00> : vector<32xf32>
    %130 = vector.multi_reduction <add>, %125, %cst_59 [1] : vector<32x128xf32> to vector<32xf32>
    %131 = vector.shape_cast %130 : vector<32xf32> to vector<32x1xf32>
    %cst_60 = arith.constant 1.280000e+02 : f32
    %132 = vector.broadcast %cst_60 : f32 to vector<32x1xf32>
    %133 = arith.divf %131, %132 : vector<32x1xf32>
    %134 = vector.broadcast %133 : vector<32x1xf32> to vector<32x128xf32>
    %135 = arith.subf %125, %134 : vector<32x128xf32>
    %136 = arith.mulf %135, %135 : vector<32x128xf32>
    %cst_61 = arith.constant dense<0.000000e+00> : vector<32xf32>
    %137 = vector.multi_reduction <add>, %136, %cst_61 [1] : vector<32x128xf32> to vector<32xf32>
    %138 = vector.shape_cast %137 : vector<32xf32> to vector<32x1xf32>
    %cst_62 = arith.constant 1.280000e+02 : f32
    %139 = vector.broadcast %cst_62 : f32 to vector<32x1xf32>
    %140 = arith.divf %138, %139 : vector<32x1xf32>
    %141 = vector.broadcast %133 : vector<32x1xf32> to vector<32x128xf32>
    %142 = arith.subf %125, %141 : vector<32x128xf32>
    %cst_63 = arith.constant 9.99999996E-13 : f32
    %143 = vector.broadcast %cst_63 : f32 to vector<32x1xf32>
    %144 = arith.addf %140, %143 : vector<32x1xf32>
    %145 = math.rsqrt %144 : vector<32x1xf32>
    %146 = vector.broadcast %145 : vector<32x1xf32> to vector<32x128xf32>
    %147 = arith.mulf %142, %146 : vector<32x128xf32>
    %148 = vector.broadcast %127 : vector<1x128xf32> to vector<32x128xf32>
    %149 = arith.mulf %148, %147 : vector<32x128xf32>
    %150 = vector.broadcast %129 : vector<1x128xf32> to vector<32x128xf32>
    %151 = arith.addf %149, %150 : vector<32x128xf32>
    %c0_64 = arith.constant 0 : index
    %c0_65 = arith.constant 0 : index
    %152 = vector.load %arg21[%c0_64, %c0_65] : memref<32x128xf32, #tpu.memory_space<vmem>>, vector<32x128xf32>
    tpu.vector_store %arg21[%c0_64, %c0_65], %151 {strides = array<i32>} : memref<32x128xf32, #tpu.memory_space<vmem>>, vector<32x128xf32>,
    %c2_i32 = arith.constant 2 : i32
    %153 = arith.cmpi eq, %arg1, %c2_i32 : i32
    %154 = arith.extui %153 : i1 to i32
    %c0_i32_66 = arith.constant 0 : i32
    %155 = arith.cmpi ne, %154, %c0_i32_66 : i32
    scf.if %155 {
      %156 = vector.shape_cast %151 : vector<32x128xf32> to vector<2x16x128xf32>
      %157 = vector.extract_strided_slice %156 {offsets = [0, 0, 0], sizes = [2, 1, 128], strides = [1, 1, 1]} : vector<2x16x128xf32> to vector<2x1x128xf32>
      %158 = vector.shape_cast %157 : vector<2x1x128xf32> to vector<2x128xf32>
      %c0_67 = arith.constant 0 : index
      %c0_68 = arith.constant 0 : index
      %159 = vector.load %arg18[%c0_67, %c0_68] : memref<128x128xf32, #tpu.memory_space<vmem>>, vector<128x128xf32>
      %cst_69 = arith.constant dense<0.000000e+00> : vector<2x128xf32>
      %160 = tpu.matmul %158, %159, %cst_69 {dimension_numbers = #tpu.dot_dimension_numbers<[1], [0], [0], [1], [0, 0, 1, 1], [], []>} : vector<2x128xf32>, vector<128x128xf32>, vector<2x128xf32> -> vector<2x128xf32>
      %c0_70 = arith.constant 0 : index
      %c0_71 = arith.constant 0 : index
      %161 = vector.load %arg19[%c0_70, %c0_71] : memref<1x128xf32, #tpu.memory_space<vmem>>, vector<1x128xf32>
      %162 = vector.broadcast %161 : vector<1x128xf32> to vector<2x128xf32>
      %163 = arith.addf %160, %162 : vector<2x128xf32>
      %164 = vector.shape_cast %163 : vector<2x128xf32> to vector<2x1x128xf32>
      %c0_72 = arith.constant 0 : index
      %c0_73 = arith.constant 0 : index
      %c0_74 = arith.constant 0 : index
      %165 = vector.load %arg20[%c0_72, %c0_73, %c0_74] : memref<2x1x128xf32, #tpu.memory_space<vmem>>, vector<2x1x128xf32>
      tpu.vector_store %arg20[%c0_72, %c0_73, %c0_74], %164 {strides = array<i32>} : memref<2x1x128xf32, #tpu.memory_space<vmem>>, vector<2x1x128xf32>,
    } else {
    }
    return
  }
  func.func @transform_0(%arg0: i32, %arg1: i32) -> (i32, i32, i32) {
    %c0_i32 = arith.constant 0 : i32
    %c0_i32_0 = arith.constant 0 : i32
    %c0_i32_1 = arith.constant 0 : i32
    return %arg0, %c0_i32, %c0_i32_0 : i32, i32, i32
  }
  func.func @transform_1(%arg0: i32, %arg1: i32) -> (i32, i32, i32) {
    %c0_i32 = arith.constant 0 : i32
    %c0_i32_0 = arith.constant 0 : i32
    %c0_i32_1 = arith.constant 0 : i32
    return %arg0, %c0_i32, %c0_i32_0 : i32, i32, i32
  }
  func.func @transform_2(%arg0: i32, %arg1: i32) -> (i32, i32) {
    %c0_i32 = arith.constant 0 : i32
    %c0_i32_0 = arith.constant 0 : i32
    %c0_i32_1 = arith.constant 0 : i32
    return %c0_i32, %c0_i32_0 : i32, i32
  }
  func.func @transform_3(%arg0: i32, %arg1: i32) -> (i32, i32) {
    %c0_i32 = arith.constant 0 : i32
    %c0_i32_0 = arith.constant 0 : i32
    %c0_i32_1 = arith.constant 0 : i32
    return %c0_i32, %c0_i32_0 : i32, i32
  }
  func.func @transform_4(%arg0: i32, %arg1: i32) -> (i32, i32, i32) {
    %c0_i32 = arith.constant 0 : i32
    %c0_i32_0 = arith.constant 0 : i32
    %c0_i32_1 = arith.constant 0 : i32
    return %arg1, %c0_i32, %c0_i32_0 : i32, i32, i32
  }
  func.func @transform_5(%arg0: i32, %arg1: i32) -> (i32, i32, i32) {
    %c0_i32 = arith.constant 0 : i32
    %c0_i32_0 = arith.constant 0 : i32
    %c0_i32_1 = arith.constant 0 : i32
    return %arg1, %c0_i32, %c0_i32_0 : i32, i32, i32
  }
  func.func @transform_6(%arg0: i32, %arg1: i32) -> (i32, i32, i32, i32) {
    %c0_i32 = arith.constant 0 : i32
    %c0_i32_0 = arith.constant 0 : i32
    %c0_i32_1 = arith.constant 0 : i32
    %c0_i32_2 = arith.constant 0 : i32
    return %arg1, %c0_i32, %c0_i32_0, %c0_i32_1 : i32, i32, i32, i32
  }
  func.func @transform_7(%arg0: i32, %arg1: i32) -> (i32, i32, i32) {
    %c0_i32 = arith.constant 0 : i32
    %c0_i32_0 = arith.constant 0 : i32
    %c0_i32_1 = arith.constant 0 : i32
    return %arg1, %c0_i32, %c0_i32_0 : i32, i32, i32
  }
  func.func @transform_8(%arg0: i32, %arg1: i32) -> (i32, i32, i32) {
    %c0_i32 = arith.constant 0 : i32
    %c0_i32_0 = arith.constant 0 : i32
    %c0_i32_1 = arith.constant 0 : i32
    return %arg1, %c0_i32, %c0_i32_0 : i32, i32, i32
  }
  func.func @transform_9(%arg0: i32, %arg1: i32) -> (i32, i32, i32) {
    %c0_i32 = arith.constant 0 : i32
    %c0_i32_0 = arith.constant 0 : i32
    %c0_i32_1 = arith.constant 0 : i32
    return %arg1, %c0_i32, %c0_i32_0 : i32, i32, i32
  }
  func.func @transform_10(%arg0: i32, %arg1: i32) -> (i32, i32, i32) {
    %c0_i32 = arith.constant 0 : i32
    %c0_i32_0 = arith.constant 0 : i32
    %c0_i32_1 = arith.constant 0 : i32
    return %arg1, %c0_i32, %c0_i32_0 : i32, i32, i32
  }
  func.func @transform_11(%arg0: i32, %arg1: i32) -> (i32, i32, i32) {
    %c0_i32 = arith.constant 0 : i32
    %c0_i32_0 = arith.constant 0 : i32
    %c0_i32_1 = arith.constant 0 : i32
    return %arg1, %c0_i32, %c0_i32_0 : i32, i32, i32
  }
  func.func @transform_12(%arg0: i32, %arg1: i32) -> (i32, i32, i32) {
    %c0_i32 = arith.constant 0 : i32
    %c0_i32_0 = arith.constant 0 : i32
    %c0_i32_1 = arith.constant 0 : i32
    return %arg1, %c0_i32, %c0_i32_0 : i32, i32, i32
  }
  func.func @transform_13(%arg0: i32, %arg1: i32) -> (i32, i32, i32) {
    %c0_i32 = arith.constant 0 : i32
    %c0_i32_0 = arith.constant 0 : i32
    %c0_i32_1 = arith.constant 0 : i32
    return %arg1, %c0_i32, %c0_i32_0 : i32, i32, i32
  }
  func.func @transform_14(%arg0: i32, %arg1: i32) -> (i32, i32, i32) {
    %c0_i32 = arith.constant 0 : i32
    %c0_i32_0 = arith.constant 0 : i32
    %c0_i32_1 = arith.constant 0 : i32
    return %arg1, %c0_i32, %c0_i32_0 : i32, i32, i32
  }
  func.func @transform_15(%arg0: i32, %arg1: i32) -> (i32, i32, i32) {
    %c0_i32 = arith.constant 0 : i32
    %c0_i32_0 = arith.constant 0 : i32
    %c0_i32_1 = arith.constant 0 : i32
    return %arg1, %c0_i32, %c0_i32_0 : i32, i32, i32
  }
  func.func @transform_16(%arg0: i32, %arg1: i32) -> (i32, i32) {
    %c0_i32 = arith.constant 0 : i32
    %c0_i32_0 = arith.constant 0 : i32
    %c0_i32_1 = arith.constant 0 : i32
    return %c0_i32, %c0_i32_0 : i32, i32
  }
  func.func @transform_17(%arg0: i32, %arg1: i32) -> (i32, i32) {
    %c0_i32 = arith.constant 0 : i32
    %c0_i32_0 = arith.constant 0 : i32
    %c0_i32_1 = arith.constant 0 : i32
    return %c0_i32, %c0_i32_0 : i32, i32
  }
  func.func @transform_18(%arg0: i32, %arg1: i32) -> (i32, i32, i32) {
    %c0_i32 = arith.constant 0 : i32
    %c0_i32_0 = arith.constant 0 : i32
    %c0_i32_1 = arith.constant 0 : i32
    return %arg0, %c0_i32, %c0_i32_0 : i32, i32, i32
  }
}

</mosaic_0001>

<llo_original>
// kernel: tpu_custom_call.1
$region0: #{tpu_custom_call.1}
  #allocation0 [shape = 'u32[]', space=smem, size = 0x4, offset = 0x4, fixed_abs, tag = 'smem constant byte address 0x4 - core index']
  #allocation1 [shape = 'u32[144,128]{1,0:T(1,128)}', space=vmem, size = 0x12000, scoped, tag = 'internal scratch']
  #allocation2 [shape = 'f32[32,128]{1,0:T(8,128)}', space=vmem, size = 0x4000, scoped, tag = 'scratch operand']
  %s0 = inlined_call_operand.hbm [shape: bf16[4,16,128], index: 0, kind: input, shape index: {}]
  %s1 = inlined_call_operand.hbm [shape: f32[4,1,16], index: 1, kind: input, shape index: {}]
  %s2 = inlined_call_operand.hbm [shape: f32[1,128], index: 2, kind: input, shape index: {}]
  %s3 = inlined_call_operand.hbm [shape: f32[1,128], index: 3, kind: input, shape index: {}]
  %s4 = inlined_call_operand.hbm [shape: bf16[3,128,384], index: 4, kind: input, shape index: {}]
  %s5 = inlined_call_operand.vmem [shape: f32[3,1,384], index: 5, kind: input, shape index: {}]
  %s6 = inlined_call_operand.hbm [shape: bf16[3,4,32,128], index: 6, kind: input, shape index: {}]
  %s7 = inlined_call_operand.hbm [shape: f32[3,1,128], index: 7, kind: input, shape index: {}]
  %s8 = inlined_call_operand.hbm [shape: f32[3,1,128], index: 8, kind: input, shape index: {}]
  %s9 = inlined_call_operand.hbm [shape: f32[3,1,128], index: 9, kind: input, shape index: {}]
  %s10 = inlined_call_operand.hbm [shape: bf16[3,128,256], index: 10, kind: input, shape index: {}]
  %s11 = inlined_call_operand.vmem [shape: f32[3,1,256], index: 11, kind: input, shape index: {}]
  %s12 = inlined_call_operand.hbm [shape: bf16[3,256,128], index: 12, kind: input, shape index: {}]
  %s13 = inlined_call_operand.vmem [shape: f32[3,1,128], index: 13, kind: input, shape index: {}]
  %s14 = inlined_call_operand.vmem [shape: f32[3,1,128], index: 14, kind: input, shape index: {}]
  %s15 = inlined_call_operand.vmem [shape: f32[3,1,128], index: 15, kind: input, shape index: {}]
  %s16 = inlined_call_operand.hbm [shape: f32[128,128], index: 16, kind: input, shape index: {}]
  %s17 = inlined_call_operand.vmem [shape: f32[1,128], index: 17, kind: input, shape index: {}]
  %s18 = inlined_call_operand.hbm [shape: f32[4,1,128], index: 18, kind: output, shape index: {}]
  %s19 = sld [smem:[#allocation0]]
  $region161: #{tpu_custom_call.1} parent=0
    _
  %s21 = ssub.s32 1, %s19
  %s22 = scalar_select 0, %s21, %s19
  $region1: #{tpu_custom_call.1} parent=0
    #allocation3 [shape = 'u8[16384]{0}', space=vmem, size = 0x4000, scoped, tag = 'input window, operand 0']
    #allocation4 [shape = 's32[2]{0}', space=sflag, size = 0x8, scoped, tag = 'scoped memory for tpu_custom_call.1']
    #allocation5 [shape = 's32[2]{0}', space=sflag, size = 0x8, scoped, tag = 'scoped memory for tpu_custom_call.1']
    #allocation6 [shape = 'u8[2048]{0}', space=vmem, size = 0x800, scoped, tag = 'input window, operand 1']
    #allocation7 [shape = 's32[2]{0}', space=sflag, size = 0x8, scoped, tag = 'scoped memory for tpu_custom_call.1']
    #allocation8 [shape = 'u8[512]{0}', space=vmem, size = 0x400, scoped, tag = 'input window, operand 2, single buffered']
    #allocation9 [shape = 'u8[512]{0}', space=vmem, size = 0x400, scoped, tag = 'input window, operand 3, single buffered']
    #allocation10 [shape = 's32[1]{0}', space=sflag, size = 0x4, scoped, tag = 'scoped memory for tpu_custom_call.1']
    #allocation11 [shape = 'u8[196608]{0}', space=vmem, size = 0x30000, scoped, tag = 'input window, operand 4']
    #allocation12 [shape = 'u8[65536]{0}', space=vmem, size = 0x10000, scoped, tag = 'input window, operand 6']
    #allocation13 [shape = 'u8[1024]{0}', space=vmem, size = 0x400, scoped, tag = 'input window, operand 7']
    #allocation14 [shape = 'u8[1024]{0}', space=vmem, size = 0x400, scoped, tag = 'input window, operand 8']
    #allocation15 [shape = 'u8[1024]{0}', space=vmem, size = 0x400, scoped, tag = 'input window, operand 9']
    #allocation16 [shape = 'u8[131072]{0}', space=vmem, size = 0x20000, scoped, tag = 'input window, operand 10']
    #allocation17 [shape = 'u8[131072]{0}', space=vmem, size = 0x20000, scoped, tag = 'input window, operand 12']
    #allocation18 [shape = 'u8[65536]{0}', space=vmem, size = 0x10000, scoped, tag = 'input window, operand 16, single buffered']
    #allocation19 [shape = 'u8[2048]{0}', space=vmem, size = 0x800, scoped, tag = 'output window, operand 0']
    %23 = vsyncpa [#allocation4], 0
    %s24 = scalar_lea.sflag [#allocation4], 1
    %25 = vsyncpa %s24, 0
    %26 = vsyncpa [#allocation7], 0
    %s27 = scalar_lea.sflag [#allocation7], 1
    %28 = vsyncpa %s27, 0
    %29 = vsyncpa [#allocation10], 0
    %30 = vsyncpa [#allocation5], 0
    %s31 = scalar_lea.sflag [#allocation5], 1
    %32 = vsyncpa %s31, 0
    loop: start=0, step=1, limit=8
    $region2: #{tpu_custom_call.1} parent=1 // loop_pre_header
      _
    $region3: #{tpu_custom_call.1} parent=1 // loop_header
      %s34 = sphi 0, %s38
      %p35 = scmp.ge.s32.totalorder %s34, 8
      %s41 = sphi 0, %s53
      %s42 = sphi 0, %s49
      %s43 = sphi 0, %s41
      %s44 = sphi 0, %s42
      %s45 = sphi 0, %s43
      %s46 = sphi 0, %s44
      %s56 = sphi 0, %s58
      %s59 = sphi 0, %s56
      %s60 = sphi 0, %s59
      %s76 = sphi 0, %s60
      %s82 = sphi 0, %s84
      %s85 = sphi 0, %s82
      %s86 = sphi 0, %s85
      %s102 = sphi 0, %s86
      %s106 = sphi 0, %s106
      %s108 = sphi 0, %s106
      %s109 = sphi 0, %s108
      %s123 = sphi 0, %s109
      %s127 = sphi 0, %s127
      %s129 = sphi 0, %s127
      %s130 = sphi 0, %s129
      %s144 = sphi 0, %s130
      %s150 = sphi 0, %s152
      %s153 = sphi 0, %s150
      %s154 = sphi 0, %s153
      %s170 = sphi 0, %s154
      %s176 = sphi 0, %s178
      %s179 = sphi 0, %s176
      %s180 = sphi 0, %s179
      %s196 = sphi 0, %s180
      %s202 = sphi 0, %s204
      %s205 = sphi 0, %s202
      %s206 = sphi 0, %s205
      %s222 = sphi 0, %s206
      %s228 = sphi 0, %s230
      %s231 = sphi 0, %s228
      %s232 = sphi 0, %s231
      %s248 = sphi 0, %s232
      %s254 = sphi 0, %s256
      %s257 = sphi 0, %s254
      %s258 = sphi 0, %s257
      %s274 = sphi 0, %s258
      %s280 = sphi 0, %s282
      %s283 = sphi 0, %s280
      %s284 = sphi 0, %s283
      %s300 = sphi 0, %s284
      %s306 = sphi 0, %s308
      %s309 = sphi 0, %s306
      %s310 = sphi 0, %s309
      %s326 = sphi 0, %s310
      %s332 = sphi 0, %s334
      %s335 = sphi 0, %s332
      %s336 = sphi 0, %s335
      %s352 = sphi 0, %s336
      %s358 = sphi 0, %s360
      %s361 = sphi 0, %s358
      %s362 = sphi 0, %s361
      %s378 = sphi 0, %s362
      %s384 = sphi 0, %s386
      %s387 = sphi 0, %s384
      %s388 = sphi 0, %s387
      %s404 = sphi 0, %s388
      %s410 = sphi 0, %s412
      %s413 = sphi 0, %s410
      %s414 = sphi 0, %s413
      %s430 = sphi 0, %s414
      %s436 = sphi 0, %s438
      %s439 = sphi 0, %s436
      %s440 = sphi 0, %s439
      %s456 = sphi 0, %s440
      %s460 = sphi 0, %s460
      %s462 = sphi 0, %s460
      %s463 = sphi 0, %s462
      %s477 = sphi 0, %s463
      %s481 = sphi 0, %s481
      %s483 = sphi 0, %s481
      %s484 = sphi 0, %s483
      %s498 = sphi 0, %s484
      %s504 = sphi 0, %s506
      %s507 = sphi 0, %s504
      %s508 = sphi 0, %s507
      %s524 = sphi 0, %s508
    $region4: #{tpu_custom_call.1} parent=1 // loop_header_branch
      %37 = sbr.rel (%p35) target = $region8
    $region5: #{tpu_custom_call.1} parent=1 // loop_body
      %s39 = ssub.s32 %s34, 1
      %s40 = ssub.s32 %s34, 2
      %s47 = sadd.s32 1, %s42
      %p48 = scmp.ge.s32.totalorder %s47, 3
      %s49 = scalar_select %p48, 0, %s47
      %s50 = sadd.s32 1, %s41
      %s51 = scalar_select %p48, %s50, %s41
      %p52 = scmp.ge.s32.totalorder %s51, 2
      %s53 = scalar_select %p52, 0, %s51
      %s54 = ssub.s32 %s41, %s53
      %p55 = scmp.eq.s32.totalorder %s54, 0
      %s57 = sadd.s32 %s56, 1
      %s58 = scalar_select %p55, %s56, %s57
      %p61 = pneg %p55
      %p62 = scmp.eq.s32.totalorder %s34, 5
      %p63 = por %p61, %p62
      %p64 = scmp.ne.s32.totalorder %s56, %s59
      %p65 = scmp.eq.s32.totalorder %s34, 0
      %p66 = por %p64, %p65
      %p67 = scmp.ne.s32.totalorder %s56, %s59
      %p68 = scmp.eq.s32.totalorder %s39, 5
      %p69 = por %p67, %p68
      %p70 = scmp.ne.s32.totalorder %s59, %s60
      %p71 = scmp.eq.s32.totalorder %s39, 0
      %p72 = por %p70, %p71
      %p73 = scmp.ne.s32.totalorder %s59, %s60
      %p74 = scmp.eq.s32.totalorder %s40, 5
      %p75 = por %p73, %p74
      %p77 = scmp.ne.s32.totalorder %s60, %s76
      %p78 = scmp.eq.s32.totalorder %s40, 0
      %p79 = por %p77, %p78
      %s80 = ssub.s32 %s41, %s53
      %p81 = scmp.eq.s32.totalorder %s80, 0
      %s83 = sadd.s32 %s82, 1
      %s84 = scalar_select %p81, %s82, %s83
      %p87 = pneg %p81
      %p88 = scmp.eq.s32.totalorder %s34, 5
      %p89 = por %p87, %p88
      %p90 = scmp.ne.s32.totalorder %s82, %s85
      %p91 = scmp.eq.s32.totalorder %s34, 0
      %p92 = por %p90, %p91
      %p93 = scmp.ne.s32.totalorder %s82, %s85
      %p94 = scmp.eq.s32.totalorder %s39, 5
      %p95 = por %p93, %p94
      %p96 = scmp.ne.s32.totalorder %s85, %s86
      %p97 = scmp.eq.s32.totalorder %s39, 0
      %p98 = por %p96, %p97
      %p99 = scmp.ne.s32.totalorder %s85, %s86
      %p100 = scmp.eq.s32.totalorder %s40, 5
      %p101 = por %p99, %p100
      %p103 = scmp.ne.s32.totalorder %s86, %s102
      %p104 = scmp.eq.s32.totalorder %s40, 0
      %p105 = por %p103, %p104
      %s107 = sadd.s32 %s106, 1
      %p110 = scmp.eq.s32.totalorder %s34, 5
      %p111 = scmp.ne.s32.totalorder %s106, %s108
      %p112 = scmp.eq.s32.totalorder %s34, 0
      %p113 = por %p111, %p112
      %p114 = scmp.ne.s32.totalorder %s106, %s108
      %p115 = scmp.eq.s32.totalorder %s39, 5
      %p116 = por %p114, %p115
      %p117 = scmp.ne.s32.totalorder %s108, %s109
      %p118 = scmp.eq.s32.totalorder %s39, 0
      %p119 = por %p117, %p118
      %p120 = scmp.ne.s32.totalorder %s108, %s109
      %p121 = scmp.eq.s32.totalorder %s40, 5
      %p122 = por %p120, %p121
      %p124 = scmp.ne.s32.totalorder %s109, %s123
      %p125 = scmp.eq.s32.totalorder %s40, 0
      %p126 = por %p124, %p125
      %s128 = sadd.s32 %s127, 1
      %p131 = scmp.eq.s32.totalorder %s34, 5
      %p132 = scmp.ne.s32.totalorder %s127, %s129
      %p133 = scmp.eq.s32.totalorder %s34, 0
      %p134 = por %p132, %p133
      %p135 = scmp.ne.s32.totalorder %s127, %s129
      %p136 = scmp.eq.s32.totalorder %s39, 5
      %p137 = por %p135, %p136
      %p138 = scmp.ne.s32.totalorder %s129, %s130
      %p139 = scmp.eq.s32.totalorder %s39, 0
      %p140 = por %p138, %p139
      %p141 = scmp.ne.s32.totalorder %s129, %s130
      %p142 = scmp.eq.s32.totalorder %s40, 5
      %p143 = por %p141, %p142
      %p145 = scmp.ne.s32.totalorder %s130, %s144
      %p146 = scmp.eq.s32.totalorder %s40, 0
      %p147 = por %p145, %p146
      %s148 = ssub.s32 %s42, %s49
      %p149 = scmp.eq.s32.totalorder %s148, 0
      %s151 = sadd.s32 %s150, 1
      %s152 = scalar_select %p149, %s150, %s151
      %p155 = pneg %p149
      %p156 = scmp.eq.s32.totalorder %s34, 5
      %p157 = por %p155, %p156
      %p158 = scmp.ne.s32.totalorder %s150, %s153
      %p159 = scmp.eq.s32.totalorder %s34, 0
      %p160 = por %p158, %p159
      %p161 = scmp.ne.s32.totalorder %s150, %s153
      %p162 = scmp.eq.s32.totalorder %s39, 5
      %p163 = por %p161, %p162
      %p164 = scmp.ne.s32.totalorder %s153, %s154
      %p165 = scmp.eq.s32.totalorder %s39, 0
      %p166 = por %p164, %p165
      %p167 = scmp.ne.s32.totalorder %s153, %s154
      %p168 = scmp.eq.s32.totalorder %s40, 5
      %p169 = por %p167, %p168
      %p171 = scmp.ne.s32.totalorder %s154, %s170
      %p172 = scmp.eq.s32.totalorder %s40, 0
      %p173 = por %p171, %p172
      %s174 = ssub.s32 %s42, %s49
      %p175 = scmp.eq.s32.totalorder %s174, 0
      %s177 = sadd.s32 %s176, 1
      %s178 = scalar_select %p175, %s176, %s177
      %p181 = pneg %p175
      %p182 = scmp.eq.s32.totalorder %s34, 5
      %p183 = por %p181, %p182
      %p184 = scmp.ne.s32.totalorder %s176, %s179
      %p185 = scmp.eq.s32.totalorder %s34, 0
      %p186 = por %p184, %p185
      %p187 = scmp.ne.s32.totalorder %s176, %s179
      %p188 = scmp.eq.s32.totalorder %s39, 5
      %p189 = por %p187, %p188
      %p190 = scmp.ne.s32.totalorder %s179, %s180
      %p191 = scmp.eq.s32.totalorder %s39, 0
      %p192 = por %p190, %p191
      %p193 = scmp.ne.s32.totalorder %s179, %s180
      %p194 = scmp.eq.s32.totalorder %s40, 5
      %p195 = por %p193, %p194
      %p197 = scmp.ne.s32.totalorder %s180, %s196
      %p198 = scmp.eq.s32.totalorder %s40, 0
      %p199 = por %p197, %p198
      %s200 = ssub.s32 %s42, %s49
      %p201 = scmp.eq.s32.totalorder %s200, 0
      %s203 = sadd.s32 %s202, 1
      %s204 = scalar_select %p201, %s202, %s203
      %p207 = pneg %p201
      %p208 = scmp.eq.s32.totalorder %s34, 5
      %p209 = por %p207, %p208
      %p210 = scmp.ne.s32.totalorder %s202, %s205
      %p211 = scmp.eq.s32.totalorder %s34, 0
      %p212 = por %p210, %p211
      %p213 = scmp.ne.s32.totalorder %s202, %s205
      %p214 = scmp.eq.s32.totalorder %s39, 5
      %p215 = por %p213, %p214
      %p216 = scmp.ne.s32.totalorder %s205, %s206
      %p217 = scmp.eq.s32.totalorder %s39, 0
      %p218 = por %p216, %p217
      %p219 = scmp.ne.s32.totalorder %s205, %s206
      %p220 = scmp.eq.s32.totalorder %s40, 5
      %p221 = por %p219, %p220
      %p223 = scmp.ne.s32.totalorder %s206, %s222
      %p224 = scmp.eq.s32.totalorder %s40, 0
      %p225 = por %p223, %p224
      %s226 = ssub.s32 %s42, %s49
      %p227 = scmp.eq.s32.totalorder %s226, 0
      %s229 = sadd.s32 %s228, 1
      %s230 = scalar_select %p227, %s228, %s229
      %p233 = pneg %p227
      %p234 = scmp.eq.s32.totalorder %s34, 5
      %p235 = por %p233, %p234
      %p236 = scmp.ne.s32.totalorder %s228, %s231
      %p237 = scmp.eq.s32.totalorder %s34, 0
      %p238 = por %p236, %p237
      %p239 = scmp.ne.s32.totalorder %s228, %s231
      %p240 = scmp.eq.s32.totalorder %s39, 5
      %p241 = por %p239, %p240
      %p242 = scmp.ne.s32.totalorder %s231, %s232
      %p243 = scmp.eq.s32.totalorder %s39, 0
      %p244 = por %p242, %p243
      %p245 = scmp.ne.s32.totalorder %s231, %s232
      %p246 = scmp.eq.s32.totalorder %s40, 5
      %p247 = por %p245, %p246
      %p249 = scmp.ne.s32.totalorder %s232, %s248
      %p250 = scmp.eq.s32.totalorder %s40, 0
      %p251 = por %p249, %p250
      %s252 = ssub.s32 %s42, %s49
      %p253 = scmp.eq.s32.totalorder %s252, 0
      %s255 = sadd.s32 %s254, 1
      %s256 = scalar_select %p253, %s254, %s255
      %p259 = pneg %p253
      %p260 = scmp.eq.s32.totalorder %s34, 5
      %p261 = por %p259, %p260
      %p262 = scmp.ne.s32.totalorder %s254, %s257
      %p263 = scmp.eq.s32.totalorder %s34, 0
      %p264 = por %p262, %p263
      %p265 = scmp.ne.s32.totalorder %s254, %s257
      %p266 = scmp.eq.s32.totalorder %s39, 5
      %p267 = por %p265, %p266
      %p268 = scmp.ne.s32.totalorder %s257, %s258
      %p269 = scmp.eq.s32.totalorder %s39, 0
      %p270 = por %p268, %p269
      %p271 = scmp.ne.s32.totalorder %s257, %s258
      %p272 = scmp.eq.s32.totalorder %s40, 5
      %p273 = por %p271, %p272
      %p275 = scmp.ne.s32.totalorder %s258, %s274
      %p276 = scmp.eq.s32.totalorder %s40, 0
      %p277 = por %p275, %p276
      %s278 = ssub.s32 %s42, %s49
      %p279 = scmp.eq.s32.totalorder %s278, 0
      %s281 = sadd.s32 %s280, 1
      %s282 = scalar_select %p279, %s280, %s281
      %p285 = pneg %p279
      %p286 = scmp.eq.s32.totalorder %s34, 5
      %p287 = por %p285, %p286
      %p288 = scmp.ne.s32.totalorder %s280, %s283
      %p289 = scmp.eq.s32.totalorder %s34, 0
      %p290 = por %p288, %p289
      %p291 = scmp.ne.s32.totalorder %s280, %s283
      %p292 = scmp.eq.s32.totalorder %s39, 5
      %p293 = por %p291, %p292
      %p294 = scmp.ne.s32.totalorder %s283, %s284
      %p295 = scmp.eq.s32.totalorder %s39, 0
      %p296 = por %p294, %p295
      %p297 = scmp.ne.s32.totalorder %s283, %s284
      %p298 = scmp.eq.s32.totalorder %s40, 5
      %p299 = por %p297, %p298
      %p301 = scmp.ne.s32.totalorder %s284, %s300
      %p302 = scmp.eq.s32.totalorder %s40, 0
      %p303 = por %p301, %p302
      %s304 = ssub.s32 %s42, %s49
      %p305 = scmp.eq.s32.totalorder %s304, 0
      %s307 = sadd.s32 %s306, 1
      %s308 = scalar_select %p305, %s306, %s307
      %p311 = pneg %p305
      %p312 = scmp.eq.s32.totalorder %s34, 5
      %p313 = por %p311, %p312
      %p314 = scmp.ne.s32.totalorder %s306, %s309
      %p315 = scmp.eq.s32.totalorder %s34, 0
      %p316 = por %p314, %p315
      %p317 = scmp.ne.s32.totalorder %s306, %s309
      %p318 = scmp.eq.s32.totalorder %s39, 5
      %p319 = por %p317, %p318
      %p320 = scmp.ne.s32.totalorder %s309, %s310
      %p321 = scmp.eq.s32.totalorder %s39, 0
      %p322 = por %p320, %p321
      %p323 = scmp.ne.s32.totalorder %s309, %s310
      %p324 = scmp.eq.s32.totalorder %s40, 5
      %p325 = por %p323, %p324
      %p327 = scmp.ne.s32.totalorder %s310, %s326
      %p328 = scmp.eq.s32.totalorder %s40, 0
      %p329 = por %p327, %p328
      %s330 = ssub.s32 %s42, %s49
      %p331 = scmp.eq.s32.totalorder %s330, 0
      %s333 = sadd.s32 %s332, 1
      %s334 = scalar_select %p331, %s332, %s333
      %p337 = pneg %p331
      %p338 = scmp.eq.s32.totalorder %s34, 5
      %p339 = por %p337, %p338
      %p340 = scmp.ne.s32.totalorder %s332, %s335
      %p341 = scmp.eq.s32.totalorder %s34, 0
      %p342 = por %p340, %p341
      %p343 = scmp.ne.s32.totalorder %s332, %s335
      %p344 = scmp.eq.s32.totalorder %s39, 5
      %p345 = por %p343, %p344
      %p346 = scmp.ne.s32.totalorder %s335, %s336
      %p347 = scmp.eq.s32.totalorder %s39, 0
      %p348 = por %p346, %p347
      %p349 = scmp.ne.s32.totalorder %s335, %s336
      %p350 = scmp.eq.s32.totalorder %s40, 5
      %p351 = por %p349, %p350
      %p353 = scmp.ne.s32.totalorder %s336, %s352
      %p354 = scmp.eq.s32.totalorder %s40, 0
      %p355 = por %p353, %p354
      %s356 = ssub.s32 %s42, %s49
      %p357 = scmp.eq.s32.totalorder %s356, 0
      %s359 = sadd.s32 %s358, 1
      %s360 = scalar_select %p357, %s358, %s359
      %p363 = pneg %p357
      %p364 = scmp.eq.s32.totalorder %s34, 5
      %p365 = por %p363, %p364
      %p366 = scmp.ne.s32.totalorder %s358, %s361
      %p367 = scmp.eq.s32.totalorder %s34, 0
      %p368 = por %p366, %p367
      %p369 = scmp.ne.s32.totalorder %s358, %s361
      %p370 = scmp.eq.s32.totalorder %s39, 5
      %p371 = por %p369, %p370
      %p372 = scmp.ne.s32.totalorder %s361, %s362
      %p373 = scmp.eq.s32.totalorder %s39, 0
      %p374 = por %p372, %p373
      %p375 = scmp.ne.s32.totalorder %s361, %s362
      %p376 = scmp.eq.s32.totalorder %s40, 5
      %p377 = por %p375, %p376
      %p379 = scmp.ne.s32.totalorder %s362, %s378
      %p380 = scmp.eq.s32.totalorder %s40, 0
      %p381 = por %p379, %p380
      %s382 = ssub.s32 %s42, %s49
      %p383 = scmp.eq.s32.totalorder %s382, 0
      %s385 = sadd.s32 %s384, 1
      %s386 = scalar_select %p383, %s384, %s385
      %p389 = pneg %p383
      %p390 = scmp.eq.s32.totalorder %s34, 5
      %p391 = por %p389, %p390
      %p392 = scmp.ne.s32.totalorder %s384, %s387
      %p393 = scmp.eq.s32.totalorder %s34, 0
      %p394 = por %p392, %p393
      %p395 = scmp.ne.s32.totalorder %s384, %s387
      %p396 = scmp.eq.s32.totalorder %s39, 5
      %p397 = por %p395, %p396
      %p398 = scmp.ne.s32.totalorder %s387, %s388
      %p399 = scmp.eq.s32.totalorder %s39, 0
      %p400 = por %p398, %p399
      %p401 = scmp.ne.s32.totalorder %s387, %s388
      %p402 = scmp.eq.s32.totalorder %s40, 5
      %p403 = por %p401, %p402
      %p405 = scmp.ne.s32.totalorder %s388, %s404
      %p406 = scmp.eq.s32.totalorder %s40, 0
      %p407 = por %p405, %p406
      %s408 = ssub.s32 %s42, %s49
      %p409 = scmp.eq.s32.totalorder %s408, 0
      %s411 = sadd.s32 %s410, 1
      %s412 = scalar_select %p409, %s410, %s411
      %p415 = pneg %p409
      %p416 = scmp.eq.s32.totalorder %s34, 5
      %p417 = por %p415, %p416
      %p418 = scmp.ne.s32.totalorder %s410, %s413
      %p419 = scmp.eq.s32.totalorder %s34, 0
      %p420 = por %p418, %p419
      %p421 = scmp.ne.s32.totalorder %s410, %s413
      %p422 = scmp.eq.s32.totalorder %s39, 5
      %p423 = por %p421, %p422
      %p424 = scmp.ne.s32.totalorder %s413, %s414
      %p425 = scmp.eq.s32.totalorder %s39, 0
      %p426 = por %p424, %p425
      %p427 = scmp.ne.s32.totalorder %s413, %s414
      %p428 = scmp.eq.s32.totalorder %s40, 5
      %p429 = por %p427, %p428
      %p431 = scmp.ne.s32.totalorder %s414, %s430
      %p432 = scmp.eq.s32.totalorder %s40, 0
      %p433 = por %p431, %p432
      %s434 = ssub.s32 %s42, %s49
      %p435 = scmp.eq.s32.totalorder %s434, 0
      %s437 = sadd.s32 %s436, 1
      %s438 = scalar_select %p435, %s436, %s437
      %p441 = pneg %p435
      %p442 = scmp.eq.s32.totalorder %s34, 5
      %p443 = por %p441, %p442
      %p444 = scmp.ne.s32.totalorder %s436, %s439
      %p445 = scmp.eq.s32.totalorder %s34, 0
      %p446 = por %p444, %p445
      %p447 = scmp.ne.s32.totalorder %s436, %s439
      %p448 = scmp.eq.s32.totalorder %s39, 5
      %p449 = por %p447, %p448
      %p450 = scmp.ne.s32.totalorder %s439, %s440
      %p451 = scmp.eq.s32.totalorder %s39, 0
      %p452 = por %p450, %p451
      %p453 = scmp.ne.s32.totalorder %s439, %s440
      %p454 = scmp.eq.s32.totalorder %s40, 5
      %p455 = por %p453, %p454
      %p457 = scmp.ne.s32.totalorder %s440, %s456
      %p458 = scmp.eq.s32.totalorder %s40, 0
      %p459 = por %p457, %p458
      %s461 = sadd.s32 %s460, 1
      %p464 = scmp.eq.s32.totalorder %s34, 5
      %p465 = scmp.ne.s32.totalorder %s460, %s462
      %p466 = scmp.eq.s32.totalorder %s34, 0
      %p467 = por %p465, %p466
      %p468 = scmp.ne.s32.totalorder %s460, %s462
      %p469 = scmp.eq.s32.totalorder %s39, 5
      %p470 = por %p468, %p469
      %p471 = scmp.ne.s32.totalorder %s462, %s463
      %p472 = scmp.eq.s32.totalorder %s39, 0
      %p473 = por %p471, %p472
      %p474 = scmp.ne.s32.totalorder %s462, %s463
      %p475 = scmp.eq.s32.totalorder %s40, 5
      %p476 = por %p474, %p475
      %p478 = scmp.ne.s32.totalorder %s463, %s477
      %p479 = scmp.eq.s32.totalorder %s40, 0
      %p480 = por %p478, %p479
      %s482 = sadd.s32 %s481, 1
      %p485 = scmp.eq.s32.totalorder %s34, 5
      %p486 = scmp.ne.s32.totalorder %s481, %s483
      %p487 = scmp.eq.s32.totalorder %s34, 0
      %p488 = por %p486, %p487
      %p489 = scmp.ne.s32.totalorder %s481, %s483
      %p490 = scmp.eq.s32.totalorder %s39, 5
      %p491 = por %p489, %p490
      %p492 = scmp.ne.s32.totalorder %s483, %s484
      %p493 = scmp.eq.s32.totalorder %s39, 0
      %p494 = por %p492, %p493
      %p495 = scmp.ne.s32.totalorder %s483, %s484
      %p496 = scmp.eq.s32.totalorder %s40, 5
      %p497 = por %p495, %p496
      %p499 = scmp.ne.s32.totalorder %s484, %s498
      %p500 = scmp.eq.s32.totalorder %s40, 0
      %p501 = por %p499, %p500
      %s502 = ssub.s32 %s41, %s53
      %p503 = scmp.eq.s32.totalorder %s502, 0
      %s505 = sadd.s32 %s504, 1
      %s506 = scalar_select %p503, %s504, %s505
      %p509 = pneg %p503
      %p510 = scmp.eq.s32.totalorder %s34, 5
      %p511 = por %p509, %p510
      %p512 = scmp.ne.s32.totalorder %s504, %s507
      %p513 = scmp.eq.s32.totalorder %s34, 0
      %p514 = por %p512, %p513
      %p515 = scmp.ne.s32.totalorder %s504, %s507
      %p516 = scmp.eq.s32.totalorder %s39, 5
      %p517 = por %p515, %p516
      %p518 = scmp.ne.s32.totalorder %s507, %s508
      %p519 = scmp.eq.s32.totalorder %s39, 0
      %p520 = por %p518, %p519
      %p521 = scmp.ne.s32.totalorder %s507, %s508
      %p522 = scmp.eq.s32.totalorder %s40, 5
      %p523 = por %p521, %p522
      %p525 = scmp.ne.s32.totalorder %s508, %s524
      %p526 = scmp.eq.s32.totalorder %s40, 0
      %p527 = por %p525, %p526
      %p528 = scmp.le.s32.totalorder 1, %s34
      %p529 = scmp.lt.s32.totalorder %s34, 7
      %p530 = pnand %p528, %p529
      %p531 = pneg %p530
      // Predicated region
      $region9: #{tpu_custom_call.1} parent=5 // pred_check
        _
      $region10: #{tpu_custom_call.1} parent=5 // pred_check_branch
        %533 = sbr.rel (%p530) target = $region12
      $region11: #{tpu_custom_call.1} parent=5 // pred_region
        %s534 = ssub.s32 %s34, 1
        // Predicated region
        $region13: #{tpu_custom_call.1} parent=11 // pred_check
          %p535 = pneg %p119
        $region14: #{tpu_custom_call.1} parent=11 // pred_check_branch
          %537 = sbr.rel (%p535) target = $region16
        $region15: #{tpu_custom_call.1} parent=11 // pred_region
          %s539 = ssub.s32 16, 16
          %540 = vsyncadd [#allocation7], %s539
          %s542 = sshll.u32 [#allocation8], 4
          %s543 = int_to_ptr.vmem [resolvable:$true] %s542
          %545 = dma.hbm_to_vmem [thread:$0]  %s2, 16, %s543, [#allocation7]
        $region16: #{tpu_custom_call.1} parent=11 // pred_fallthru
          _
        // Predicated region
        $region17: #{tpu_custom_call.1} parent=11 // pred_check
          %p546 = pneg %p140
        $region18: #{tpu_custom_call.1} parent=11 // pred_check_branch
          %548 = sbr.rel (%p546) target = $region20
        $region19: #{tpu_custom_call.1} parent=11 // pred_region
          %s550 = ssub.s32 16, 16
          %551 = vsyncadd [#allocation10], %s550
          %s553 = sshll.u32 [#allocation9], 4
          %s554 = int_to_ptr.vmem [resolvable:$true] %s553
          %556 = dma.hbm_to_vmem [thread:$0]  %s3, 16, %s554, [#allocation10]
        $region20: #{tpu_custom_call.1} parent=11 // pred_fallthru
          _
        // Predicated region
        $region21: #{tpu_custom_call.1} parent=11 // pred_check
          %p557 = pneg %p473
        $region22: #{tpu_custom_call.1} parent=11 // pred_check_branch
          %559 = sbr.rel (%p557) target = $region24
        $region23: #{tpu_custom_call.1} parent=11 // pred_region
          %s561 = ssub.s32 2048, 2048
          %562 = vsyncadd [#allocation7], %s561
          %s563 = sshll.u32 [#allocation18], 4
          %s564 = int_to_ptr.vmem [resolvable:$true] %s563
          %569 = dma.hbm_to_vmem [thread:$0]  %s16, 2048, %s564, [#allocation7], 128, 128, 8
        $region24: #{tpu_custom_call.1} parent=11 // pred_fallthru
          _
        // Predicated region
        $region25: #{tpu_custom_call.1} parent=11 // pred_check
          %p570 = pneg %p494
        $region26: #{tpu_custom_call.1} parent=11 // pred_check_branch
          %572 = sbr.rel (%p570) target = $region28
        $region27: #{tpu_custom_call.1} parent=11 // pred_region
          _
        $region28: #{tpu_custom_call.1} parent=11 // pred_fallthru
          _
      $region12: #{tpu_custom_call.1} parent=5 // pred_fallthru
        _
      %p573 = scmp.lt.s32.totalorder %s34, 6
      // Predicated region
      $region29: #{tpu_custom_call.1} parent=5 // pred_check
        %p574 = pneg %p573
      $region30: #{tpu_custom_call.1} parent=5 // pred_check_branch
        %576 = sbr.rel (%p574) target = $region32
      $region31: #{tpu_custom_call.1} parent=5 // pred_region
        // Predicated region
        $region33: #{tpu_custom_call.1} parent=31 // pred_check
          %p577 = pneg %p66
        $region34: #{tpu_custom_call.1} parent=31 // pred_check_branch
          %579 = sbr.rel (%p577) target = $region36
        $region35: #{tpu_custom_call.1} parent=31 // pred_region
          %s580 = sand.u32 %s34, 1
          %s581 = scalar_lea.sflag [#allocation4], %s580
          %s582 = sand.u32 %s56, 1
          %s583 = smul.addr %s582, 16
          %s584 = scalar_lea.vmem [#allocation3], %s583
          %s585 = smul.u32 2, %s41
          %s587 = ssub.s32 256, 256
          %588 = vsyncadd %s581, %s587
          %s589 = smul.addr %s585, 2
          %s590 = smul.addr %s589, 64
          %s591 = scalar_lea.hbm %s0, %s590
          %s592 = sshll.u32 %s584, 4
          %s593 = int_to_ptr.vmem [resolvable:$true] %s592
          %598 = dma.hbm_to_vmem [thread:$0]  %s591, 256, %s593, %s581, 64, 64, 4
        $region36: #{tpu_custom_call.1} parent=31 // pred_fallthru
          _
        // Predicated region
        $region37: #{tpu_custom_call.1} parent=31 // pred_check
          %p599 = pneg %p92
        $region38: #{tpu_custom_call.1} parent=31 // pred_check_branch
          %601 = sbr.rel (%p599) target = $region40
        $region39: #{tpu_custom_call.1} parent=31 // pred_region
          %s602 = sand.u32 %s34, 1
          %s603 = scalar_lea.sflag [#allocation7], %s602
          %s604 = sand.u32 %s82, 1
          %s605 = smul.addr %s604, 2
          %s606 = scalar_lea.vmem [#allocation6], %s605
          %s607 = smul.u32 2, %s41
          %s609 = ssub.s32 32, 32
          %610 = vsyncadd %s603, %s609
          %s611 = smul.addr %s607, 16
          %s612 = scalar_lea.hbm %s1, %s611
          %s613 = sshll.u32 %s606, 4
          %s614 = int_to_ptr.vmem [resolvable:$true] %s613
          %619 = dma.hbm_to_vmem [thread:$0]  %s612, 32, %s614, %s603, 16, 16, 1
        $region40: #{tpu_custom_call.1} parent=31 // pred_fallthru
          _
        // Predicated region
        $region41: #{tpu_custom_call.1} parent=31 // pred_check
          %p620 = pneg %p160
        $region42: #{tpu_custom_call.1} parent=31 // pred_check_branch
          %622 = sbr.rel (%p620) target = $region44
        $region43: #{tpu_custom_call.1} parent=31 // pred_region
          %s623 = sand.u32 %s34, 1
          %s624 = scalar_lea.sflag [#allocation4], %s623
          %s625 = sand.u32 %s150, 1
          %s626 = smul.addr %s625, 192
          %s627 = scalar_lea.vmem [#allocation11], %s626
          %s629 = ssub.s32 3072, 3072
          %630 = vsyncadd %s624, %s629
          %s631 = smul.addr %s42, 48
          %s632 = smul.addr %s631, 64
          %s633 = scalar_lea.hbm %s4, %s632
          %s634 = sshll.u32 %s627, 4
          %s635 = int_to_ptr.vmem [resolvable:$true] %s634
          %640 = dma.hbm_to_vmem [thread:$0]  %s633, 3072, %s635, %s624, 192, 192, 12
        $region44: #{tpu_custom_call.1} parent=31 // pred_fallthru
          _
        // Predicated region
        $region45: #{tpu_custom_call.1} parent=31 // pred_check
          %p641 = pneg %p186
        $region46: #{tpu_custom_call.1} parent=31 // pred_check_branch
          %643 = sbr.rel (%p641) target = $region48
        $region47: #{tpu_custom_call.1} parent=31 // pred_region
          %p644 = scmp.lt.s32.totalorder %s42, 2
          %s645 = scalar_select %p644, %s42, 2
          %s646 = smul.addr %s645, 3
          %s647 = scalar_lea.vmem %s5, %s646
        $region48: #{tpu_custom_call.1} parent=31 // pred_fallthru
          _
        // Predicated region
        $region49: #{tpu_custom_call.1} parent=31 // pred_check
          %p648 = pneg %p212
        $region50: #{tpu_custom_call.1} parent=31 // pred_check_branch
          %650 = sbr.rel (%p648) target = $region52
        $region51: #{tpu_custom_call.1} parent=31 // pred_region
          %s651 = sand.u32 %s34, 1
          %s652 = scalar_lea.sflag [#allocation7], %s651
          %s653 = sand.u32 %s202, 1
          %s654 = smul.addr %s653, 64
          %s655 = scalar_lea.vmem [#allocation12], %s654
          %s657 = ssub.s32 1024, 1024
          %658 = vsyncadd %s652, %s657
          %s659 = smul.addr %s42, 16
          %s660 = smul.addr %s659, 64
          %s661 = scalar_lea.hbm %s6, %s660
          %s662 = sshll.u32 %s655, 4
          %s663 = int_to_ptr.vmem [resolvable:$true] %s662
          %668 = dma.hbm_to_vmem [thread:$0]  %s661, 1024, %s663, %s652, 64, 64, 4
        $region52: #{tpu_custom_call.1} parent=31 // pred_fallthru
          _
        // Predicated region
        $region53: #{tpu_custom_call.1} parent=31 // pred_check
          %p669 = pneg %p238
        $region54: #{tpu_custom_call.1} parent=31 // pred_check_branch
          %671 = sbr.rel (%p669) target = $region56
        $region55: #{tpu_custom_call.1} parent=31 // pred_region
          %s672 = sand.u32 %s34, 1
          %s673 = scalar_lea.sflag [#allocation4], %s672
          %s674 = sand.u32 %s228, 1
          %s675 = scalar_lea.vmem [#allocation13], %s674
          %s677 = ssub.s32 16, 16
          %678 = vsyncadd %s673, %s677
          %s679 = smul.addr %s42, 16
          %s680 = scalar_lea.hbm %s7, %s679
          %s682 = sshll.u32 %s675, 4
          %s683 = int_to_ptr.vmem [resolvable:$true] %s682
          %685 = dma.hbm_to_vmem [thread:$0]  %s680, 16, %s683, %s673
        $region56: #{tpu_custom_call.1} parent=31 // pred_fallthru
          _
        // Predicated region
        $region57: #{tpu_custom_call.1} parent=31 // pred_check
          %p686 = pneg %p264
        $region58: #{tpu_custom_call.1} parent=31 // pred_check_branch
          %688 = sbr.rel (%p686) target = $region60
        $region59: #{tpu_custom_call.1} parent=31 // pred_region
          %s689 = sand.u32 %s34, 1
          %s690 = scalar_lea.sflag [#allocation7], %s689
          %s691 = sand.u32 %s254, 1
          %s692 = scalar_lea.vmem [#allocation14], %s691
          %s694 = ssub.s32 16, 16
          %695 = vsyncadd %s690, %s694
          %s696 = smul.addr %s42, 16
          %s697 = scalar_lea.hbm %s8, %s696
          %s699 = sshll.u32 %s692, 4
          %s700 = int_to_ptr.vmem [resolvable:$true] %s699
          %702 = dma.hbm_to_vmem [thread:$0]  %s697, 16, %s700, %s690
        $region60: #{tpu_custom_call.1} parent=31 // pred_fallthru
          _
        // Predicated region
        $region61: #{tpu_custom_call.1} parent=31 // pred_check
          %p703 = pneg %p290
        $region62: #{tpu_custom_call.1} parent=31 // pred_check_branch
          %705 = sbr.rel (%p703) target = $region64
        $region63: #{tpu_custom_call.1} parent=31 // pred_region
          %s706 = sand.u32 %s34, 1
          %s707 = scalar_lea.sflag [#allocation4], %s706
          %s708 = sand.u32 %s280, 1
          %s709 = scalar_lea.vmem [#allocation15], %s708
          %s711 = ssub.s32 16, 16
          %712 = vsyncadd %s707, %s711
          %s713 = smul.addr %s42, 16
          %s714 = scalar_lea.hbm %s9, %s713
          %s716 = sshll.u32 %s709, 4
          %s717 = int_to_ptr.vmem [resolvable:$true] %s716
          %719 = dma.hbm_to_vmem [thread:$0]  %s714, 16, %s717, %s707
        $region64: #{tpu_custom_call.1} parent=31 // pred_fallthru
          _
        // Predicated region
        $region65: #{tpu_custom_call.1} parent=31 // pred_check
          %p720 = pneg %p316
        $region66: #{tpu_custom_call.1} parent=31 // pred_check_branch
          %722 = sbr.rel (%p720) target = $region68
        $region67: #{tpu_custom_call.1} parent=31 // pred_region
          %s723 = sand.u32 %s34, 1
          %s724 = scalar_lea.sflag [#allocation7], %s723
          %s725 = sand.u32 %s306, 1
          %s726 = smul.addr %s725, 128
          %s727 = scalar_lea.vmem [#allocation16], %s726
          %s729 = ssub.s32 2048, 2048
          %730 = vsyncadd %s724, %s729
          %s731 = smul.addr %s42, 32
          %s732 = smul.addr %s731, 64
          %s733 = scalar_lea.hbm %s10, %s732
          %s734 = sshll.u32 %s727, 4
          %s735 = int_to_ptr.vmem [resolvable:$true] %s734
          %740 = dma.hbm_to_vmem [thread:$0]  %s733, 2048, %s735, %s724, 128, 128, 8
        $region68: #{tpu_custom_call.1} parent=31 // pred_fallthru
          _
        // Predicated region
        $region69: #{tpu_custom_call.1} parent=31 // pred_check
          %p741 = pneg %p342
        $region70: #{tpu_custom_call.1} parent=31 // pred_check_branch
          %743 = sbr.rel (%p741) target = $region72
        $region71: #{tpu_custom_call.1} parent=31 // pred_region
          %p744 = scmp.lt.s32.totalorder %s42, 2
          %s745 = scalar_select %p744, %s42, 2
          %s746 = smul.addr %s745, 2
          %s747 = scalar_lea.vmem %s11, %s746
        $region72: #{tpu_custom_call.1} parent=31 // pred_fallthru
          _
        // Predicated region
        $region73: #{tpu_custom_call.1} parent=31 // pred_check
          %p748 = pneg %p368
        $region74: #{tpu_custom_call.1} parent=31 // pred_check_branch
          %750 = sbr.rel (%p748) target = $region76
        $region75: #{tpu_custom_call.1} parent=31 // pred_region
          %s751 = sand.u32 %s34, 1
          %s752 = scalar_lea.sflag [#allocation4], %s751
          %s753 = sand.u32 %s358, 1
          %s754 = smul.addr %s753, 128
          %s755 = scalar_lea.vmem [#allocation17], %s754
          %s757 = ssub.s32 2048, 2048
          %758 = vsyncadd %s752, %s757
          %s759 = smul.addr %s42, 32
          %s760 = smul.addr %s759, 64
          %s761 = scalar_lea.hbm %s12, %s760
          %s762 = sshll.u32 %s755, 4
          %s763 = int_to_ptr.vmem [resolvable:$true] %s762
          %768 = dma.hbm_to_vmem [thread:$0]  %s761, 2048, %s763, %s752, 64, 64, 4
        $region76: #{tpu_custom_call.1} parent=31 // pred_fallthru
          _
        // Predicated region
        $region77: #{tpu_custom_call.1} parent=31 // pred_check
          %p769 = pneg %p394
        $region78: #{tpu_custom_call.1} parent=31 // pred_check_branch
          %771 = sbr.rel (%p769) target = $region80
        $region79: #{tpu_custom_call.1} parent=31 // pred_region
          %p772 = scmp.lt.s32.totalorder %s42, 2
          %s773 = scalar_select %p772, %s42, 2
          %s774 = scalar_lea.vmem %s13, %s773
        $region80: #{tpu_custom_call.1} parent=31 // pred_fallthru
          _
        // Predicated region
        $region81: #{tpu_custom_call.1} parent=31 // pred_check
          %p775 = pneg %p420
        $region82: #{tpu_custom_call.1} parent=31 // pred_check_branch
          %777 = sbr.rel (%p775) target = $region84
        $region83: #{tpu_custom_call.1} parent=31 // pred_region
          %p778 = scmp.lt.s32.totalorder %s42, 2
          %s779 = scalar_select %p778, %s42, 2
          %s780 = scalar_lea.vmem %s14, %s779
        $region84: #{tpu_custom_call.1} parent=31 // pred_fallthru
          _
        // Predicated region
        $region85: #{tpu_custom_call.1} parent=31 // pred_check
          %p781 = pneg %p446
        $region86: #{tpu_custom_call.1} parent=31 // pred_check_branch
          %783 = sbr.rel (%p781) target = $region88
        $region87: #{tpu_custom_call.1} parent=31 // pred_region
          %p784 = scmp.lt.s32.totalorder %s42, 2
          %s785 = scalar_select %p784, %s42, 2
          %s786 = scalar_lea.vmem %s15, %s785
        $region88: #{tpu_custom_call.1} parent=31 // pred_fallthru
          _
      $region32: #{tpu_custom_call.1} parent=5 // pred_fallthru
        _
      %p787 = scmp.le.s32.totalorder 1, %s34
      %p788 = scmp.lt.s32.totalorder %s34, 7
      %p789 = pnand %p787, %p788
      %p790 = pneg %p789
      // Predicated region
      $region89: #{tpu_custom_call.1} parent=5 // pred_check
        _
      $region90: #{tpu_custom_call.1} parent=5 // pred_check_branch
        %792 = sbr.rel (%p789) target = $region92
      $region91: #{tpu_custom_call.1} parent=5 // pred_region
        %s793 = ssub.s32 %s34, 1
        %s794 = sand.u32 %s39, 1
        %s795 = scalar_lea.sflag [#allocation4], %s794
        %s796 = sand.u32 %s59, 1
        %s797 = smul.addr %s796, 16
        %s798 = scalar_lea.vmem [#allocation3], %s797
        // Predicated region
        $region93: #{tpu_custom_call.1} parent=91 // pred_check
          %p799 = pneg %p72
        $region94: #{tpu_custom_call.1} parent=91 // pred_check_branch
          %801 = sbr.rel (%p799) target = $region96
        $region95: #{tpu_custom_call.1} parent=91 // pred_region
          %802 = dma.done %s795, 256
        $region96: #{tpu_custom_call.1} parent=91 // pred_fallthru
          _
        %s803 = sand.u32 %s39, 1
        %s804 = scalar_lea.sflag [#allocation7], %s803
        %s805 = sand.u32 %s85, 1
        %s806 = smul.addr %s805, 2
        %s807 = scalar_lea.vmem [#allocation6], %s806
        // Predicated region
        $region97: #{tpu_custom_call.1} parent=91 // pred_check
          %p808 = pneg %p98
        $region98: #{tpu_custom_call.1} parent=91 // pred_check_branch
          %810 = sbr.rel (%p808) target = $region100
        $region99: #{tpu_custom_call.1} parent=91 // pred_region
          %811 = dma.done %s804, 32
        $region100: #{tpu_custom_call.1} parent=91 // pred_fallthru
          _
        // Predicated region
        $region101: #{tpu_custom_call.1} parent=91 // pred_check
          %p812 = pneg %p119
        $region102: #{tpu_custom_call.1} parent=91 // pred_check_branch
          %814 = sbr.rel (%p812) target = $region104
        $region103: #{tpu_custom_call.1} parent=91 // pred_region
          %815 = dma.done [#allocation7], 16
        $region104: #{tpu_custom_call.1} parent=91 // pred_fallthru
          _
        // Predicated region
        $region105: #{tpu_custom_call.1} parent=91 // pred_check
          %p816 = pneg %p140
        $region106: #{tpu_custom_call.1} parent=91 // pred_check_branch
          %818 = sbr.rel (%p816) target = $region108
        $region107: #{tpu_custom_call.1} parent=91 // pred_region
          %819 = dma.done [#allocation10], 16
        $region108: #{tpu_custom_call.1} parent=91 // pred_fallthru
          _
        %s820 = sand.u32 %s39, 1
        %s821 = scalar_lea.sflag [#allocation4], %s820
        %s822 = sand.u32 %s153, 1
        %s823 = smul.addr %s822, 192
        %s824 = scalar_lea.vmem [#allocation11], %s823
        // Predicated region
        $region109: #{tpu_custom_call.1} parent=91 // pred_check
          %p825 = pneg %p166
        $region110: #{tpu_custom_call.1} parent=91 // pred_check_branch
          %827 = sbr.rel (%p825) target = $region112
        $region111: #{tpu_custom_call.1} parent=91 // pred_region
          %828 = dma.done %s821, 3072
        $region112: #{tpu_custom_call.1} parent=91 // pred_fallthru
          _
        %s829 = sand.u32 %s39, 1
        %s830 = scalar_lea.sflag [#allocation7], %s829
        %s831 = sand.u32 %s205, 1
        %s832 = smul.addr %s831, 64
        %s833 = scalar_lea.vmem [#allocation12], %s832
        // Predicated region
        $region113: #{tpu_custom_call.1} parent=91 // pred_check
          %p834 = pneg %p218
        $region114: #{tpu_custom_call.1} parent=91 // pred_check_branch
          %836 = sbr.rel (%p834) target = $region116
        $region115: #{tpu_custom_call.1} parent=91 // pred_region
          %837 = dma.done %s830, 1024
        $region116: #{tpu_custom_call.1} parent=91 // pred_fallthru
          _
        %s838 = sand.u32 %s39, 1
        %s839 = scalar_lea.sflag [#allocation4], %s838
        %s840 = sand.u32 %s231, 1
        %s841 = scalar_lea.vmem [#allocation13], %s840
        // Predicated region
        $region117: #{tpu_custom_call.1} parent=91 // pred_check
          %p842 = pneg %p244
        $region118: #{tpu_custom_call.1} parent=91 // pred_check_branch
          %844 = sbr.rel (%p842) target = $region120
        $region119: #{tpu_custom_call.1} parent=91 // pred_region
          %845 = dma.done %s839, 16
        $region120: #{tpu_custom_call.1} parent=91 // pred_fallthru
          _
        %s846 = sand.u32 %s39, 1
        %s847 = scalar_lea.sflag [#allocation7], %s846
        %s848 = sand.u32 %s257, 1
        %s849 = scalar_lea.vmem [#allocation14], %s848
        // Predicated region
        $region121: #{tpu_custom_call.1} parent=91 // pred_check
          %p850 = pneg %p270
        $region122: #{tpu_custom_call.1} parent=91 // pred_check_branch
          %852 = sbr.rel (%p850) target = $region124
        $region123: #{tpu_custom_call.1} parent=91 // pred_region
          %853 = dma.done %s847, 16
        $region124: #{tpu_custom_call.1} parent=91 // pred_fallthru
          _
        %s854 = sand.u32 %s39, 1
        %s855 = scalar_lea.sflag [#allocation4], %s854
        %s856 = sand.u32 %s283, 1
        %s857 = scalar_lea.vmem [#allocation15], %s856
        // Predicated region
        $region125: #{tpu_custom_call.1} parent=91 // pred_check
          %p858 = pneg %p296
        $region126: #{tpu_custom_call.1} parent=91 // pred_check_branch
          %860 = sbr.rel (%p858) target = $region128
        $region127: #{tpu_custom_call.1} parent=91 // pred_region
          %861 = dma.done %s855, 16
        $region128: #{tpu_custom_call.1} parent=91 // pred_fallthru
          _
        %s862 = sand.u32 %s39, 1
        %s863 = scalar_lea.sflag [#allocation7], %s862
        %s864 = sand.u32 %s309, 1
        %s865 = smul.addr %s864, 128
        %s866 = scalar_lea.vmem [#allocation16], %s865
        // Predicated region
        $region129: #{tpu_custom_call.1} parent=91 // pred_check
          %p867 = pneg %p322
        $region130: #{tpu_custom_call.1} parent=91 // pred_check_branch
          %869 = sbr.rel (%p867) target = $region132
        $region131: #{tpu_custom_call.1} parent=91 // pred_region
          %870 = dma.done %s863, 2048
        $region132: #{tpu_custom_call.1} parent=91 // pred_fallthru
          _
        %s871 = sand.u32 %s39, 1
        %s872 = scalar_lea.sflag [#allocation4], %s871
        %s873 = sand.u32 %s361, 1
        %s874 = smul.addr %s873, 128
        %s875 = scalar_lea.vmem [#allocation17], %s874
        // Predicated region
        $region133: #{tpu_custom_call.1} parent=91 // pred_check
          %p876 = pneg %p374
        $region134: #{tpu_custom_call.1} parent=91 // pred_check_branch
          %878 = sbr.rel (%p876) target = $region136
        $region135: #{tpu_custom_call.1} parent=91 // pred_region
          %879 = dma.done %s872, 2048
        $region136: #{tpu_custom_call.1} parent=91 // pred_fallthru
          _
        // Predicated region
        $region137: #{tpu_custom_call.1} parent=91 // pred_check
          %p880 = pneg %p473
        $region138: #{tpu_custom_call.1} parent=91 // pred_check_branch
          %882 = sbr.rel (%p880) target = $region140
        $region139: #{tpu_custom_call.1} parent=91 // pred_region
          %883 = dma.done [#allocation7], 2048
        $region140: #{tpu_custom_call.1} parent=91 // pred_fallthru
          _
        %s884 = sand.u32 %s39, 1
        %s885 = scalar_lea.sflag [#allocation4], %s884
        %s886 = sand.u32 %s59, 1
        %s887 = smul.addr %s886, 16
        %s888 = scalar_lea.vmem [#allocation3], %s887
        %p889 = pneg %p72
        %p890 = pneg %p69
        %s891 = sand.u32 %s39, 1
        %s892 = scalar_lea.sflag [#allocation7], %s891
        %s893 = sand.u32 %s85, 1
        %s894 = smul.addr %s893, 2
        %s895 = scalar_lea.vmem [#allocation6], %s894
        %p896 = pneg %p98
        %p897 = pneg %p95
        %p898 = pneg %p119
        %p899 = pneg %p116
        %p900 = pneg %p140
        %p901 = pneg %p137
        %s902 = sand.u32 %s39, 1
        %s903 = scalar_lea.sflag [#allocation4], %s902
        %s904 = sand.u32 %s153, 1
        %s905 = smul.addr %s904, 192
        %s906 = scalar_lea.vmem [#allocation11], %s905
        %p907 = pneg %p166
        %p908 = pneg %p163
        %p909 = scmp.lt.s32.totalorder %s44, 2
        %s910 = scalar_select %p909, %s44, 2
        %s911 = smul.addr %s910, 3
        %s912 = scalar_lea.vmem %s5, %s911
        %p913 = pneg %p192
        %p914 = pneg %p189
        %s915 = sand.u32 %s39, 1
        %s916 = scalar_lea.sflag [#allocation7], %s915
        %s917 = sand.u32 %s205, 1
        %s918 = smul.addr %s917, 64
        %s919 = scalar_lea.vmem [#allocation12], %s918
        %p920 = pneg %p218
        %p921 = pneg %p215
        %s922 = sand.u32 %s39, 1
        %s923 = scalar_lea.sflag [#allocation4], %s922
        %s924 = sand.u32 %s231, 1
        %s925 = scalar_lea.vmem [#allocation13], %s924
        %p926 = pneg %p244
        %p927 = pneg %p241
        %s928 = sand.u32 %s39, 1
        %s929 = scalar_lea.sflag [#allocation7], %s928
        %s930 = sand.u32 %s257, 1
        %s931 = scalar_lea.vmem [#allocation14], %s930
        %p932 = pneg %p270
        %p933 = pneg %p267
        %s934 = sand.u32 %s39, 1
        %s935 = scalar_lea.sflag [#allocation4], %s934
        %s936 = sand.u32 %s283, 1
        %s937 = scalar_lea.vmem [#allocation15], %s936
        %p938 = pneg %p296
        %p939 = pneg %p293
        %s940 = sand.u32 %s39, 1
        %s941 = scalar_lea.sflag [#allocation7], %s940
        %s942 = sand.u32 %s309, 1
        %s943 = smul.addr %s942, 128
        %s944 = scalar_lea.vmem [#allocation16], %s943
        %p945 = pneg %p322
        %p946 = pneg %p319
        %p947 = scmp.lt.s32.totalorder %s44, 2
        %s948 = scalar_select %p947, %s44, 2
        %s949 = smul.addr %s948, 2
        %s950 = scalar_lea.vmem %s11, %s949
        %p951 = pneg %p348
        %p952 = pneg %p345
        %s953 = sand.u32 %s39, 1
        %s954 = scalar_lea.sflag [#allocation4], %s953
        %s955 = sand.u32 %s361, 1
        %s956 = smul.addr %s955, 128
        %s957 = scalar_lea.vmem [#allocation17], %s956
        %p958 = pneg %p374
        %p959 = pneg %p371
        %p960 = scmp.lt.s32.totalorder %s44, 2
        %s961 = scalar_select %p960, %s44, 2
        %s962 = scalar_lea.vmem %s13, %s961
        %p963 = pneg %p400
        %p964 = pneg %p397
        %p965 = scmp.lt.s32.totalorder %s44, 2
        %s966 = scalar_select %p965, %s44, 2
        %s967 = scalar_lea.vmem %s14, %s966
        %p968 = pneg %p426
        %p969 = pneg %p423
        %p970 = scmp.lt.s32.totalorder %s44, 2
        %s971 = scalar_select %p970, %s44, 2
        %s972 = scalar_lea.vmem %s15, %s971
        %p973 = pneg %p452
        %p974 = pneg %p449
        %p975 = pneg %p473
        %p976 = pneg %p470
        %p977 = pneg %p494
        %p978 = pneg %p491
        %p979 = pneg %p520
        %p980 = pneg %p517
        %s981 = sand.u32 %s507, 1
        %s982 = scalar_lea.sflag [#allocation5], %s981
        %s983 = sand.u32 %s507, 1
        %s984 = smul.addr %s983, 2
        %s985 = scalar_lea.vmem [#allocation19], %s984
        %s986 = smul.u32 2, %s43
        %s987 = smul.u32 2, %s43
        %p988 = scmp.lt.s32.totalorder %s44, 2
        %s989 = scalar_select %p988, %s44, 2
        %s990 = smul.addr %s989, 3
        %s991 = scalar_lea.vmem %s5, %s990
        %p992 = scmp.lt.s32.totalorder %s44, 2
        %s993 = scalar_select %p992, %s44, 2
        %s994 = smul.addr %s993, 2
        %s995 = scalar_lea.vmem %s11, %s994
        %p996 = scmp.lt.s32.totalorder %s44, 2
        %s997 = scalar_select %p996, %s44, 2
        %s998 = scalar_lea.vmem %s13, %s997
        %p999 = scmp.lt.s32.totalorder %s44, 2
        %s1000 = scalar_select %p999, %s44, 2
        %s1001 = scalar_lea.vmem %s14, %s1000
        %p1002 = scmp.lt.s32.totalorder %s44, 2
        %s1003 = scalar_select %p1002, %s44, 2
        %s1004 = scalar_lea.vmem %s15, %s1003
        %s1005 = smul.u32 2, %s43
        %p1008 = scmp.eq.s32.totalorder %s44, 0
        // Predicated region
        $region141: #{tpu_custom_call.1} parent=91 // pred_check
          %p1009 = pneg %p1008
        $region142: #{tpu_custom_call.1} parent=91 // pred_check_branch
          %1011 = sbr.rel (%p1009) target = $region144
        $region143: #{tpu_custom_call.1} parent=91 // pred_region
          %v1012 = vld [vmem:[%s798] sm:$0xf]
          %v1013 = vld [vmem:[%s798 + $0x4] sm:$0xf]
          %v1014 = vld [vmem:[%s798 + $0x8] sm:$0xf]
          %v1015 = vld [vmem:[%s798 + $0xc] sm:$0xf]
          %v1016 = vunpack.c.l.bf16 %v1012
          %v1017 = vunpack.c.l.bf16 %v1013
          %v1018 = vunpack.c.l.bf16 %v1014
          %v1019 = vunpack.c.l.bf16 %v1015
          %v1020 = vld [vmem:[#allocation8] sm:$0x1]
          %v1021 = vld [vmem:[#allocation9] sm:$0x1]
          %1022 = vadd.xlane.f32.xlu0 %v1016
          %v1023 = vpop.xlane.xlu0 %1022
          %1024 = vadd.xlane.f32.xlu0 %v1017
          %v1025 = vpop.xlane.xlu0 %1024
          %1026 = vadd.xlane.f32.xlu0 %v1018
          %v1027 = vpop.xlane.xlu0 %1026
          %1028 = vadd.xlane.f32.xlu0 %v1019
          %v1029 = vpop.xlane.xlu0 %1028
          %v1030 = vrcp.pop 128.0
          %v1031 = vmul.f32 %v1023, %v1030
          %v1032 = vmul.f32 %v1025, %v1030
          %v1033 = vmul.f32 %v1027, %v1030
          %v1034 = vmul.f32 %v1029, %v1030
          %v1035 = vsub.f32 %v1016, %v1031
          %v1036 = vsub.f32 %v1017, %v1032
          %v1037 = vsub.f32 %v1018, %v1033
          %v1038 = vsub.f32 %v1019, %v1034
          %v1039 = vmul.f32 %v1035, %v1035
          %v1040 = vmul.f32 %v1036, %v1036
          %v1041 = vmul.f32 %v1037, %v1037
          %v1042 = vmul.f32 %v1038, %v1038
          %1043 = vadd.xlane.f32.xlu0 %v1039
          %v1044 = vpop.xlane.xlu0 %1043
          %1045 = vadd.xlane.f32.xlu0 %v1040
          %v1046 = vpop.xlane.xlu0 %1045
          %1047 = vadd.xlane.f32.xlu0 %v1041
          %v1048 = vpop.xlane.xlu0 %1047
          %1049 = vadd.xlane.f32.xlu0 %v1042
          %v1050 = vpop.xlane.xlu0 %1049
          %v1051 = vmul.f32 %v1044, %v1030
          %v1052 = vmul.f32 %v1046, %v1030
          %v1053 = vmul.f32 %v1048, %v1030
          %v1054 = vmul.f32 %v1050, %v1030
          %v1055 = vadd.f32 %v1051, 1e-12
          %v1056 = vadd.f32 %v1052, 1e-12
          %v1057 = vadd.f32 %v1053, 1e-12
          %v1058 = vadd.f32 %v1054, 1e-12
          %v1059 = vrsqrt.pop %v1055
          %v1060 = vrsqrt.pop %v1056
          %v1061 = vrsqrt.pop %v1057
          %v1062 = vrsqrt.pop %v1058
          %v1063 = vmul.f32 %v1035, %v1059
          %v1064 = vmul.f32 %v1036, %v1060
          %v1065 = vmul.f32 %v1037, %v1061
          %v1066 = vmul.f32 %v1038, %v1062
          %v1068 = vlaneseq
          %v1069 = vshrl.u32 %v1068, 7
          %v1070 = vsub.s32 0, %v1069
          %v1071 = vrot.slane %v1020, %v1070
          %v1073 = vmul.f32 %v1071, %v1063
          %v1074 = vmul.f32 %v1071, %v1064
          %v1075 = vmul.f32 %v1071, %v1065
          %v1076 = vmul.f32 %v1071, %v1066
          %v1078 = vlaneseq
          %v1079 = vshrl.u32 %v1078, 7
          %v1080 = vsub.s32 0, %v1079
          %v1081 = vrot.slane %v1021, %v1080
          %v1083 = vadd.f32 %v1073, %v1081
          %v1084 = vadd.f32 %v1074, %v1081
          %v1085 = vadd.f32 %v1075, %v1081
          %v1086 = vadd.f32 %v1076, %v1081
          %1087 = vst [vmem:[#allocation2] sm:$0xff] %v1083
          %1088 = vst [vmem:[#allocation2 + $0x8] sm:$0xff] %v1084
          %1089 = vst [vmem:[#allocation2 + $0x10] sm:$0xff] %v1085
          %1090 = vst [vmem:[#allocation2 + $0x18] sm:$0xff] %v1086
        $region144: #{tpu_custom_call.1} parent=91 // pred_fallthru
          _
        %v1091 = vld [vmem:[#allocation2] sm:$0xff]
        %v1092 = vld [vmem:[#allocation2 + $0x8] sm:$0xff]
        %v1093 = vld [vmem:[#allocation2 + $0x10] sm:$0xff]
        %v1094 = vld [vmem:[#allocation2 + $0x18] sm:$0xff]
        %v1095 = vpack.c.bf16 %v1092, %v1091
        %v1096 = vpack.c.bf16 %v1094, %v1093
        %v1097 = vld [vmem:[%s824] sm:$0xff]
        %v1098 = vld [vmem:[%s824 + $0x8] sm:$0xf]
        %v1099 = vld [vmem:[%s824 + $0xc] sm:$0xff]
        %v1100 = vld [vmem:[%s824 + $0x14] sm:$0xf]
        %v1101 = vld [vmem:[%s824 + $0x18] sm:$0xff]
        %v1102 = vld [vmem:[%s824 + $0x20] sm:$0xf]
        %v1103 = vld [vmem:[%s824 + $0x24] sm:$0xff]
        %v1104 = vld [vmem:[%s824 + $0x2c] sm:$0xf]
        %v1105 = vld [vmem:[%s824 + $0x30] sm:$0xff]
        %v1106 = vld [vmem:[%s824 + $0x38] sm:$0xf]
        %v1107 = vld [vmem:[%s824 + $0x3c] sm:$0xff]
        %v1108 = vld [vmem:[%s824 + $0x44] sm:$0xf]
        %v1109 = vld [vmem:[%s824 + $0x48] sm:$0xff]
        %v1110 = vld [vmem:[%s824 + $0x50] sm:$0xf]
        %v1111 = vld [vmem:[%s824 + $0x54] sm:$0xff]
        %v1112 = vld [vmem:[%s824 + $0x5c] sm:$0xf]
        %v1113 = vld [vmem:[%s824 + $0x60] sm:$0xff]
        %v1114 = vld [vmem:[%s824 + $0x68] sm:$0xf]
        %v1115 = vld [vmem:[%s824 + $0x6c] sm:$0xff]
        %v1116 = vld [vmem:[%s824 + $0x74] sm:$0xf]
        %v1117 = vld [vmem:[%s824 + $0x78] sm:$0xff]
        %v1118 = vld [vmem:[%s824 + $0x80] sm:$0xf]
        %v1119 = vld [vmem:[%s824 + $0x84] sm:$0xff]
        %v1120 = vld [vmem:[%s824 + $0x8c] sm:$0xf]
        %v1121 = vld [vmem:[%s824 + $0x90] sm:$0xff]
        %v1122 = vld [vmem:[%s824 + $0x98] sm:$0xf]
        %v1123 = vld [vmem:[%s824 + $0x9c] sm:$0xff]
        %v1124 = vld [vmem:[%s824 + $0xa4] sm:$0xf]
        %v1125 = vld [vmem:[%s824 + $0xa8] sm:$0xff]
        %v1126 = vld [vmem:[%s824 + $0xb0] sm:$0xf]
        %v1127 = vld [vmem:[%s824 + $0xb4] sm:$0xff]
        %v1128 = vld [vmem:[%s824 + $0xbc] sm:$0xf]
        %v1129 = vld [vmem:[%s991] sm:$0x7]
        %v1131 = vlaneseq
        %v1132 = vshrl.u32 %v1131, 7
        %v1133 = vsub.s32 0, %v1132
        %v1134 = vrot.slane %v1129, %v1133
        %v1135 = vlaneseq
        %v1136 = vshrl.u32 %v1135, 7
        %v1137 = vsub.s32 1, %v1136
        %v1138 = vrot.slane %v1129, %v1137
        %v1139 = vlaneseq
        %v1140 = vshrl.u32 %v1139, 7
        %v1141 = vsub.s32 2, %v1140
        %v1142 = vrot.slane %v1129, %v1141
        %v1178 = vunpack.c.l.b16 %v1097
        %v1179 = vunpack.c.h.b16 %v1097
        %v1180 = vunpack.c.l.b16 %v1098
        %v1181 = vunpack.c.l.b16 %v1099
        %v1182 = vunpack.c.h.b16 %v1099
        %v1183 = vunpack.c.l.b16 %v1100
        %v1184 = vunpack.c.l.b16 %v1101
        %v1185 = vunpack.c.h.b16 %v1101
        %v1186 = vunpack.c.l.b16 %v1102
        %v1187 = vunpack.c.l.b16 %v1103
        %v1188 = vunpack.c.h.b16 %v1103
        %v1189 = vunpack.c.l.b16 %v1104
        %v1190 = vunpack.c.l.b16 %v1105
        %v1191 = vunpack.c.h.b16 %v1105
        %v1192 = vunpack.c.l.b16 %v1106
        %v1193 = vunpack.c.l.b16 %v1107
        %v1194 = vunpack.c.h.b16 %v1107
        %v1195 = vunpack.c.l.b16 %v1108
        %v1196 = vunpack.c.l.b16 %v1109
        %v1197 = vunpack.c.h.b16 %v1109
        %v1198 = vunpack.c.l.b16 %v1110
        %v1199 = vunpack.c.l.b16 %v1111
        %v1200 = vunpack.c.h.b16 %v1111
        %v1201 = vunpack.c.l.b16 %v1112
        %v1202 = vunpack.c.l.b16 %v1113
        %v1203 = vunpack.c.h.b16 %v1113
        %v1204 = vunpack.c.l.b16 %v1114
        %v1205 = vunpack.c.l.b16 %v1115
        %v1206 = vunpack.c.h.b16 %v1115
        %v1207 = vunpack.c.l.b16 %v1116
        %v1208 = vunpack.c.l.b16 %v1117
        %v1209 = vunpack.c.h.b16 %v1117
        %v1210 = vunpack.c.l.b16 %v1118
        %v1211 = vunpack.c.l.b16 %v1119
        %v1212 = vunpack.c.h.b16 %v1119
        %v1213 = vunpack.c.l.b16 %v1120
        %v1214 = vunpack.c.l.b16 %v1121
        %v1215 = vunpack.c.h.b16 %v1121
        %v1216 = vunpack.c.l.b16 %v1122
        %v1217 = vunpack.c.l.b16 %v1123
        %v1218 = vunpack.c.h.b16 %v1123
        %v1219 = vunpack.c.l.b16 %v1124
        %v1220 = vunpack.c.l.b16 %v1125
        %v1221 = vunpack.c.h.b16 %v1125
        %v1222 = vunpack.c.l.b16 %v1126
        %v1223 = vunpack.c.l.b16 %v1127
        %v1224 = vunpack.c.h.b16 %v1127
        %v1225 = vunpack.c.l.b16 %v1128
        %v1226 = vpack.c.b16 %v1181, %v1178
        %v1227 = vpack.c.b16 %v1182, %v1179
        %v1228 = vpack.c.b16 %v1183, %v1180
        %v1229 = vpack.c.b16 %v1187, %v1184
        %v1230 = vpack.c.b16 %v1188, %v1185
        %v1231 = vpack.c.b16 %v1189, %v1186
        %v1232 = vpack.c.b16 %v1193, %v1190
        %v1233 = vpack.c.b16 %v1194, %v1191
        %v1234 = vpack.c.b16 %v1195, %v1192
        %v1235 = vpack.c.b16 %v1199, %v1196
        %v1236 = vpack.c.b16 %v1200, %v1197
        %v1237 = vpack.c.b16 %v1201, %v1198
        %v1238 = vpack.c.b16 %v1205, %v1202
        %v1239 = vpack.c.b16 %v1206, %v1203
        %v1240 = vpack.c.b16 %v1207, %v1204
        %v1241 = vpack.c.b16 %v1211, %v1208
        %v1242 = vpack.c.b16 %v1212, %v1209
        %v1243 = vpack.c.b16 %v1213, %v1210
        %v1244 = vpack.c.b16 %v1217, %v1214
        %v1245 = vpack.c.b16 %v1218, %v1215
        %v1246 = vpack.c.b16 %v1219, %v1216
        %v1247 = vpack.c.b16 %v1223, %v1220
        %v1248 = vpack.c.b16 %v1224, %v1221
        %v1249 = vpack.c.b16 %v1225, %v1222
        %1274 = vmatprep.subr.bf16.mxu0 %v1248
        %1275 = vmatpush1.bf16.msra.mxu0 %v1247
        %1276 = vmatprep.subr.bf16.mxu0 %v1245
        %1277 = vmatpush1.bf16.msra.mxu0 %v1244
        %1278 = vmatprep.subr.bf16.mxu0 %v1242
        %1279 = vmatpush1.bf16.msra.mxu0 %v1241
        %1280 = vmatprep.subr.bf16.mxu0 %v1239
        %1281 = vmatpush1.bf16.msra.mxu0 %v1238
        %1282 = vmatprep.subr.bf16.mxu0 %v1236
        %1283 = vmatpush1.bf16.msra.mxu0 %v1235
        %1284 = vmatprep.subr.bf16.mxu0 %v1233
        %1285 = vmatpush1.bf16.msra.mxu0 %v1232
        %1286 = vmatprep.subr.bf16.mxu0 %v1230
        %1287 = vmatpush1.bf16.msra.mxu0 %v1229
        %1288 = vmatprep.subr.bf16.mxu0 %v1227
        %1289 = vmatpush1.bf16.msra.mxu0 %v1226
        %1290 = vmatprep.subr.bf16.mxu0 0
        %1291 = vmatpush2.bf16.msra.mxu0 0
        %1292 = vmatprep.subr.bf16.mxu0 0
        %1293 = vmatpush2.bf16.msra.mxu0 0
        %1294 = vmatprep.subr.bf16.mxu0 0
        %1295 = vmatpush2.bf16.msra.mxu0 0
        %1296 = vmatprep.subr.bf16.mxu0 0
        %1297 = vmatpush2.bf16.msra.mxu0 0
        %1298 = vmatprep.subr.bf16.mxu0 0
        %1299 = vmatpush2.bf16.msra.mxu0 0
        %1300 = vmatprep.subr.bf16.mxu0 0
        %1301 = vmatpush2.bf16.msra.mxu0 0
        %1302 = vmatprep.subr.bf16.mxu0 0
        %1303 = vmatpush2.bf16.msra.mxu0 0
        %1304 = vmatprep.subr.bf16.mxu0 0
        %1305 = vmatpush2.bf16.msra.mxu0 0
        %1306 = vmatprep.mubr.bf16.mxu0 0
        %1307 = vmatmul.mubr.bf16.gmra.mxu0 %v1095
        %v1308 = vpop.f32.mrf.mxu0
        %v1309 = vadd.f32 %v1134, %v1308
        %v1310 = vpop.f32.mrf.mxu0
        %v1311 = vadd.f32 %v1138, %v1310
        %v1312 = vpop.f32.mrf.mxu0
        %v1313 = vadd.f32 %v1134, %v1312
        %v1314 = vpop.f32.mrf.mxu0
        %v1315 = vadd.f32 %v1138, %v1314
        %1316 = vmatprep.mubr.bf16.mxu0 0
        %1317 = vmatmul.mubr.bf16.gmra.mxu0 %v1096
        %v1318 = vpop.f32.mrf.mxu0
        %v1319 = vadd.f32 %v1134, %v1318
        %v1320 = vpop.f32.mrf.mxu0
        %v1321 = vadd.f32 %v1138, %v1320
        %v1322 = vpop.f32.mrf.mxu0
        %v1323 = vadd.f32 %v1134, %v1322
        %v1324 = vpop.f32.mrf.mxu0
        %v1325 = vadd.f32 %v1138, %v1324
        %1326 = vdwg.mxu0
        %1327 = vmatprep.subr.bf16.mxu0 0
        %1328 = vmatpush1.bf16.msra.mxu0 %v1249
        %1329 = vmatprep.subr.bf16.mxu0 0
        %1330 = vmatpush1.bf16.msra.mxu0 %v1246
        %1331 = vmatprep.subr.bf16.mxu0 0
        %1332 = vmatpush1.bf16.msra.mxu0 %v1243
        %1333 = vmatprep.subr.bf16.mxu0 0
        %1334 = vmatpush1.bf16.msra.mxu0 %v1240
        %1335 = vmatprep.subr.bf16.mxu0 0
        %1336 = vmatpush1.bf16.msra.mxu0 %v1237
        %1337 = vmatprep.subr.bf16.mxu0 0
        %1338 = vmatpush1.bf16.msra.mxu0 %v1234
        %1339 = vmatprep.subr.bf16.mxu0 0
        %1340 = vmatpush1.bf16.msra.mxu0 %v1231
        %1341 = vmatprep.subr.bf16.mxu0 0
        %1342 = vmatpush1.bf16.msra.mxu0 %v1228
        %1343 = vmatprep.subr.bf16.mxu0 0
        %1344 = vmatpush2.bf16.msra.mxu0 0
        %1345 = vmatprep.subr.bf16.mxu0 0
        %1346 = vmatpush2.bf16.msra.mxu0 0
        %1347 = vmatprep.subr.bf16.mxu0 0
        %1348 = vmatpush2.bf16.msra.mxu0 0
        %1349 = vmatprep.subr.bf16.mxu0 0
        %1350 = vmatpush2.bf16.msra.mxu0 0
        %1351 = vmatprep.subr.bf16.mxu0 0
        %1352 = vmatpush2.bf16.msra.mxu0 0
        %1353 = vmatprep.subr.bf16.mxu0 0
        %1354 = vmatpush2.bf16.msra.mxu0 0
        %1355 = vmatprep.subr.bf16.mxu0 0
        %1356 = vmatpush2.bf16.msra.mxu0 0
        %1357 = vmatprep.subr.bf16.mxu0 0
        %1358 = vmatpush2.bf16.msra.mxu0 0
        %1359 = vmatprep.mubr.bf16.mxu0 0
        %1360 = vmatmul.mubr.bf16.gmra.mxu0 %v1095
        %v1361 = vpop.f32.mrf.mxu0
        %v1362 = vadd.f32 %v1142, %v1361
        %v1363 = vpop.f32.mrf.mxu0
        %v1364 = vpop.f32.mrf.mxu0
        %v1365 = vadd.f32 %v1142, %v1364
        %v1366 = vpop.f32.mrf.mxu0
        %1367 = vmatprep.mubr.bf16.mxu0 0
        %1368 = vmatmul.mubr.bf16.gmra.mxu0 %v1096
        %v1369 = vpop.f32.mrf.mxu0
        %v1370 = vadd.f32 %v1142, %v1369
        %v1371 = vpop.f32.mrf.mxu0
        %v1372 = vpop.f32.mrf.mxu0
        %v1373 = vadd.f32 %v1142, %v1372
        %v1374 = vpop.f32.mrf.mxu0
        %1375 = vdwg.mxu0
        %v1376 = vpack.c.bf16 %v1313, %v1309
        %v1377 = vpack.c.bf16 %v1315, %v1311
        %v1378 = vpack.c.bf16 %v1365, %v1362
        %v1379 = vpack.c.bf16 %v1323, %v1319
        %v1380 = vpack.c.bf16 %v1325, %v1321
        %v1381 = vpack.c.bf16 %v1373, %v1370
        %1384 = vrot.lane.b32.xlu0 %v1376, 96
        %v1385 = vpop.permute.xlu0 %1384
        %1386 = vrot.lane.b32.xlu0 %v1379, 96
        %v1387 = vpop.permute.xlu0 %1386
        %1390 = vrot.lane.b32.xlu0 %v1376, 64
        %v1391 = vpop.permute.xlu0 %1390
        %1392 = vrot.lane.b32.xlu0 %v1379, 64
        %v1393 = vpop.permute.xlu0 %1392
        %1396 = vrot.lane.b32.xlu0 %v1376, 32
        %v1397 = vpop.permute.xlu0 %1396
        %1398 = vrot.lane.b32.xlu0 %v1379, 32
        %v1399 = vpop.permute.xlu0 %1398
        %v1402 = vmul.bf16 %v1376, 1043676725
        %v1403 = vmul.bf16 %v1379, 1043676725
        %v1404 = vmul.bf16 %v1385, 1043676725
        %v1405 = vmul.bf16 %v1387, 1043676725
        %v1406 = vmul.bf16 %v1391, 1043676725
        %v1407 = vmul.bf16 %v1393, 1043676725
        %v1408 = vmul.bf16 %v1397, 1043676725
        %v1409 = vmul.bf16 %v1399, 1043676725
        %1412 = vrot.lane.b32.xlu0 %v1377, 96
        %v1413 = vpop.permute.xlu0 %1412
        %1414 = vrot.lane.b32.xlu0 %v1380, 96
        %v1415 = vpop.permute.xlu0 %1414
        %1416 = vrot.lane.b32.xlu0 %v1377, 64
        %v1417 = vpop.permute.xlu0 %1416
        %1418 = vrot.lane.b32.xlu0 %v1380, 64
        %v1419 = vpop.permute.xlu0 %1418
        %1420 = vrot.lane.b32.xlu0 %v1377, 32
        %v1421 = vpop.permute.xlu0 %1420
        %1422 = vrot.lane.b32.xlu0 %v1380, 32
        %v1423 = vpop.permute.xlu0 %1422
        %1426 = vrot.lane.b32.xlu0 %v1378, 96
        %v1427 = vpop.permute.xlu0 %1426
        %1428 = vrot.lane.b32.xlu0 %v1381, 96
        %v1429 = vpop.permute.xlu0 %1428
        %1432 = vrot.lane.b32.xlu0 %v1378, 64
        %v1433 = vpop.permute.xlu0 %1432
        %1434 = vrot.lane.b32.xlu0 %v1381, 64
        %v1435 = vpop.permute.xlu0 %1434
        %1438 = vrot.lane.b32.xlu0 %v1378, 32
        %v1439 = vpop.permute.xlu0 %1438
        %1440 = vrot.lane.b32.xlu0 %v1381, 32
        %v1441 = vpop.permute.xlu0 %1440
        %vm1444 = vcmask 261120
        %v1446 = vsel %vm1444, %v1402, 0
        %v1449 = vsel %vm1444, %v1377, 0
        %1451 = vmatprep.subr.bf16.mxu0 0
        %1452 = vmatpush1.bf16.xpose.msra.mxu0 0
        %1453 = vmatprep.subr.bf16.mxu0 0
        %1454 = vmatpush1.bf16.xpose.msra.mxu0 0
        %1455 = vmatprep.subr.bf16.mxu0 0
        %1456 = vmatpush1.bf16.xpose.msra.mxu0 0
        %1457 = vmatprep.subr.bf16.mxu0 0
        %1458 = vmatpush1.bf16.xpose.msra.mxu0 0
        %1459 = vmatprep.subr.bf16.mxu0 0
        %1460 = vmatpush1.bf16.xpose.msra.mxu0 0
        %1461 = vmatprep.subr.bf16.mxu0 0
        %1462 = vmatpush1.bf16.xpose.msra.mxu0 0
        %1463 = vmatprep.subr.bf16.mxu0 0
        %1464 = vmatpush1.bf16.xpose.msra.mxu0 0
        %1465 = vmatprep.subr.bf16.mxu0 0
        %1466 = vmatpush1.bf16.xpose.msra.mxu0 %v1449
        %1467 = vmatprep.subr.bf16.mxu0 0
        %1468 = vmatpush2.bf16.xpose.msra.mxu0 0
        %1469 = vmatprep.subr.bf16.mxu0 0
        %1470 = vmatpush2.bf16.xpose.msra.mxu0 0
        %1471 = vmatprep.subr.bf16.mxu0 0
        %1472 = vmatpush2.bf16.xpose.msra.mxu0 0
        %1473 = vmatprep.subr.bf16.mxu0 0
        %1474 = vmatpush2.bf16.xpose.msra.mxu0 0
        %1475 = vmatprep.subr.bf16.mxu0 0
        %1476 = vmatpush2.bf16.xpose.msra.mxu0 0
        %1477 = vmatprep.subr.bf16.mxu0 0
        %1478 = vmatpush2.bf16.xpose.msra.mxu0 0
        %1479 = vmatprep.subr.bf16.mxu0 0
        %1480 = vmatpush2.bf16.xpose.msra.mxu0 0
        %1481 = vmatprep.subr.bf16.mxu0 0
        %1482 = vmatpush2.bf16.xpose.msra.mxu0 0
        %1483 = vmatprep.mubr.bf16.mxu0 0
        %1484 = vmatmul.mubr.bf16.gmra.mxu0 %v1446
        %v1485 = vpop.f32.mrf.mxu0
        %v1486 = vadd.f32 0.0, %v1485
        %v1487 = vpop.f32.mrf.mxu0
        %v1488 = vpop.f32.mrf.mxu0
        %v1489 = vadd.f32 0.0, %v1488
        %v1490 = vpop.f32.mrf.mxu0
        %1491 = vdwg.mxu0
        %v1493 = vsel %vm1444, %v1403, 0
        %v1496 = vsel %vm1444, %v1380, 0
        %1498 = vmatprep.subr.bf16.mxu0 0
        %1499 = vmatpush1.bf16.xpose.msra.mxu0 0
        %1500 = vmatprep.subr.bf16.mxu0 0
        %1501 = vmatpush1.bf16.xpose.msra.mxu0 0
        %1502 = vmatprep.subr.bf16.mxu0 0
        %1503 = vmatpush1.bf16.xpose.msra.mxu0 0
        %1504 = vmatprep.subr.bf16.mxu0 0
        %1505 = vmatpush1.bf16.xpose.msra.mxu0 0
        %1506 = vmatprep.subr.bf16.mxu0 0
        %1507 = vmatpush1.bf16.xpose.msra.mxu0 0
        %1508 = vmatprep.subr.bf16.mxu0 0
        %1509 = vmatpush1.bf16.xpose.msra.mxu0 0
        %1510 = vmatprep.subr.bf16.mxu0 0
        %1511 = vmatpush1.bf16.xpose.msra.mxu0 0
        %1512 = vmatprep.subr.bf16.mxu0 0
        %1513 = vmatpush1.bf16.xpose.msra.mxu0 %v1496
        %1514 = vmatprep.subr.bf16.mxu0 0
        %1515 = vmatpush2.bf16.xpose.msra.mxu0 0
        %1516 = vmatprep.subr.bf16.mxu0 0
        %1517 = vmatpush2.bf16.xpose.msra.mxu0 0
        %1518 = vmatprep.subr.bf16.mxu0 0
        %1519 = vmatpush2.bf16.xpose.msra.mxu0 0
        %1520 = vmatprep.subr.bf16.mxu0 0
        %1521 = vmatpush2.bf16.xpose.msra.mxu0 0
        %1522 = vmatprep.subr.bf16.mxu0 0
        %1523 = vmatpush2.bf16.xpose.msra.mxu0 0
        %1524 = vmatprep.subr.bf16.mxu0 0
        %1525 = vmatpush2.bf16.xpose.msra.mxu0 0
        %1526 = vmatprep.subr.bf16.mxu0 0
        %1527 = vmatpush2.bf16.xpose.msra.mxu0 0
        %1528 = vmatprep.subr.bf16.mxu0 0
        %1529 = vmatpush2.bf16.xpose.msra.mxu0 0
        %1530 = vmatprep.mubr.bf16.mxu0 0
        %1531 = vmatmul.mubr.bf16.gmra.mxu0 %v1493
        %v1532 = vpop.f32.mrf.mxu0
        %v1533 = vadd.f32 0.0, %v1532
        %v1534 = vpop.f32.mrf.mxu0
        %v1535 = vpop.f32.mrf.mxu0
        %v1536 = vadd.f32 0.0, %v1535
        %v1537 = vpop.f32.mrf.mxu0
        %1538 = vdwg.mxu0
        %v1540 = vsel %vm1444, %v1404, 0
        %v1543 = vsel %vm1444, %v1413, 0
        %1545 = vmatprep.subr.bf16.mxu0 0
        %1546 = vmatpush1.bf16.xpose.msra.mxu0 0
        %1547 = vmatprep.subr.bf16.mxu0 0
        %1548 = vmatpush1.bf16.xpose.msra.mxu0 0
        %1549 = vmatprep.subr.bf16.mxu0 0
        %1550 = vmatpush1.bf16.xpose.msra.mxu0 0
        %1551 = vmatprep.subr.bf16.mxu0 0
        %1552 = vmatpush1.bf16.xpose.msra.mxu0 0
        %1553 = vmatprep.subr.bf16.mxu0 0
        %1554 = vmatpush1.bf16.xpose.msra.mxu0 0
        %1555 = vmatprep.subr.bf16.mxu0 0
        %1556 = vmatpush1.bf16.xpose.msra.mxu0 0
        %1557 = vmatprep.subr.bf16.mxu0 0
        %1558 = vmatpush1.bf16.xpose.msra.mxu0 0
        %1559 = vmatprep.subr.bf16.mxu0 0
        %1560 = vmatpush1.bf16.xpose.msra.mxu0 %v1543
        %1561 = vmatprep.subr.bf16.mxu0 0
        %1562 = vmatpush2.bf16.xpose.msra.mxu0 0
        %1563 = vmatprep.subr.bf16.mxu0 0
        %1564 = vmatpush2.bf16.xpose.msra.mxu0 0
        %1565 = vmatprep.subr.bf16.mxu0 0
        %1566 = vmatpush2.bf16.xpose.msra.mxu0 0
        %1567 = vmatprep.subr.bf16.mxu0 0
        %1568 = vmatpush2.bf16.xpose.msra.mxu0 0
        %1569 = vmatprep.subr.bf16.mxu0 0
        %1570 = vmatpush2.bf16.xpose.msra.mxu0 0
        %1571 = vmatprep.subr.bf16.mxu0 0
        %1572 = vmatpush2.bf16.xpose.msra.mxu0 0
        %1573 = vmatprep.subr.bf16.mxu0 0
        %1574 = vmatpush2.bf16.xpose.msra.mxu0 0
        %1575 = vmatprep.subr.bf16.mxu0 0
        %1576 = vmatpush2.bf16.xpose.msra.mxu0 0
        %1577 = vmatprep.mubr.bf16.mxu0 0
        %1578 = vmatmul.mubr.bf16.gmra.mxu0 %v1540
        %v1579 = vpop.f32.mrf.mxu0
        %v1580 = vadd.f32 0.0, %v1579
        %v1581 = vpop.f32.mrf.mxu0
        %v1582 = vpop.f32.mrf.mxu0
        %v1583 = vadd.f32 0.0, %v1582
        %v1584 = vpop.f32.mrf.mxu0
        %1585 = vdwg.mxu0
        %v1587 = vsel %vm1444, %v1405, 0
        %v1590 = vsel %vm1444, %v1415, 0
        %1592 = vmatprep.subr.bf16.mxu0 0
        %1593 = vmatpush1.bf16.xpose.msra.mxu0 0
        %1594 = vmatprep.subr.bf16.mxu0 0
        %1595 = vmatpush1.bf16.xpose.msra.mxu0 0
        %1596 = vmatprep.subr.bf16.mxu0 0
        %1597 = vmatpush1.bf16.xpose.msra.mxu0 0
        %1598 = vmatprep.subr.bf16.mxu0 0
        %1599 = vmatpush1.bf16.xpose.msra.mxu0 0
        %1600 = vmatprep.subr.bf16.mxu0 0
        %1601 = vmatpush1.bf16.xpose.msra.mxu0 0
        %1602 = vmatprep.subr.bf16.mxu0 0
        %1603 = vmatpush1.bf16.xpose.msra.mxu0 0
        %1604 = vmatprep.subr.bf16.mxu0 0
        %1605 = vmatpush1.bf16.xpose.msra.mxu0 0
        %1606 = vmatprep.subr.bf16.mxu0 0
        %1607 = vmatpush1.bf16.xpose.msra.mxu0 %v1590
        %1608 = vmatprep.subr.bf16.mxu0 0
        %1609 = vmatpush2.bf16.xpose.msra.mxu0 0
        %1610 = vmatprep.subr.bf16.mxu0 0
        %1611 = vmatpush2.bf16.xpose.msra.mxu0 0
        %1612 = vmatprep.subr.bf16.mxu0 0
        %1613 = vmatpush2.bf16.xpose.msra.mxu0 0
        %1614 = vmatprep.subr.bf16.mxu0 0
        %1615 = vmatpush2.bf16.xpose.msra.mxu0 0
        %1616 = vmatprep.subr.bf16.mxu0 0
        %1617 = vmatpush2.bf16.xpose.msra.mxu0 0
        %1618 = vmatprep.subr.bf16.mxu0 0
        %1619 = vmatpush2.bf16.xpose.msra.mxu0 0
        %1620 = vmatprep.subr.bf16.mxu0 0
        %1621 = vmatpush2.bf16.xpose.msra.mxu0 0
        %1622 = vmatprep.subr.bf16.mxu0 0
        %1623 = vmatpush2.bf16.xpose.msra.mxu0 0
        %1624 = vmatprep.mubr.bf16.mxu0 0
        %1625 = vmatmul.mubr.bf16.gmra.mxu0 %v1587
        %v1626 = vpop.f32.mrf.mxu0
        %v1627 = vadd.f32 0.0, %v1626
        %v1628 = vpop.f32.mrf.mxu0
        %v1629 = vpop.f32.mrf.mxu0
        %v1630 = vadd.f32 0.0, %v1629
        %v1631 = vpop.f32.mrf.mxu0
        %1632 = vdwg.mxu0
        %v1634 = vsel %vm1444, %v1406, 0
        %v1637 = vsel %vm1444, %v1417, 0
        %1639 = vmatprep.subr.bf16.mxu0 0
        %1640 = vmatpush1.bf16.xpose.msra.mxu0 0
        %1641 = vmatprep.subr.bf16.mxu0 0
        %1642 = vmatpush1.bf16.xpose.msra.mxu0 0
        %1643 = vmatprep.subr.bf16.mxu0 0
        %1644 = vmatpush1.bf16.xpose.msra.mxu0 0
        %1645 = vmatprep.subr.bf16.mxu0 0
        %1646 = vmatpush1.bf16.xpose.msra.mxu0 0
        %1647 = vmatprep.subr.bf16.mxu0 0
        %1648 = vmatpush1.bf16.xpose.msra.mxu0 0
        %1649 = vmatprep.subr.bf16.mxu0 0
        %1650 = vmatpush1.bf16.xpose.msra.mxu0 0
        %1651 = vmatprep.subr.bf16.mxu0 0
        %1652 = vmatpush1.bf16.xpose.msra.mxu0 0
        %1653 = vmatprep.subr.bf16.mxu0 0
        %1654 = vmatpush1.bf16.xpose.msra.mxu0 %v1637
        %1655 = vmatprep.subr.bf16.mxu0 0
        %1656 = vmatpush2.bf16.xpose.msra.mxu0 0
        %1657 = vmatprep.subr.bf16.mxu0 0
        %1658 = vmatpush2.bf16.xpose.msra.mxu0 0
        %1659 = vmatprep.subr.bf16.mxu0 0
        %1660 = vmatpush2.bf16.xpose.msra.mxu0 0
        %1661 = vmatprep.subr.bf16.mxu0 0
        %1662 = vmatpush2.bf16.xpose.msra.mxu0 0
        %1663 = vmatprep.subr.bf16.mxu0 0
        %1664 = vmatpush2.bf16.xpose.msra.mxu0 0
        %1665 = vmatprep.subr.bf16.mxu0 0
        %1666 = vmatpush2.bf16.xpose.msra.mxu0 0
        %1667 = vmatprep.subr.bf16.mxu0 0
        %1668 = vmatpush2.bf16.xpose.msra.mxu0 0
        %1669 = vmatprep.subr.bf16.mxu0 0
        %1670 = vmatpush2.bf16.xpose.msra.mxu0 0
        %1671 = vmatprep.mubr.bf16.mxu0 0
        %1672 = vmatmul.mubr.bf16.gmra.mxu0 %v1634
        %v1673 = vpop.f32.mrf.mxu0
        %v1674 = vadd.f32 0.0, %v1673
        %v1675 = vpop.f32.mrf.mxu0
        %v1676 = vpop.f32.mrf.mxu0
        %v1677 = vadd.f32 0.0, %v1676
        %v1678 = vpop.f32.mrf.mxu0
        %1679 = vdwg.mxu0
        %v1681 = vsel %vm1444, %v1407, 0
        %v1684 = vsel %vm1444, %v1419, 0
        %1686 = vmatprep.subr.bf16.mxu0 0
        %1687 = vmatpush1.bf16.xpose.msra.mxu0 0
        %1688 = vmatprep.subr.bf16.mxu0 0
        %1689 = vmatpush1.bf16.xpose.msra.mxu0 0
        %1690 = vmatprep.subr.bf16.mxu0 0
        %1691 = vmatpush1.bf16.xpose.msra.mxu0 0
        %1692 = vmatprep.subr.bf16.mxu0 0
        %1693 = vmatpush1.bf16.xpose.msra.mxu0 0
        %1694 = vmatprep.subr.bf16.mxu0 0
        %1695 = vmatpush1.bf16.xpose.msra.mxu0 0
        %1696 = vmatprep.subr.bf16.mxu0 0
        %1697 = vmatpush1.bf16.xpose.msra.mxu0 0
        %1698 = vmatprep.subr.bf16.mxu0 0
        %1699 = vmatpush1.bf16.xpose.msra.mxu0 0
        %1700 = vmatprep.subr.bf16.mxu0 0
        %1701 = vmatpush1.bf16.xpose.msra.mxu0 %v1684
        %1702 = vmatprep.subr.bf16.mxu0 0
        %1703 = vmatpush2.bf16.xpose.msra.mxu0 0
        %1704 = vmatprep.subr.bf16.mxu0 0
        %1705 = vmatpush2.bf16.xpose.msra.mxu0 0
        %1706 = vmatprep.subr.bf16.mxu0 0
        %1707 = vmatpush2.bf16.xpose.msra.mxu0 0
        %1708 = vmatprep.subr.bf16.mxu0 0
        %1709 = vmatpush2.bf16.xpose.msra.mxu0 0
        %1710 = vmatprep.subr.bf16.mxu0 0
        %1711 = vmatpush2.bf16.xpose.msra.mxu0 0
        %1712 = vmatprep.subr.bf16.mxu0 0
        %1713 = vmatpush2.bf16.xpose.msra.mxu0 0
        %1714 = vmatprep.subr.bf16.mxu0 0
        %1715 = vmatpush2.bf16.xpose.msra.mxu0 0
        %1716 = vmatprep.subr.bf16.mxu0 0
        %1717 = vmatpush2.bf16.xpose.msra.mxu0 0
        %1718 = vmatprep.mubr.bf16.mxu0 0
        %1719 = vmatmul.mubr.bf16.gmra.mxu0 %v1681
        %v1720 = vpop.f32.mrf.mxu0
        %v1721 = vadd.f32 0.0, %v1720
        %v1722 = vpop.f32.mrf.mxu0
        %v1723 = vpop.f32.mrf.mxu0
        %v1724 = vadd.f32 0.0, %v1723
        %v1725 = vpop.f32.mrf.mxu0
        %1726 = vdwg.mxu0
        %v1728 = vsel %vm1444, %v1408, 0
        %v1731 = vsel %vm1444, %v1421, 0
        %1733 = vmatprep.subr.bf16.mxu0 0
        %1734 = vmatpush1.bf16.xpose.msra.mxu0 0
        %1735 = vmatprep.subr.bf16.mxu0 0
        %1736 = vmatpush1.bf16.xpose.msra.mxu0 0
        %1737 = vmatprep.subr.bf16.mxu0 0
        %1738 = vmatpush1.bf16.xpose.msra.mxu0 0
        %1739 = vmatprep.subr.bf16.mxu0 0
        %1740 = vmatpush1.bf16.xpose.msra.mxu0 0
        %1741 = vmatprep.subr.bf16.mxu0 0
        %1742 = vmatpush1.bf16.xpose.msra.mxu0 0
        %1743 = vmatprep.subr.bf16.mxu0 0
        %1744 = vmatpush1.bf16.xpose.msra.mxu0 0
        %1745 = vmatprep.subr.bf16.mxu0 0
        %1746 = vmatpush1.bf16.xpose.msra.mxu0 0
        %1747 = vmatprep.subr.bf16.mxu0 0
        %1748 = vmatpush1.bf16.xpose.msra.mxu0 %v1731
        %1749 = vmatprep.subr.bf16.mxu0 0
        %1750 = vmatpush2.bf16.xpose.msra.mxu0 0
        %1751 = vmatprep.subr.bf16.mxu0 0
        %1752 = vmatpush2.bf16.xpose.msra.mxu0 0
        %1753 = vmatprep.subr.bf16.mxu0 0
        %1754 = vmatpush2.bf16.xpose.msra.mxu0 0
        %1755 = vmatprep.subr.bf16.mxu0 0
        %1756 = vmatpush2.bf16.xpose.msra.mxu0 0
        %1757 = vmatprep.subr.bf16.mxu0 0
        %1758 = vmatpush2.bf16.xpose.msra.mxu0 0
        %1759 = vmatprep.subr.bf16.mxu0 0
        %1760 = vmatpush2.bf16.xpose.msra.mxu0 0
        %1761 = vmatprep.subr.bf16.mxu0 0
        %1762 = vmatpush2.bf16.xpose.msra.mxu0 0
        %1763 = vmatprep.subr.bf16.mxu0 0
        %1764 = vmatpush2.bf16.xpose.msra.mxu0 0
        %1765 = vmatprep.mubr.bf16.mxu0 0
        %1766 = vmatmul.mubr.bf16.gmra.mxu0 %v1728
        %v1767 = vpop.f32.mrf.mxu0
        %v1768 = vadd.f32 0.0, %v1767
        %v1769 = vpop.f32.mrf.mxu0
        %v1770 = vpop.f32.mrf.mxu0
        %v1771 = vadd.f32 0.0, %v1770
        %v1772 = vpop.f32.mrf.mxu0
        %1773 = vdwg.mxu0
        %v1775 = vsel %vm1444, %v1409, 0
        %v1778 = vsel %vm1444, %v1423, 0
        %1780 = vmatprep.subr.bf16.mxu0 0
        %1781 = vmatpush1.bf16.xpose.msra.mxu0 0
        %1782 = vmatprep.subr.bf16.mxu0 0
        %1783 = vmatpush1.bf16.xpose.msra.mxu0 0
        %1784 = vmatprep.subr.bf16.mxu0 0
        %1785 = vmatpush1.bf16.xpose.msra.mxu0 0
        %1786 = vmatprep.subr.bf16.mxu0 0
        %1787 = vmatpush1.bf16.xpose.msra.mxu0 0
        %1788 = vmatprep.subr.bf16.mxu0 0
        %1789 = vmatpush1.bf16.xpose.msra.mxu0 0
        %1790 = vmatprep.subr.bf16.mxu0 0
        %1791 = vmatpush1.bf16.xpose.msra.mxu0 0
        %1792 = vmatprep.subr.bf16.mxu0 0
        %1793 = vmatpush1.bf16.xpose.msra.mxu0 0
        %1794 = vmatprep.subr.bf16.mxu0 0
        %1795 = vmatpush1.bf16.xpose.msra.mxu0 %v1778
        %1796 = vmatprep.subr.bf16.mxu0 0
        %1797 = vmatpush2.bf16.xpose.msra.mxu0 0
        %1798 = vmatprep.subr.bf16.mxu0 0
        %1799 = vmatpush2.bf16.xpose.msra.mxu0 0
        %1800 = vmatprep.subr.bf16.mxu0 0
        %1801 = vmatpush2.bf16.xpose.msra.mxu0 0
        %1802 = vmatprep.subr.bf16.mxu0 0
        %1803 = vmatpush2.bf16.xpose.msra.mxu0 0
        %1804 = vmatprep.subr.bf16.mxu0 0
        %1805 = vmatpush2.bf16.xpose.msra.mxu0 0
        %1806 = vmatprep.subr.bf16.mxu0 0
        %1807 = vmatpush2.bf16.xpose.msra.mxu0 0
        %1808 = vmatprep.subr.bf16.mxu0 0
        %1809 = vmatpush2.bf16.xpose.msra.mxu0 0
        %1810 = vmatprep.subr.bf16.mxu0 0
        %1811 = vmatpush2.bf16.xpose.msra.mxu0 0
        %1812 = vmatprep.mubr.bf16.mxu0 0
        %1813 = vmatmul.mubr.bf16.gmra.mxu0 %v1775
        %v1814 = vpop.f32.mrf.mxu0
        %v1815 = vadd.f32 0.0, %v1814
        %v1816 = vpop.f32.mrf.mxu0
        %v1817 = vpop.f32.mrf.mxu0
        %v1818 = vadd.f32 0.0, %v1817
        %v1819 = vpop.f32.mrf.mxu0
        %1820 = vdwg.mxu0
        %v1821 = vld [vmem:[%s807] sm:$0x1]
        %v1822 = vld [vmem:[%s807 + $0x1] sm:$0x1]
        %v1825 = vlaneseq
        %v1826 = vshrl.u32 %v1825, 7
        %v1827 = vsub.s32 0, %v1826
        %v1828 = vrot.slane %v1821, %v1827
        %v1829 = vlaneseq
        %v1830 = vshrl.u32 %v1829, 7
        %v1831 = vsub.s32 0, %v1830
        %v1832 = vrot.slane %v1822, %v1831
        %v1835 = vadd.f32 %v1486, %v1828
        %v1836 = vadd.f32 %v1489, %v1828
        %v1837 = vadd.f32 %v1533, %v1832
        %v1838 = vadd.f32 %v1536, %v1832
        %v1839 = vadd.f32 %v1580, %v1828
        %v1840 = vadd.f32 %v1583, %v1828
        %v1841 = vadd.f32 %v1627, %v1832
        %v1842 = vadd.f32 %v1630, %v1832
        %v1843 = vadd.f32 %v1674, %v1828
        %v1844 = vadd.f32 %v1677, %v1828
        %v1845 = vadd.f32 %v1721, %v1832
        %v1846 = vadd.f32 %v1724, %v1832
        %v1847 = vadd.f32 %v1768, %v1828
        %v1848 = vadd.f32 %v1771, %v1828
        %v1849 = vadd.f32 %v1815, %v1832
        %v1850 = vadd.f32 %v1818, %v1832
        %vm1851 = vcmask 130048
        %v1852 = vsel %vm1851, %v1835, -inf
        %1853 = vmax.xlane.f32.xlu0 %v1852
        %v1854 = vpop.xlane.xlu0 %1853
        %v1855 = vsel %vm1851, %v1836, -inf
        %1856 = vmax.xlane.f32.xlu0 %v1855
        %v1857 = vpop.xlane.xlu0 %1856
        %v1858 = vsel %vm1851, %v1837, -inf
        %1859 = vmax.xlane.f32.xlu0 %v1858
        %v1860 = vpop.xlane.xlu0 %1859
        %v1861 = vsel %vm1851, %v1838, -inf
        %1862 = vmax.xlane.f32.xlu0 %v1861
        %v1863 = vpop.xlane.xlu0 %1862
        %v1864 = vsel %vm1851, %v1839, -inf
        %1865 = vmax.xlane.f32.xlu0 %v1864
        %v1866 = vpop.xlane.xlu0 %1865
        %v1867 = vsel %vm1851, %v1840, -inf
        %1868 = vmax.xlane.f32.xlu0 %v1867
        %v1869 = vpop.xlane.xlu0 %1868
        %v1870 = vsel %vm1851, %v1841, -inf
        %1871 = vmax.xlane.f32.xlu0 %v1870
        %v1872 = vpop.xlane.xlu0 %1871
        %v1873 = vsel %vm1851, %v1842, -inf
        %1874 = vmax.xlane.f32.xlu0 %v1873
        %v1875 = vpop.xlane.xlu0 %1874
        %v1876 = vsel %vm1851, %v1843, -inf
        %1877 = vmax.xlane.f32.xlu0 %v1876
        %v1878 = vpop.xlane.xlu0 %1877
        %v1879 = vsel %vm1851, %v1844, -inf
        %1880 = vmax.xlane.f32.xlu0 %v1879
        %v1881 = vpop.xlane.xlu0 %1880
        %v1882 = vsel %vm1851, %v1845, -inf
        %1883 = vmax.xlane.f32.xlu0 %v1882
        %v1884 = vpop.xlane.xlu0 %1883
        %v1885 = vsel %vm1851, %v1846, -inf
        %1886 = vmax.xlane.f32.xlu0 %v1885
        %v1887 = vpop.xlane.xlu0 %1886
        %v1888 = vsel %vm1851, %v1847, -inf
        %1889 = vmax.xlane.f32.xlu0 %v1888
        %v1890 = vpop.xlane.xlu0 %1889
        %v1891 = vsel %vm1851, %v1848, -inf
        %1892 = vmax.xlane.f32.xlu0 %v1891
        %v1893 = vpop.xlane.xlu0 %1892
        %v1894 = vsel %vm1851, %v1849, -inf
        %1895 = vmax.xlane.f32.xlu0 %v1894
        %v1896 = vpop.xlane.xlu0 %1895
        %v1897 = vsel %vm1851, %v1850, -inf
        %1898 = vmax.xlane.f32.xlu0 %v1897
        %v1899 = vpop.xlane.xlu0 %1898
        %v1900 = vsub.f32 %v1835, %v1854
        %v1901 = vsub.f32 %v1836, %v1857
        %v1902 = vsub.f32 %v1837, %v1860
        %v1903 = vsub.f32 %v1838, %v1863
        %v1904 = vsub.f32 %v1839, %v1866
        %v1905 = vsub.f32 %v1840, %v1869
        %v1906 = vsub.f32 %v1841, %v1872
        %v1907 = vsub.f32 %v1842, %v1875
        %v1908 = vsub.f32 %v1843, %v1878
        %v1909 = vsub.f32 %v1844, %v1881
        %v1910 = vsub.f32 %v1845, %v1884
        %v1911 = vsub.f32 %v1846, %v1887
        %v1912 = vsub.f32 %v1847, %v1890
        %v1913 = vsub.f32 %v1848, %v1893
        %v1914 = vsub.f32 %v1849, %v1896
        %v1915 = vsub.f32 %v1850, %v1899
        %v1916 = vmul.f32 %v1900, 1.442695
        %v1917 = vpow.pop %v1916
        %v1918 = vmul.f32 %v1901, 1.442695
        %v1919 = vpow.pop %v1918
        %v1920 = vmul.f32 %v1902, 1.442695
        %v1921 = vpow.pop %v1920
        %v1922 = vmul.f32 %v1903, 1.442695
        %v1923 = vpow.pop %v1922
        %v1924 = vmul.f32 %v1904, 1.442695
        %v1925 = vpow.pop %v1924
        %v1926 = vmul.f32 %v1905, 1.442695
        %v1927 = vpow.pop %v1926
        %v1928 = vmul.f32 %v1906, 1.442695
        %v1929 = vpow.pop %v1928
        %v1930 = vmul.f32 %v1907, 1.442695
        %v1931 = vpow.pop %v1930
        %v1932 = vmul.f32 %v1908, 1.442695
        %v1933 = vpow.pop %v1932
        %v1934 = vmul.f32 %v1909, 1.442695
        %v1935 = vpow.pop %v1934
        %v1936 = vmul.f32 %v1910, 1.442695
        %v1937 = vpow.pop %v1936
        %v1938 = vmul.f32 %v1911, 1.442695
        %v1939 = vpow.pop %v1938
        %v1940 = vmul.f32 %v1912, 1.442695
        %v1941 = vpow.pop %v1940
        %v1942 = vmul.f32 %v1913, 1.442695
        %v1943 = vpow.pop %v1942
        %v1944 = vmul.f32 %v1914, 1.442695
        %v1945 = vpow.pop %v1944
        %v1946 = vmul.f32 %v1915, 1.442695
        %v1947 = vpow.pop %v1946
        %v1948 = vsel %vm1851, %v1917, 0.0
        %1949 = vadd.xlane.f32.xlu0 %v1948
        %v1950 = vpop.xlane.xlu0 %1949
        %v1951 = vsel %vm1851, %v1919, 0.0
        %1952 = vadd.xlane.f32.xlu0 %v1951
        %v1953 = vpop.xlane.xlu0 %1952
        %v1954 = vsel %vm1851, %v1921, 0.0
        %1955 = vadd.xlane.f32.xlu0 %v1954
        %v1956 = vpop.xlane.xlu0 %1955
        %v1957 = vsel %vm1851, %v1923, 0.0
        %1958 = vadd.xlane.f32.xlu0 %v1957
        %v1959 = vpop.xlane.xlu0 %1958
        %v1960 = vsel %vm1851, %v1925, 0.0
        %1961 = vadd.xlane.f32.xlu0 %v1960
        %v1962 = vpop.xlane.xlu0 %1961
        %v1963 = vsel %vm1851, %v1927, 0.0
        %1964 = vadd.xlane.f32.xlu0 %v1963
        %v1965 = vpop.xlane.xlu0 %1964
        %v1966 = vsel %vm1851, %v1929, 0.0
        %1967 = vadd.xlane.f32.xlu0 %v1966
        %v1968 = vpop.xlane.xlu0 %1967
        %v1969 = vsel %vm1851, %v1931, 0.0
        %1970 = vadd.xlane.f32.xlu0 %v1969
        %v1971 = vpop.xlane.xlu0 %1970
        %v1972 = vsel %vm1851, %v1933, 0.0
        %1973 = vadd.xlane.f32.xlu0 %v1972
        %v1974 = vpop.xlane.xlu0 %1973
        %v1975 = vsel %vm1851, %v1935, 0.0
        %1976 = vadd.xlane.f32.xlu0 %v1975
        %v1977 = vpop.xlane.xlu0 %1976
        %v1978 = vsel %vm1851, %v1937, 0.0
        %1979 = vadd.xlane.f32.xlu0 %v1978
        %v1980 = vpop.xlane.xlu0 %1979
        %v1981 = vsel %vm1851, %v1939, 0.0
        %1982 = vadd.xlane.f32.xlu0 %v1981
        %v1983 = vpop.xlane.xlu0 %1982
        %v1984 = vsel %vm1851, %v1941, 0.0
        %1985 = vadd.xlane.f32.xlu0 %v1984
        %v1986 = vpop.xlane.xlu0 %1985
        %v1987 = vsel %vm1851, %v1943, 0.0
        %1988 = vadd.xlane.f32.xlu0 %v1987
        %v1989 = vpop.xlane.xlu0 %1988
        %v1990 = vsel %vm1851, %v1945, 0.0
        %1991 = vadd.xlane.f32.xlu0 %v1990
        %v1992 = vpop.xlane.xlu0 %1991
        %v1993 = vsel %vm1851, %v1947, 0.0
        %1994 = vadd.xlane.f32.xlu0 %v1993
        %v1995 = vpop.xlane.xlu0 %1994
        %v1996 = vrcp.pop %v1950
        %v1997 = vrcp.pop %v1953
        %v1998 = vrcp.pop %v1956
        %v1999 = vrcp.pop %v1959
        %v2000 = vrcp.pop %v1962
        %v2001 = vrcp.pop %v1965
        %v2002 = vrcp.pop %v1968
        %v2003 = vrcp.pop %v1971
        %v2004 = vrcp.pop %v1974
        %v2005 = vrcp.pop %v1977
        %v2006 = vrcp.pop %v1980
        %v2007 = vrcp.pop %v1983
        %v2008 = vrcp.pop %v1986
        %v2009 = vrcp.pop %v1989
        %v2010 = vrcp.pop %v1992
        %v2011 = vrcp.pop %v1995
        %v2012 = vmul.f32 %v1917, %v1996
        %v2013 = vmul.f32 %v1919, %v1997
        %v2014 = vmul.f32 %v1921, %v1998
        %v2015 = vmul.f32 %v1923, %v1999
        %v2016 = vmul.f32 %v1925, %v2000
        %v2017 = vmul.f32 %v1927, %v2001
        %v2018 = vmul.f32 %v1929, %v2002
        %v2019 = vmul.f32 %v1931, %v2003
        %v2020 = vmul.f32 %v1933, %v2004
        %v2021 = vmul.f32 %v1935, %v2005
        %v2022 = vmul.f32 %v1937, %v2006
        %v2023 = vmul.f32 %v1939, %v2007
        %v2024 = vmul.f32 %v1941, %v2008
        %v2025 = vmul.f32 %v1943, %v2009
        %v2026 = vmul.f32 %v1945, %v2010
        %v2027 = vmul.f32 %v1947, %v2011
        %v2028 = vpack.c.bf16 %v2013, %v2012
        %v2029 = vpack.c.bf16 %v2015, %v2014
        %v2030 = vpack.c.bf16 %v2017, %v2016
        %v2031 = vpack.c.bf16 %v2019, %v2018
        %v2032 = vpack.c.bf16 %v2021, %v2020
        %v2033 = vpack.c.bf16 %v2023, %v2022
        %v2034 = vpack.c.bf16 %v2025, %v2024
        %v2035 = vpack.c.bf16 %v2027, %v2026
        %v2037 = vsel %vm1851, %v2028, 0
        %2039 = vmatprep.subr.bf16.mxu0 0
        %2040 = vmatpush1.bf16.msra.mxu0 0
        %2041 = vmatprep.subr.bf16.mxu0 0
        %2042 = vmatpush1.bf16.msra.mxu0 0
        %2043 = vmatprep.subr.bf16.mxu0 0
        %2044 = vmatpush1.bf16.msra.mxu0 0
        %2045 = vmatprep.subr.bf16.mxu0 0
        %2046 = vmatpush1.bf16.msra.mxu0 0
        %2047 = vmatprep.subr.bf16.mxu0 0
        %2048 = vmatpush1.bf16.msra.mxu0 0
        %2049 = vmatprep.subr.bf16.mxu0 0
        %2050 = vmatpush1.bf16.msra.mxu0 0
        %2051 = vmatprep.subr.bf16.mxu0 0
        %2052 = vmatpush1.bf16.msra.mxu0 0
        %2053 = vmatprep.subr.bf16.mxu0 0
        %2054 = vmatpush1.bf16.msra.mxu0 %v1378
        %2055 = vmatprep.subr.bf16.mxu0 0
        %2056 = vmatpush2.bf16.msra.mxu0 0
        %2057 = vmatprep.subr.bf16.mxu0 0
        %2058 = vmatpush2.bf16.msra.mxu0 0
        %2059 = vmatprep.subr.bf16.mxu0 0
        %2060 = vmatpush2.bf16.msra.mxu0 0
        %2061 = vmatprep.subr.bf16.mxu0 0
        %2062 = vmatpush2.bf16.msra.mxu0 0
        %2063 = vmatprep.subr.bf16.mxu0 0
        %2064 = vmatpush2.bf16.msra.mxu0 0
        %2065 = vmatprep.subr.bf16.mxu0 0
        %2066 = vmatpush2.bf16.msra.mxu0 0
        %2067 = vmatprep.subr.bf16.mxu0 0
        %2068 = vmatpush2.bf16.msra.mxu0 0
        %2069 = vmatprep.subr.bf16.mxu0 0
        %2070 = vmatpush2.bf16.msra.mxu0 0
        %2071 = vmatprep.mubr.bf16.mxu0 0
        %2072 = vmatmul.mubr.bf16.gmra.mxu0 %v2037
        %v2073 = vpop.f32.mrf.mxu0
        %v2074 = vadd.f32 0.0, %v2073
        %v2075 = vpop.f32.mrf.mxu0
        %v2076 = vpop.f32.mrf.mxu0
        %v2077 = vadd.f32 0.0, %v2076
        %v2078 = vpop.f32.mrf.mxu0
        %2079 = vdwg.mxu0
        %v2081 = vsel %vm1851, %v2029, 0
        %2083 = vmatprep.subr.bf16.mxu0 0
        %2084 = vmatpush1.bf16.msra.mxu0 0
        %2085 = vmatprep.subr.bf16.mxu0 0
        %2086 = vmatpush1.bf16.msra.mxu0 0
        %2087 = vmatprep.subr.bf16.mxu0 0
        %2088 = vmatpush1.bf16.msra.mxu0 0
        %2089 = vmatprep.subr.bf16.mxu0 0
        %2090 = vmatpush1.bf16.msra.mxu0 0
        %2091 = vmatprep.subr.bf16.mxu0 0
        %2092 = vmatpush1.bf16.msra.mxu0 0
        %2093 = vmatprep.subr.bf16.mxu0 0
        %2094 = vmatpush1.bf16.msra.mxu0 0
        %2095 = vmatprep.subr.bf16.mxu0 0
        %2096 = vmatpush1.bf16.msra.mxu0 0
        %2097 = vmatprep.subr.bf16.mxu0 0
        %2098 = vmatpush1.bf16.msra.mxu0 %v1381
        %2099 = vmatprep.subr.bf16.mxu0 0
        %2100 = vmatpush2.bf16.msra.mxu0 0
        %2101 = vmatprep.subr.bf16.mxu0 0
        %2102 = vmatpush2.bf16.msra.mxu0 0
        %2103 = vmatprep.subr.bf16.mxu0 0
        %2104 = vmatpush2.bf16.msra.mxu0 0
        %2105 = vmatprep.subr.bf16.mxu0 0
        %2106 = vmatpush2.bf16.msra.mxu0 0
        %2107 = vmatprep.subr.bf16.mxu0 0
        %2108 = vmatpush2.bf16.msra.mxu0 0
        %2109 = vmatprep.subr.bf16.mxu0 0
        %2110 = vmatpush2.bf16.msra.mxu0 0
        %2111 = vmatprep.subr.bf16.mxu0 0
        %2112 = vmatpush2.bf16.msra.mxu0 0
        %2113 = vmatprep.subr.bf16.mxu0 0
        %2114 = vmatpush2.bf16.msra.mxu0 0
        %2115 = vmatprep.mubr.bf16.mxu0 0
        %2116 = vmatmul.mubr.bf16.gmra.mxu0 %v2081
        %v2117 = vpop.f32.mrf.mxu0
        %v2118 = vadd.f32 0.0, %v2117
        %v2119 = vpop.f32.mrf.mxu0
        %v2120 = vpop.f32.mrf.mxu0
        %v2121 = vadd.f32 0.0, %v2120
        %v2122 = vpop.f32.mrf.mxu0
        %2123 = vdwg.mxu0
        %v2125 = vsel %vm1851, %v2030, 0
        %2127 = vmatprep.subr.bf16.mxu0 0
        %2128 = vmatpush1.bf16.msra.mxu0 0
        %2129 = vmatprep.subr.bf16.mxu0 0
        %2130 = vmatpush1.bf16.msra.mxu0 0
        %2131 = vmatprep.subr.bf16.mxu0 0
        %2132 = vmatpush1.bf16.msra.mxu0 0
        %2133 = vmatprep.subr.bf16.mxu0 0
        %2134 = vmatpush1.bf16.msra.mxu0 0
        %2135 = vmatprep.subr.bf16.mxu0 0
        %2136 = vmatpush1.bf16.msra.mxu0 0
        %2137 = vmatprep.subr.bf16.mxu0 0
        %2138 = vmatpush1.bf16.msra.mxu0 0
        %2139 = vmatprep.subr.bf16.mxu0 0
        %2140 = vmatpush1.bf16.msra.mxu0 0
        %2141 = vmatprep.subr.bf16.mxu0 0
        %2142 = vmatpush1.bf16.msra.mxu0 %v1427
        %2143 = vmatprep.subr.bf16.mxu0 0
        %2144 = vmatpush2.bf16.msra.mxu0 0
        %2145 = vmatprep.subr.bf16.mxu0 0
        %2146 = vmatpush2.bf16.msra.mxu0 0
        %2147 = vmatprep.subr.bf16.mxu0 0
        %2148 = vmatpush2.bf16.msra.mxu0 0
        %2149 = vmatprep.subr.bf16.mxu0 0
        %2150 = vmatpush2.bf16.msra.mxu0 0
        %2151 = vmatprep.subr.bf16.mxu0 0
        %2152 = vmatpush2.bf16.msra.mxu0 0
        %2153 = vmatprep.subr.bf16.mxu0 0
        %2154 = vmatpush2.bf16.msra.mxu0 0
        %2155 = vmatprep.subr.bf16.mxu0 0
        %2156 = vmatpush2.bf16.msra.mxu0 0
        %2157 = vmatprep.subr.bf16.mxu0 0
        %2158 = vmatpush2.bf16.msra.mxu0 0
        %2159 = vmatprep.mubr.bf16.mxu0 0
        %2160 = vmatmul.mubr.bf16.gmra.mxu0 %v2125
        %v2161 = vpop.f32.mrf.mxu0
        %v2162 = vadd.f32 0.0, %v2161
        %v2163 = vpop.f32.mrf.mxu0
        %v2164 = vpop.f32.mrf.mxu0
        %v2165 = vadd.f32 0.0, %v2164
        %v2166 = vpop.f32.mrf.mxu0
        %2167 = vdwg.mxu0
        %v2169 = vsel %vm1851, %v2031, 0
        %2171 = vmatprep.subr.bf16.mxu0 0
        %2172 = vmatpush1.bf16.msra.mxu0 0
        %2173 = vmatprep.subr.bf16.mxu0 0
        %2174 = vmatpush1.bf16.msra.mxu0 0
        %2175 = vmatprep.subr.bf16.mxu0 0
        %2176 = vmatpush1.bf16.msra.mxu0 0
        %2177 = vmatprep.subr.bf16.mxu0 0
        %2178 = vmatpush1.bf16.msra.mxu0 0
        %2179 = vmatprep.subr.bf16.mxu0 0
        %2180 = vmatpush1.bf16.msra.mxu0 0
        %2181 = vmatprep.subr.bf16.mxu0 0
        %2182 = vmatpush1.bf16.msra.mxu0 0
        %2183 = vmatprep.subr.bf16.mxu0 0
        %2184 = vmatpush1.bf16.msra.mxu0 0
        %2185 = vmatprep.subr.bf16.mxu0 0
        %2186 = vmatpush1.bf16.msra.mxu0 %v1429
        %2187 = vmatprep.subr.bf16.mxu0 0
        %2188 = vmatpush2.bf16.msra.mxu0 0
        %2189 = vmatprep.subr.bf16.mxu0 0
        %2190 = vmatpush2.bf16.msra.mxu0 0
        %2191 = vmatprep.subr.bf16.mxu0 0
        %2192 = vmatpush2.bf16.msra.mxu0 0
        %2193 = vmatprep.subr.bf16.mxu0 0
        %2194 = vmatpush2.bf16.msra.mxu0 0
        %2195 = vmatprep.subr.bf16.mxu0 0
        %2196 = vmatpush2.bf16.msra.mxu0 0
        %2197 = vmatprep.subr.bf16.mxu0 0
        %2198 = vmatpush2.bf16.msra.mxu0 0
        %2199 = vmatprep.subr.bf16.mxu0 0
        %2200 = vmatpush2.bf16.msra.mxu0 0
        %2201 = vmatprep.subr.bf16.mxu0 0
        %2202 = vmatpush2.bf16.msra.mxu0 0
        %2203 = vmatprep.mubr.bf16.mxu0 0
        %2204 = vmatmul.mubr.bf16.gmra.mxu0 %v2169
        %v2205 = vpop.f32.mrf.mxu0
        %v2206 = vadd.f32 0.0, %v2205
        %v2207 = vpop.f32.mrf.mxu0
        %v2208 = vpop.f32.mrf.mxu0
        %v2209 = vadd.f32 0.0, %v2208
        %v2210 = vpop.f32.mrf.mxu0
        %2211 = vdwg.mxu0
        %v2213 = vsel %vm1851, %v2032, 0
        %2215 = vmatprep.subr.bf16.mxu0 0
        %2216 = vmatpush1.bf16.msra.mxu0 0
        %2217 = vmatprep.subr.bf16.mxu0 0
        %2218 = vmatpush1.bf16.msra.mxu0 0
        %2219 = vmatprep.subr.bf16.mxu0 0
        %2220 = vmatpush1.bf16.msra.mxu0 0
        %2221 = vmatprep.subr.bf16.mxu0 0
        %2222 = vmatpush1.bf16.msra.mxu0 0
        %2223 = vmatprep.subr.bf16.mxu0 0
        %2224 = vmatpush1.bf16.msra.mxu0 0
        %2225 = vmatprep.subr.bf16.mxu0 0
        %2226 = vmatpush1.bf16.msra.mxu0 0
        %2227 = vmatprep.subr.bf16.mxu0 0
        %2228 = vmatpush1.bf16.msra.mxu0 0
        %2229 = vmatprep.subr.bf16.mxu0 0
        %2230 = vmatpush1.bf16.msra.mxu0 %v1433
        %2231 = vmatprep.subr.bf16.mxu0 0
        %2232 = vmatpush2.bf16.msra.mxu0 0
        %2233 = vmatprep.subr.bf16.mxu0 0
        %2234 = vmatpush2.bf16.msra.mxu0 0
        %2235 = vmatprep.subr.bf16.mxu0 0
        %2236 = vmatpush2.bf16.msra.mxu0 0
        %2237 = vmatprep.subr.bf16.mxu0 0
        %2238 = vmatpush2.bf16.msra.mxu0 0
        %2239 = vmatprep.subr.bf16.mxu0 0
        %2240 = vmatpush2.bf16.msra.mxu0 0
        %2241 = vmatprep.subr.bf16.mxu0 0
        %2242 = vmatpush2.bf16.msra.mxu0 0
        %2243 = vmatprep.subr.bf16.mxu0 0
        %2244 = vmatpush2.bf16.msra.mxu0 0
        %2245 = vmatprep.subr.bf16.mxu0 0
        %2246 = vmatpush2.bf16.msra.mxu0 0
        %2247 = vmatprep.mubr.bf16.mxu0 0
        %2248 = vmatmul.mubr.bf16.gmra.mxu0 %v2213
        %v2249 = vpop.f32.mrf.mxu0
        %v2250 = vadd.f32 0.0, %v2249
        %v2251 = vpop.f32.mrf.mxu0
        %v2252 = vpop.f32.mrf.mxu0
        %v2253 = vadd.f32 0.0, %v2252
        %v2254 = vpop.f32.mrf.mxu0
        %2255 = vdwg.mxu0
        %v2257 = vsel %vm1851, %v2033, 0
        %2259 = vmatprep.subr.bf16.mxu0 0
        %2260 = vmatpush1.bf16.msra.mxu0 0
        %2261 = vmatprep.subr.bf16.mxu0 0
        %2262 = vmatpush1.bf16.msra.mxu0 0
        %2263 = vmatprep.subr.bf16.mxu0 0
        %2264 = vmatpush1.bf16.msra.mxu0 0
        %2265 = vmatprep.subr.bf16.mxu0 0
        %2266 = vmatpush1.bf16.msra.mxu0 0
        %2267 = vmatprep.subr.bf16.mxu0 0
        %2268 = vmatpush1.bf16.msra.mxu0 0
        %2269 = vmatprep.subr.bf16.mxu0 0
        %2270 = vmatpush1.bf16.msra.mxu0 0
        %2271 = vmatprep.subr.bf16.mxu0 0
        %2272 = vmatpush1.bf16.msra.mxu0 0
        %2273 = vmatprep.subr.bf16.mxu0 0
        %2274 = vmatpush1.bf16.msra.mxu0 %v1435
        %2275 = vmatprep.subr.bf16.mxu0 0
        %2276 = vmatpush2.bf16.msra.mxu0 0
        %2277 = vmatprep.subr.bf16.mxu0 0
        %2278 = vmatpush2.bf16.msra.mxu0 0
        %2279 = vmatprep.subr.bf16.mxu0 0
        %2280 = vmatpush2.bf16.msra.mxu0 0
        %2281 = vmatprep.subr.bf16.mxu0 0
        %2282 = vmatpush2.bf16.msra.mxu0 0
        %2283 = vmatprep.subr.bf16.mxu0 0
        %2284 = vmatpush2.bf16.msra.mxu0 0
        %2285 = vmatprep.subr.bf16.mxu0 0
        %2286 = vmatpush2.bf16.msra.mxu0 0
        %2287 = vmatprep.subr.bf16.mxu0 0
        %2288 = vmatpush2.bf16.msra.mxu0 0
        %2289 = vmatprep.subr.bf16.mxu0 0
        %2290 = vmatpush2.bf16.msra.mxu0 0
        %2291 = vmatprep.mubr.bf16.mxu0 0
        %2292 = vmatmul.mubr.bf16.gmra.mxu0 %v2257
        %v2293 = vpop.f32.mrf.mxu0
        %v2294 = vadd.f32 0.0, %v2293
        %v2295 = vpop.f32.mrf.mxu0
        %v2296 = vpop.f32.mrf.mxu0
        %v2297 = vadd.f32 0.0, %v2296
        %v2298 = vpop.f32.mrf.mxu0
        %2299 = vdwg.mxu0
        %v2301 = vsel %vm1851, %v2034, 0
        %2303 = vmatprep.subr.bf16.mxu0 0
        %2304 = vmatpush1.bf16.msra.mxu0 0
        %2305 = vmatprep.subr.bf16.mxu0 0
        %2306 = vmatpush1.bf16.msra.mxu0 0
        %2307 = vmatprep.subr.bf16.mxu0 0
        %2308 = vmatpush1.bf16.msra.mxu0 0
        %2309 = vmatprep.subr.bf16.mxu0 0
        %2310 = vmatpush1.bf16.msra.mxu0 0
        %2311 = vmatprep.subr.bf16.mxu0 0
        %2312 = vmatpush1.bf16.msra.mxu0 0
        %2313 = vmatprep.subr.bf16.mxu0 0
        %2314 = vmatpush1.bf16.msra.mxu0 0
        %2315 = vmatprep.subr.bf16.mxu0 0
        %2316 = vmatpush1.bf16.msra.mxu0 0
        %2317 = vmatprep.subr.bf16.mxu0 0
        %2318 = vmatpush1.bf16.msra.mxu0 %v1439
        %2319 = vmatprep.subr.bf16.mxu0 0
        %2320 = vmatpush2.bf16.msra.mxu0 0
        %2321 = vmatprep.subr.bf16.mxu0 0
        %2322 = vmatpush2.bf16.msra.mxu0 0
        %2323 = vmatprep.subr.bf16.mxu0 0
        %2324 = vmatpush2.bf16.msra.mxu0 0
        %2325 = vmatprep.subr.bf16.mxu0 0
        %2326 = vmatpush2.bf16.msra.mxu0 0
        %2327 = vmatprep.subr.bf16.mxu0 0
        %2328 = vmatpush2.bf16.msra.mxu0 0
        %2329 = vmatprep.subr.bf16.mxu0 0
        %2330 = vmatpush2.bf16.msra.mxu0 0
        %2331 = vmatprep.subr.bf16.mxu0 0
        %2332 = vmatpush2.bf16.msra.mxu0 0
        %2333 = vmatprep.subr.bf16.mxu0 0
        %2334 = vmatpush2.bf16.msra.mxu0 0
        %2335 = vmatprep.mubr.bf16.mxu0 0
        %2336 = vmatmul.mubr.bf16.gmra.mxu0 %v2301
        %v2337 = vpop.f32.mrf.mxu0
        %v2338 = vadd.f32 0.0, %v2337
        %v2339 = vpop.f32.mrf.mxu0
        %v2340 = vpop.f32.mrf.mxu0
        %v2341 = vadd.f32 0.0, %v2340
        %v2342 = vpop.f32.mrf.mxu0
        %2343 = vdwg.mxu0
        %v2345 = vsel %vm1851, %v2035, 0
        %2347 = vmatprep.subr.bf16.mxu0 0
        %2348 = vmatpush1.bf16.msra.mxu0 0
        %2349 = vmatprep.subr.bf16.mxu0 0
        %2350 = vmatpush1.bf16.msra.mxu0 0
        %2351 = vmatprep.subr.bf16.mxu0 0
        %2352 = vmatpush1.bf16.msra.mxu0 0
        %2353 = vmatprep.subr.bf16.mxu0 0
        %2354 = vmatpush1.bf16.msra.mxu0 0
        %2355 = vmatprep.subr.bf16.mxu0 0
        %2356 = vmatpush1.bf16.msra.mxu0 0
        %2357 = vmatprep.subr.bf16.mxu0 0
        %2358 = vmatpush1.bf16.msra.mxu0 0
        %2359 = vmatprep.subr.bf16.mxu0 0
        %2360 = vmatpush1.bf16.msra.mxu0 0
        %2361 = vmatprep.subr.bf16.mxu0 0
        %2362 = vmatpush1.bf16.msra.mxu0 %v1441
        %2363 = vmatprep.subr.bf16.mxu0 0
        %2364 = vmatpush2.bf16.msra.mxu0 0
        %2365 = vmatprep.subr.bf16.mxu0 0
        %2366 = vmatpush2.bf16.msra.mxu0 0
        %2367 = vmatprep.subr.bf16.mxu0 0
        %2368 = vmatpush2.bf16.msra.mxu0 0
        %2369 = vmatprep.subr.bf16.mxu0 0
        %2370 = vmatpush2.bf16.msra.mxu0 0
        %2371 = vmatprep.subr.bf16.mxu0 0
        %2372 = vmatpush2.bf16.msra.mxu0 0
        %2373 = vmatprep.subr.bf16.mxu0 0
        %2374 = vmatpush2.bf16.msra.mxu0 0
        %2375 = vmatprep.subr.bf16.mxu0 0
        %2376 = vmatpush2.bf16.msra.mxu0 0
        %2377 = vmatprep.subr.bf16.mxu0 0
        %2378 = vmatpush2.bf16.msra.mxu0 0
        %2379 = vmatprep.mubr.bf16.mxu0 0
        %2380 = vmatmul.mubr.bf16.gmra.mxu0 %v2345
        %v2381 = vpop.f32.mrf.mxu0
        %v2382 = vadd.f32 0.0, %v2381
        %v2383 = vpop.f32.mrf.mxu0
        %v2384 = vpop.f32.mrf.mxu0
        %v2385 = vadd.f32 0.0, %v2384
        %v2386 = vpop.f32.mrf.mxu0
        %2387 = vdwg.mxu0
        %v2388 = vpack.c.bf16 %v2077, %v2074
        %v2389 = vpack.c.bf16 %v2121, %v2118
        %v2390 = vpack.c.bf16 %v2165, %v2162
        %v2391 = vpack.c.bf16 %v2209, %v2206
        %v2392 = vpack.c.bf16 %v2253, %v2250
        %v2393 = vpack.c.bf16 %v2297, %v2294
        %v2394 = vpack.c.bf16 %v2341, %v2338
        %v2395 = vpack.c.bf16 %v2385, %v2382
        %v2396 = vld [vmem:[%s833] sm:$0xf]
        %v2397 = vld [vmem:[%s833 + $0x4] sm:$0xf]
        %v2398 = vld [vmem:[%s833 + $0x8] sm:$0xf]
        %v2399 = vld [vmem:[%s833 + $0xc] sm:$0xf]
        %v2400 = vld [vmem:[%s833 + $0x10] sm:$0xf]
        %v2401 = vld [vmem:[%s833 + $0x14] sm:$0xf]
        %v2402 = vld [vmem:[%s833 + $0x18] sm:$0xf]
        %v2403 = vld [vmem:[%s833 + $0x1c] sm:$0xf]
        %v2404 = vld [vmem:[%s833 + $0x20] sm:$0xf]
        %v2405 = vld [vmem:[%s833 + $0x24] sm:$0xf]
        %v2406 = vld [vmem:[%s833 + $0x28] sm:$0xf]
        %v2407 = vld [vmem:[%s833 + $0x2c] sm:$0xf]
        %v2408 = vld [vmem:[%s833 + $0x30] sm:$0xf]
        %v2409 = vld [vmem:[%s833 + $0x34] sm:$0xf]
        %v2410 = vld [vmem:[%s833 + $0x38] sm:$0xf]
        %v2411 = vld [vmem:[%s833 + $0x3c] sm:$0xf]
        %v2416 = vunpack.c.l.b16 %v2396
        %v2417 = vunpack.c.l.b16 %v2397
        %v2418 = vunpack.c.l.b16 %v2398
        %v2419 = vunpack.c.l.b16 %v2399
        %v2420 = vpack.c.b16 %v2417, %v2416
        %v2421 = vpack.c.b16 %v2419, %v2418
        %v2425 = vsel %vm1444, %v2388, 0
        %v2428 = vsel %vm1444, %v2389, 0
        %2430 = vmatprep.subr.bf16.mxu0 0
        %2431 = vmatpush1.bf16.msra.mxu0 0
        %2432 = vmatprep.subr.bf16.mxu0 0
        %2433 = vmatpush1.bf16.msra.mxu0 0
        %2434 = vmatprep.subr.bf16.mxu0 0
        %2435 = vmatpush1.bf16.msra.mxu0 0
        %2436 = vmatprep.subr.bf16.mxu0 0
        %2437 = vmatpush1.bf16.msra.mxu0 0
        %2438 = vmatprep.subr.bf16.mxu0 0
        %2439 = vmatpush1.bf16.msra.mxu0 0
        %2440 = vmatprep.subr.bf16.mxu0 0
        %2441 = vmatpush1.bf16.msra.mxu0 0
        %2442 = vmatprep.subr.bf16.mxu0 0
        %2443 = vmatpush1.bf16.msra.mxu0 %v2421
        %2444 = vmatprep.subr.bf16.mxu0 0
        %2445 = vmatpush1.bf16.msra.mxu0 %v2420
        %2446 = vmatprep.subr.bf16.mxu0 0
        %2447 = vmatpush2.bf16.msra.mxu0 0
        %2448 = vmatprep.subr.bf16.mxu0 0
        %2449 = vmatpush2.bf16.msra.mxu0 0
        %2450 = vmatprep.subr.bf16.mxu0 0
        %2451 = vmatpush2.bf16.msra.mxu0 0
        %2452 = vmatprep.subr.bf16.mxu0 0
        %2453 = vmatpush2.bf16.msra.mxu0 0
        %2454 = vmatprep.subr.bf16.mxu0 0
        %2455 = vmatpush2.bf16.msra.mxu0 0
        %2456 = vmatprep.subr.bf16.mxu0 0
        %2457 = vmatpush2.bf16.msra.mxu0 0
        %2458 = vmatprep.subr.bf16.mxu0 0
        %2459 = vmatpush2.bf16.msra.mxu0 0
        %2460 = vmatprep.subr.bf16.mxu0 0
        %2461 = vmatpush2.bf16.msra.mxu0 0
        %2462 = vmatprep.mubr.bf16.mxu0 0
        %2463 = vmatmul.mubr.bf16.gmra.mxu0 %v2425
        %v2464 = vpop.f32.mrf.mxu0
        %v2465 = vadd.f32 0.0, %v2464
        %v2466 = vpop.f32.mrf.mxu0
        %v2467 = vpop.f32.mrf.mxu0
        %v2468 = vadd.f32 0.0, %v2467
        %v2469 = vpop.f32.mrf.mxu0
        %2470 = vmatprep.mubr.bf16.mxu0 0
        %2471 = vmatmul.mubr.bf16.gmra.mxu0 %v2428
        %v2472 = vpop.f32.mrf.mxu0
        %v2473 = vadd.f32 0.0, %v2472
        %v2474 = vpop.f32.mrf.mxu0
        %v2475 = vpop.f32.mrf.mxu0
        %v2476 = vadd.f32 0.0, %v2475
        %v2477 = vpop.f32.mrf.mxu0
        %2478 = vdwg.mxu0
        %v2483 = vunpack.c.l.b16 %v2400
        %v2484 = vunpack.c.l.b16 %v2401
        %v2485 = vunpack.c.l.b16 %v2402
        %v2486 = vunpack.c.l.b16 %v2403
        %v2487 = vpack.c.b16 %v2484, %v2483
        %v2488 = vpack.c.b16 %v2486, %v2485
        %v2492 = vsel %vm1444, %v2390, 0
        %v2495 = vsel %vm1444, %v2391, 0
        %2497 = vmatprep.subr.bf16.mxu0 0
        %2498 = vmatpush1.bf16.msra.mxu0 0
        %2499 = vmatprep.subr.bf16.mxu0 0
        %2500 = vmatpush1.bf16.msra.mxu0 0
        %2501 = vmatprep.subr.bf16.mxu0 0
        %2502 = vmatpush1.bf16.msra.mxu0 0
        %2503 = vmatprep.subr.bf16.mxu0 0
        %2504 = vmatpush1.bf16.msra.mxu0 0
        %2505 = vmatprep.subr.bf16.mxu0 0
        %2506 = vmatpush1.bf16.msra.mxu0 0
        %2507 = vmatprep.subr.bf16.mxu0 0
        %2508 = vmatpush1.bf16.msra.mxu0 0
        %2509 = vmatprep.subr.bf16.mxu0 0
        %2510 = vmatpush1.bf16.msra.mxu0 %v2488
        %2511 = vmatprep.subr.bf16.mxu0 0
        %2512 = vmatpush1.bf16.msra.mxu0 %v2487
        %2513 = vmatprep.subr.bf16.mxu0 0
        %2514 = vmatpush2.bf16.msra.mxu0 0
        %2515 = vmatprep.subr.bf16.mxu0 0
        %2516 = vmatpush2.bf16.msra.mxu0 0
        %2517 = vmatprep.subr.bf16.mxu0 0
        %2518 = vmatpush2.bf16.msra.mxu0 0
        %2519 = vmatprep.subr.bf16.mxu0 0
        %2520 = vmatpush2.bf16.msra.mxu0 0
        %2521 = vmatprep.subr.bf16.mxu0 0
        %2522 = vmatpush2.bf16.msra.mxu0 0
        %2523 = vmatprep.subr.bf16.mxu0 0
        %2524 = vmatpush2.bf16.msra.mxu0 0
        %2525 = vmatprep.subr.bf16.mxu0 0
        %2526 = vmatpush2.bf16.msra.mxu0 0
        %2527 = vmatprep.subr.bf16.mxu0 0
        %2528 = vmatpush2.bf16.msra.mxu0 0
        %2529 = vmatprep.mubr.bf16.mxu0 0
        %2530 = vmatmul.mubr.bf16.gmra.mxu0 %v2492
        %v2531 = vpop.f32.mrf.mxu0
        %v2532 = vadd.f32 0.0, %v2531
        %v2533 = vpop.f32.mrf.mxu0
        %v2534 = vpop.f32.mrf.mxu0
        %v2535 = vadd.f32 0.0, %v2534
        %v2536 = vpop.f32.mrf.mxu0
        %2537 = vmatprep.mubr.bf16.mxu0 0
        %2538 = vmatmul.mubr.bf16.gmra.mxu0 %v2495
        %v2539 = vpop.f32.mrf.mxu0
        %v2540 = vadd.f32 0.0, %v2539
        %v2541 = vpop.f32.mrf.mxu0
        %v2542 = vpop.f32.mrf.mxu0
        %v2543 = vadd.f32 0.0, %v2542
        %v2544 = vpop.f32.mrf.mxu0
        %2545 = vdwg.mxu0
        %v2550 = vunpack.c.l.b16 %v2404
        %v2551 = vunpack.c.l.b16 %v2405
        %v2552 = vunpack.c.l.b16 %v2406
        %v2553 = vunpack.c.l.b16 %v2407
        %v2554 = vpack.c.b16 %v2551, %v2550
        %v2555 = vpack.c.b16 %v2553, %v2552
        %v2559 = vsel %vm1444, %v2392, 0
        %v2562 = vsel %vm1444, %v2393, 0
        %2564 = vmatprep.subr.bf16.mxu0 0
        %2565 = vmatpush1.bf16.msra.mxu0 0
        %2566 = vmatprep.subr.bf16.mxu0 0
        %2567 = vmatpush1.bf16.msra.mxu0 0
        %2568 = vmatprep.subr.bf16.mxu0 0
        %2569 = vmatpush1.bf16.msra.mxu0 0
        %2570 = vmatprep.subr.bf16.mxu0 0
        %2571 = vmatpush1.bf16.msra.mxu0 0
        %2572 = vmatprep.subr.bf16.mxu0 0
        %2573 = vmatpush1.bf16.msra.mxu0 0
        %2574 = vmatprep.subr.bf16.mxu0 0
        %2575 = vmatpush1.bf16.msra.mxu0 0
        %2576 = vmatprep.subr.bf16.mxu0 0
        %2577 = vmatpush1.bf16.msra.mxu0 %v2555
        %2578 = vmatprep.subr.bf16.mxu0 0
        %2579 = vmatpush1.bf16.msra.mxu0 %v2554
        %2580 = vmatprep.subr.bf16.mxu0 0
        %2581 = vmatpush2.bf16.msra.mxu0 0
        %2582 = vmatprep.subr.bf16.mxu0 0
        %2583 = vmatpush2.bf16.msra.mxu0 0
        %2584 = vmatprep.subr.bf16.mxu0 0
        %2585 = vmatpush2.bf16.msra.mxu0 0
        %2586 = vmatprep.subr.bf16.mxu0 0
        %2587 = vmatpush2.bf16.msra.mxu0 0
        %2588 = vmatprep.subr.bf16.mxu0 0
        %2589 = vmatpush2.bf16.msra.mxu0 0
        %2590 = vmatprep.subr.bf16.mxu0 0
        %2591 = vmatpush2.bf16.msra.mxu0 0
        %2592 = vmatprep.subr.bf16.mxu0 0
        %2593 = vmatpush2.bf16.msra.mxu0 0
        %2594 = vmatprep.subr.bf16.mxu0 0
        %2595 = vmatpush2.bf16.msra.mxu0 0
        %2596 = vmatprep.mubr.bf16.mxu0 0
        %2597 = vmatmul.mubr.bf16.gmra.mxu0 %v2559
        %v2598 = vpop.f32.mrf.mxu0
        %v2599 = vadd.f32 0.0, %v2598
        %v2600 = vpop.f32.mrf.mxu0
        %v2601 = vpop.f32.mrf.mxu0
        %v2602 = vadd.f32 0.0, %v2601
        %v2603 = vpop.f32.mrf.mxu0
        %2604 = vmatprep.mubr.bf16.mxu0 0
        %2605 = vmatmul.mubr.bf16.gmra.mxu0 %v2562
        %v2606 = vpop.f32.mrf.mxu0
        %v2607 = vadd.f32 0.0, %v2606
        %v2608 = vpop.f32.mrf.mxu0
        %v2609 = vpop.f32.mrf.mxu0
        %v2610 = vadd.f32 0.0, %v2609
        %v2611 = vpop.f32.mrf.mxu0
        %2612 = vdwg.mxu0
        %v2617 = vunpack.c.l.b16 %v2408
        %v2618 = vunpack.c.l.b16 %v2409
        %v2619 = vunpack.c.l.b16 %v2410
        %v2620 = vunpack.c.l.b16 %v2411
        %v2621 = vpack.c.b16 %v2618, %v2617
        %v2622 = vpack.c.b16 %v2620, %v2619
        %v2626 = vsel %vm1444, %v2394, 0
        %v2629 = vsel %vm1444, %v2395, 0
        %2631 = vmatprep.subr.bf16.mxu0 0
        %2632 = vmatpush1.bf16.msra.mxu0 0
        %2633 = vmatprep.subr.bf16.mxu0 0
        %2634 = vmatpush1.bf16.msra.mxu0 0
        %2635 = vmatprep.subr.bf16.mxu0 0
        %2636 = vmatpush1.bf16.msra.mxu0 0
        %2637 = vmatprep.subr.bf16.mxu0 0
        %2638 = vmatpush1.bf16.msra.mxu0 0
        %2639 = vmatprep.subr.bf16.mxu0 0
        %2640 = vmatpush1.bf16.msra.mxu0 0
        %2641 = vmatprep.subr.bf16.mxu0 0
        %2642 = vmatpush1.bf16.msra.mxu0 0
        %2643 = vmatprep.subr.bf16.mxu0 0
        %2644 = vmatpush1.bf16.msra.mxu0 %v2622
        %2645 = vmatprep.subr.bf16.mxu0 0
        %2646 = vmatpush1.bf16.msra.mxu0 %v2621
        %2647 = vmatprep.subr.bf16.mxu0 0
        %2648 = vmatpush2.bf16.msra.mxu0 0
        %2649 = vmatprep.subr.bf16.mxu0 0
        %2650 = vmatpush2.bf16.msra.mxu0 0
        %2651 = vmatprep.subr.bf16.mxu0 0
        %2652 = vmatpush2.bf16.msra.mxu0 0
        %2653 = vmatprep.subr.bf16.mxu0 0
        %2654 = vmatpush2.bf16.msra.mxu0 0
        %2655 = vmatprep.subr.bf16.mxu0 0
        %2656 = vmatpush2.bf16.msra.mxu0 0
        %2657 = vmatprep.subr.bf16.mxu0 0
        %2658 = vmatpush2.bf16.msra.mxu0 0
        %2659 = vmatprep.subr.bf16.mxu0 0
        %2660 = vmatpush2.bf16.msra.mxu0 0
        %2661 = vmatprep.subr.bf16.mxu0 0
        %2662 = vmatpush2.bf16.msra.mxu0 0
        %2663 = vmatprep.mubr.bf16.mxu0 0
        %2664 = vmatmul.mubr.bf16.gmra.mxu0 %v2626
        %v2665 = vpop.f32.mrf.mxu0
        %v2666 = vadd.f32 0.0, %v2665
        %v2667 = vpop.f32.mrf.mxu0
        %v2668 = vpop.f32.mrf.mxu0
        %v2669 = vadd.f32 0.0, %v2668
        %v2670 = vpop.f32.mrf.mxu0
        %2671 = vmatprep.mubr.bf16.mxu0 0
        %2672 = vmatmul.mubr.bf16.gmra.mxu0 %v2629
        %v2673 = vpop.f32.mrf.mxu0
        %v2674 = vadd.f32 0.0, %v2673
        %v2675 = vpop.f32.mrf.mxu0
        %v2676 = vpop.f32.mrf.mxu0
        %v2677 = vadd.f32 0.0, %v2676
        %v2678 = vpop.f32.mrf.mxu0
        %2679 = vdwg.mxu0
        %v2680 = vadd.f32 %v2465, %v2532
        %v2681 = vadd.f32 %v2680, %v2599
        %v2682 = vadd.f32 %v2681, %v2666
        %v2683 = vadd.f32 %v2468, %v2535
        %v2684 = vadd.f32 %v2683, %v2602
        %v2685 = vadd.f32 %v2684, %v2669
        %v2686 = vadd.f32 %v2473, %v2540
        %v2687 = vadd.f32 %v2686, %v2607
        %v2688 = vadd.f32 %v2687, %v2674
        %v2689 = vadd.f32 %v2476, %v2543
        %v2690 = vadd.f32 %v2689, %v2610
        %v2691 = vadd.f32 %v2690, %v2677
        %v2692 = vld [vmem:[%s841] sm:$0x1]
        %v2694 = vlaneseq
        %v2695 = vshrl.u32 %v2694, 7
        %v2696 = vsub.s32 0, %v2695
        %v2697 = vrot.slane %v2692, %v2696
        %v2699 = vadd.f32 %v2682, %v2697
        %v2700 = vadd.f32 %v2685, %v2697
        %v2701 = vadd.f32 %v2688, %v2697
        %v2702 = vadd.f32 %v2691, %v2697
        %v2703 = vadd.f32 %v1091, %v2699
        %v2704 = vadd.f32 %v1092, %v2700
        %v2705 = vadd.f32 %v1093, %v2701
        %v2706 = vadd.f32 %v1094, %v2702
        %v2707 = vld [vmem:[%s849] sm:$0x1]
        %v2708 = vld [vmem:[%s857] sm:$0x1]
        %2709 = vadd.xlane.f32.xlu0 %v2703
        %v2710 = vpop.xlane.xlu0 %2709
        %2711 = vadd.xlane.f32.xlu0 %v2704
        %v2712 = vpop.xlane.xlu0 %2711
        %2713 = vadd.xlane.f32.xlu0 %v2705
        %v2714 = vpop.xlane.xlu0 %2713
        %2715 = vadd.xlane.f32.xlu0 %v2706
        %v2716 = vpop.xlane.xlu0 %2715
        %v2717 = vrcp.pop 128.0
        %v2718 = vmul.f32 %v2710, %v2717
        %v2719 = vmul.f32 %v2712, %v2717
        %v2720 = vmul.f32 %v2714, %v2717
        %v2721 = vmul.f32 %v2716, %v2717
        %v2722 = vsub.f32 %v2703, %v2718
        %v2723 = vsub.f32 %v2704, %v2719
        %v2724 = vsub.f32 %v2705, %v2720
        %v2725 = vsub.f32 %v2706, %v2721
        %v2726 = vmul.f32 %v2722, %v2722
        %v2727 = vmul.f32 %v2723, %v2723
        %v2728 = vmul.f32 %v2724, %v2724
        %v2729 = vmul.f32 %v2725, %v2725
        %2730 = vadd.xlane.f32.xlu0 %v2726
        %v2731 = vpop.xlane.xlu0 %2730
        %2732 = vadd.xlane.f32.xlu0 %v2727
        %v2733 = vpop.xlane.xlu0 %2732
        %2734 = vadd.xlane.f32.xlu0 %v2728
        %v2735 = vpop.xlane.xlu0 %2734
        %2736 = vadd.xlane.f32.xlu0 %v2729
        %v2737 = vpop.xlane.xlu0 %2736
        %v2738 = vmul.f32 %v2731, %v2717
        %v2739 = vmul.f32 %v2733, %v2717
        %v2740 = vmul.f32 %v2735, %v2717
        %v2741 = vmul.f32 %v2737, %v2717
        %v2742 = vadd.f32 %v2738, 1e-12
        %v2743 = vadd.f32 %v2739, 1e-12
        %v2744 = vadd.f32 %v2740, 1e-12
        %v2745 = vadd.f32 %v2741, 1e-12
        %v2746 = vrsqrt.pop %v2742
        %v2747 = vrsqrt.pop %v2743
        %v2748 = vrsqrt.pop %v2744
        %v2749 = vrsqrt.pop %v2745
        %v2750 = vmul.f32 %v2722, %v2746
        %v2751 = vmul.f32 %v2723, %v2747
        %v2752 = vmul.f32 %v2724, %v2748
        %v2753 = vmul.f32 %v2725, %v2749
        %v2755 = vlaneseq
        %v2756 = vshrl.u32 %v2755, 7
        %v2757 = vsub.s32 0, %v2756
        %v2758 = vrot.slane %v2707, %v2757
        %v2760 = vmul.f32 %v2758, %v2750
        %v2761 = vmul.f32 %v2758, %v2751
        %v2762 = vmul.f32 %v2758, %v2752
        %v2763 = vmul.f32 %v2758, %v2753
        %v2765 = vlaneseq
        %v2766 = vshrl.u32 %v2765, 7
        %v2767 = vsub.s32 0, %v2766
        %v2768 = vrot.slane %v2708, %v2767
        %v2770 = vadd.f32 %v2760, %v2768
        %v2771 = vadd.f32 %v2761, %v2768
        %v2772 = vadd.f32 %v2762, %v2768
        %v2773 = vadd.f32 %v2763, %v2768
        %v2774 = vpack.c.bf16 %v2771, %v2770
        %v2775 = vpack.c.bf16 %v2773, %v2772
        %v2776 = vld [vmem:[%s866] sm:$0xff]
        %v2777 = vld [vmem:[%s866 + $0x8] sm:$0xff]
        %v2778 = vld [vmem:[%s866 + $0x10] sm:$0xff]
        %v2779 = vld [vmem:[%s866 + $0x18] sm:$0xff]
        %v2780 = vld [vmem:[%s866 + $0x20] sm:$0xff]
        %v2781 = vld [vmem:[%s866 + $0x28] sm:$0xff]
        %v2782 = vld [vmem:[%s866 + $0x30] sm:$0xff]
        %v2783 = vld [vmem:[%s866 + $0x38] sm:$0xff]
        %v2784 = vld [vmem:[%s866 + $0x40] sm:$0xff]
        %v2785 = vld [vmem:[%s866 + $0x48] sm:$0xff]
        %v2786 = vld [vmem:[%s866 + $0x50] sm:$0xff]
        %v2787 = vld [vmem:[%s866 + $0x58] sm:$0xff]
        %v2788 = vld [vmem:[%s866 + $0x60] sm:$0xff]
        %v2789 = vld [vmem:[%s866 + $0x68] sm:$0xff]
        %v2790 = vld [vmem:[%s866 + $0x70] sm:$0xff]
        %v2791 = vld [vmem:[%s866 + $0x78] sm:$0xff]
        %v2792 = vld [vmem:[%s995] sm:$0x3]
        %v2794 = vlaneseq
        %v2795 = vshrl.u32 %v2794, 7
        %v2796 = vsub.s32 0, %v2795
        %v2797 = vrot.slane %v2792, %v2796
        %v2798 = vlaneseq
        %v2799 = vshrl.u32 %v2798, 7
        %v2800 = vsub.s32 1, %v2799
        %v2801 = vrot.slane %v2792, %v2800
        %v2820 = vunpack.c.l.b16 %v2776
        %v2821 = vunpack.c.h.b16 %v2776
        %v2822 = vunpack.c.l.b16 %v2777
        %v2823 = vunpack.c.h.b16 %v2777
        %v2824 = vunpack.c.l.b16 %v2778
        %v2825 = vunpack.c.h.b16 %v2778
        %v2826 = vunpack.c.l.b16 %v2779
        %v2827 = vunpack.c.h.b16 %v2779
        %v2828 = vunpack.c.l.b16 %v2780
        %v2829 = vunpack.c.h.b16 %v2780
        %v2830 = vunpack.c.l.b16 %v2781
        %v2831 = vunpack.c.h.b16 %v2781
        %v2832 = vunpack.c.l.b16 %v2782
        %v2833 = vunpack.c.h.b16 %v2782
        %v2834 = vunpack.c.l.b16 %v2783
        %v2835 = vunpack.c.h.b16 %v2783
        %v2836 = vunpack.c.l.b16 %v2784
        %v2837 = vunpack.c.h.b16 %v2784
        %v2838 = vunpack.c.l.b16 %v2785
        %v2839 = vunpack.c.h.b16 %v2785
        %v2840 = vunpack.c.l.b16 %v2786
        %v2841 = vunpack.c.h.b16 %v2786
        %v2842 = vunpack.c.l.b16 %v2787
        %v2843 = vunpack.c.h.b16 %v2787
        %v2844 = vunpack.c.l.b16 %v2788
        %v2845 = vunpack.c.h.b16 %v2788
        %v2846 = vunpack.c.l.b16 %v2789
        %v2847 = vunpack.c.h.b16 %v2789
        %v2848 = vunpack.c.l.b16 %v2790
        %v2849 = vunpack.c.h.b16 %v2790
        %v2850 = vunpack.c.l.b16 %v2791
        %v2851 = vunpack.c.h.b16 %v2791
        %v2852 = vpack.c.b16 %v2822, %v2820
        %v2853 = vpack.c.b16 %v2823, %v2821
        %v2854 = vpack.c.b16 %v2826, %v2824
        %v2855 = vpack.c.b16 %v2827, %v2825
        %v2856 = vpack.c.b16 %v2830, %v2828
        %v2857 = vpack.c.b16 %v2831, %v2829
        %v2858 = vpack.c.b16 %v2834, %v2832
        %v2859 = vpack.c.b16 %v2835, %v2833
        %v2860 = vpack.c.b16 %v2838, %v2836
        %v2861 = vpack.c.b16 %v2839, %v2837
        %v2862 = vpack.c.b16 %v2842, %v2840
        %v2863 = vpack.c.b16 %v2843, %v2841
        %v2864 = vpack.c.b16 %v2846, %v2844
        %v2865 = vpack.c.b16 %v2847, %v2845
        %v2866 = vpack.c.b16 %v2850, %v2848
        %v2867 = vpack.c.b16 %v2851, %v2849
        %2884 = vmatprep.subr.bf16.mxu0 %v2867
        %2885 = vmatpush1.bf16.msra.mxu0 %v2866
        %2886 = vmatprep.subr.bf16.mxu0 %v2865
        %2887 = vmatpush1.bf16.msra.mxu0 %v2864
        %2888 = vmatprep.subr.bf16.mxu0 %v2863
        %2889 = vmatpush1.bf16.msra.mxu0 %v2862
        %2890 = vmatprep.subr.bf16.mxu0 %v2861
        %2891 = vmatpush1.bf16.msra.mxu0 %v2860
        %2892 = vmatprep.subr.bf16.mxu0 %v2859
        %2893 = vmatpush1.bf16.msra.mxu0 %v2858
        %2894 = vmatprep.subr.bf16.mxu0 %v2857
        %2895 = vmatpush1.bf16.msra.mxu0 %v2856
        %2896 = vmatprep.subr.bf16.mxu0 %v2855
        %2897 = vmatpush1.bf16.msra.mxu0 %v2854
        %2898 = vmatprep.subr.bf16.mxu0 %v2853
        %2899 = vmatpush1.bf16.msra.mxu0 %v2852
        %2900 = vmatprep.subr.bf16.mxu0 0
        %2901 = vmatpush2.bf16.msra.mxu0 0
        %2902 = vmatprep.subr.bf16.mxu0 0
        %2903 = vmatpush2.bf16.msra.mxu0 0
        %2904 = vmatprep.subr.bf16.mxu0 0
        %2905 = vmatpush2.bf16.msra.mxu0 0
        %2906 = vmatprep.subr.bf16.mxu0 0
        %2907 = vmatpush2.bf16.msra.mxu0 0
        %2908 = vmatprep.subr.bf16.mxu0 0
        %2909 = vmatpush2.bf16.msra.mxu0 0
        %2910 = vmatprep.subr.bf16.mxu0 0
        %2911 = vmatpush2.bf16.msra.mxu0 0
        %2912 = vmatprep.subr.bf16.mxu0 0
        %2913 = vmatpush2.bf16.msra.mxu0 0
        %2914 = vmatprep.subr.bf16.mxu0 0
        %2915 = vmatpush2.bf16.msra.mxu0 0
        %2916 = vmatprep.mubr.bf16.mxu0 0
        %2917 = vmatmul.mubr.bf16.gmra.mxu0 %v2774
        %v2918 = vpop.f32.mrf.mxu0
        %v2919 = vadd.f32 %v2797, %v2918
        %v2920 = vpop.f32.mrf.mxu0
        %v2921 = vadd.f32 %v2801, %v2920
        %v2922 = vpop.f32.mrf.mxu0
        %v2923 = vadd.f32 %v2797, %v2922
        %v2924 = vpop.f32.mrf.mxu0
        %v2925 = vadd.f32 %v2801, %v2924
        %2926 = vmatprep.mubr.bf16.mxu0 0
        %2927 = vmatmul.mubr.bf16.gmra.mxu0 %v2775
        %v2928 = vpop.f32.mrf.mxu0
        %v2929 = vadd.f32 %v2797, %v2928
        %v2930 = vpop.f32.mrf.mxu0
        %v2931 = vadd.f32 %v2801, %v2930
        %v2932 = vpop.f32.mrf.mxu0
        %v2933 = vadd.f32 %v2797, %v2932
        %v2934 = vpop.f32.mrf.mxu0
        %v2935 = vadd.f32 %v2801, %v2934
        %2936 = vdwg.mxu0
        %v2937 = vmul.f32 %v2919, 0.5
        %v2938 = vmul.f32 %v2921, 0.5
        %v2939 = vmul.f32 %v2923, 0.5
        %v2940 = vmul.f32 %v2925, 0.5
        %v2941 = vmul.f32 %v2929, 0.5
        %v2942 = vmul.f32 %v2931, 0.5
        %v2943 = vmul.f32 %v2933, 0.5
        %v2944 = vmul.f32 %v2935, 0.5
        %v2945 = vrcp.pop 1.4142135
        %v2946 = vmul.f32 %v2919, %v2945
        %v2947 = vmul.f32 %v2921, %v2945
        %v2948 = vmul.f32 %v2923, %v2945
        %v2949 = vmul.f32 %v2925, %v2945
        %v2950 = vmul.f32 %v2929, %v2945
        %v2951 = vmul.f32 %v2931, %v2945
        %v2952 = vmul.f32 %v2933, %v2945
        %v2953 = vmul.f32 %v2935, %v2945
        %v2954 = verf.f32.pop %v2946
        %v2955 = verf.f32.pop %v2947
        %v2956 = verf.f32.pop %v2948
        %v2957 = verf.f32.pop %v2949
        %v2958 = verf.f32.pop %v2950
        %v2959 = verf.f32.pop %v2951
        %v2960 = verf.f32.pop %v2952
        %v2961 = verf.f32.pop %v2953
        %v2962 = vadd.f32 %v2954, 1.0
        %v2963 = vadd.f32 %v2955, 1.0
        %v2964 = vadd.f32 %v2956, 1.0
        %v2965 = vadd.f32 %v2957, 1.0
        %v2966 = vadd.f32 %v2958, 1.0
        %v2967 = vadd.f32 %v2959, 1.0
        %v2968 = vadd.f32 %v2960, 1.0
        %v2969 = vadd.f32 %v2961, 1.0
        %v2970 = vmul.f32 %v2937, %v2962
        %v2971 = vmul.f32 %v2938, %v2963
        %v2972 = vmul.f32 %v2939, %v2964
        %v2973 = vmul.f32 %v2940, %v2965
        %v2974 = vmul.f32 %v2941, %v2966
        %v2975 = vmul.f32 %v2942, %v2967
        %v2976 = vmul.f32 %v2943, %v2968
        %v2977 = vmul.f32 %v2944, %v2969
        %v2978 = vpack.c.bf16 %v2972, %v2970
        %v2979 = vpack.c.bf16 %v2973, %v2971
        %v2980 = vpack.c.bf16 %v2976, %v2974
        %v2981 = vpack.c.bf16 %v2977, %v2975
        %v2982 = vld [vmem:[%s875] sm:$0xf]
        %v2983 = vld [vmem:[%s875 + $0x4] sm:$0xf]
        %v2984 = vld [vmem:[%s875 + $0x8] sm:$0xf]
        %v2985 = vld [vmem:[%s875 + $0xc] sm:$0xf]
        %v2986 = vld [vmem:[%s875 + $0x10] sm:$0xf]
        %v2987 = vld [vmem:[%s875 + $0x14] sm:$0xf]
        %v2988 = vld [vmem:[%s875 + $0x18] sm:$0xf]
        %v2989 = vld [vmem:[%s875 + $0x1c] sm:$0xf]
        %v2990 = vld [vmem:[%s875 + $0x20] sm:$0xf]
        %v2991 = vld [vmem:[%s875 + $0x24] sm:$0xf]
        %v2992 = vld [vmem:[%s875 + $0x28] sm:$0xf]
        %v2993 = vld [vmem:[%s875 + $0x2c] sm:$0xf]
        %v2994 = vld [vmem:[%s875 + $0x30] sm:$0xf]
        %v2995 = vld [vmem:[%s875 + $0x34] sm:$0xf]
        %v2996 = vld [vmem:[%s875 + $0x38] sm:$0xf]
        %v2997 = vld [vmem:[%s875 + $0x3c] sm:$0xf]
        %v2998 = vld [vmem:[%s875 + $0x40] sm:$0xf]
        %v2999 = vld [vmem:[%s875 + $0x44] sm:$0xf]
        %v3000 = vld [vmem:[%s875 + $0x48] sm:$0xf]
        %v3001 = vld [vmem:[%s875 + $0x4c] sm:$0xf]
        %v3002 = vld [vmem:[%s875 + $0x50] sm:$0xf]
        %v3003 = vld [vmem:[%s875 + $0x54] sm:$0xf]
        %v3004 = vld [vmem:[%s875 + $0x58] sm:$0xf]
        %v3005 = vld [vmem:[%s875 + $0x5c] sm:$0xf]
        %v3006 = vld [vmem:[%s875 + $0x60] sm:$0xf]
        %v3007 = vld [vmem:[%s875 + $0x64] sm:$0xf]
        %v3008 = vld [vmem:[%s875 + $0x68] sm:$0xf]
        %v3009 = vld [vmem:[%s875 + $0x6c] sm:$0xf]
        %v3010 = vld [vmem:[%s875 + $0x70] sm:$0xf]
        %v3011 = vld [vmem:[%s875 + $0x74] sm:$0xf]
        %v3012 = vld [vmem:[%s875 + $0x78] sm:$0xf]
        %v3013 = vld [vmem:[%s875 + $0x7c] sm:$0xf]
        %v3014 = vld [vmem:[%s998] sm:$0x1]
        %v3016 = vlaneseq
        %v3017 = vshrl.u32 %v3016, 7
        %v3018 = vsub.s32 0, %v3017
        %v3019 = vrot.slane %v3014, %v3018
        %v3053 = vunpack.c.l.b16 %v2982
        %v3054 = vunpack.c.l.b16 %v2983
        %v3055 = vunpack.c.l.b16 %v2984
        %v3056 = vunpack.c.l.b16 %v2985
        %v3057 = vunpack.c.l.b16 %v2986
        %v3058 = vunpack.c.l.b16 %v2987
        %v3059 = vunpack.c.l.b16 %v2988
        %v3060 = vunpack.c.l.b16 %v2989
        %v3061 = vunpack.c.l.b16 %v2990
        %v3062 = vunpack.c.l.b16 %v2991
        %v3063 = vunpack.c.l.b16 %v2992
        %v3064 = vunpack.c.l.b16 %v2993
        %v3065 = vunpack.c.l.b16 %v2994
        %v3066 = vunpack.c.l.b16 %v2995
        %v3067 = vunpack.c.l.b16 %v2996
        %v3068 = vunpack.c.l.b16 %v2997
        %v3069 = vunpack.c.l.b16 %v2998
        %v3070 = vunpack.c.l.b16 %v2999
        %v3071 = vunpack.c.l.b16 %v3000
        %v3072 = vunpack.c.l.b16 %v3001
        %v3073 = vunpack.c.l.b16 %v3002
        %v3074 = vunpack.c.l.b16 %v3003
        %v3075 = vunpack.c.l.b16 %v3004
        %v3076 = vunpack.c.l.b16 %v3005
        %v3077 = vunpack.c.l.b16 %v3006
        %v3078 = vunpack.c.l.b16 %v3007
        %v3079 = vunpack.c.l.b16 %v3008
        %v3080 = vunpack.c.l.b16 %v3009
        %v3081 = vunpack.c.l.b16 %v3010
        %v3082 = vunpack.c.l.b16 %v3011
        %v3083 = vunpack.c.l.b16 %v3012
        %v3084 = vunpack.c.l.b16 %v3013
        %v3085 = vpack.c.b16 %v3054, %v3053
        %v3086 = vpack.c.b16 %v3056, %v3055
        %v3087 = vpack.c.b16 %v3058, %v3057
        %v3088 = vpack.c.b16 %v3060, %v3059
        %v3089 = vpack.c.b16 %v3062, %v3061
        %v3090 = vpack.c.b16 %v3064, %v3063
        %v3091 = vpack.c.b16 %v3066, %v3065
        %v3092 = vpack.c.b16 %v3068, %v3067
        %v3093 = vpack.c.b16 %v3070, %v3069
        %v3094 = vpack.c.b16 %v3072, %v3071
        %v3095 = vpack.c.b16 %v3074, %v3073
        %v3096 = vpack.c.b16 %v3076, %v3075
        %v3097 = vpack.c.b16 %v3078, %v3077
        %v3098 = vpack.c.b16 %v3080, %v3079
        %v3099 = vpack.c.b16 %v3082, %v3081
        %v3100 = vpack.c.b16 %v3084, %v3083
        %3117 = vmatprep.subr.bf16.mxu0 0
        %3118 = vmatpush1.bf16.msra.mxu0 %v3092
        %3119 = vmatprep.subr.bf16.mxu0 0
        %3120 = vmatpush1.bf16.msra.mxu0 %v3091
        %3121 = vmatprep.subr.bf16.mxu0 0
        %3122 = vmatpush1.bf16.msra.mxu0 %v3090
        %3123 = vmatprep.subr.bf16.mxu0 0
        %3124 = vmatpush1.bf16.msra.mxu0 %v3089
        %3125 = vmatprep.subr.bf16.mxu0 0
        %3126 = vmatpush1.bf16.msra.mxu0 %v3088
        %3127 = vmatprep.subr.bf16.mxu0 0
        %3128 = vmatpush1.bf16.msra.mxu0 %v3087
        %3129 = vmatprep.subr.bf16.mxu0 0
        %3130 = vmatpush1.bf16.msra.mxu0 %v3086
        %3131 = vmatprep.subr.bf16.mxu0 0
        %3132 = vmatpush1.bf16.msra.mxu0 %v3085
        %3133 = vmatprep.subr.bf16.mxu0 0
        %3134 = vmatpush2.bf16.msra.mxu0 %v3100
        %3135 = vmatprep.subr.bf16.mxu0 0
        %3136 = vmatpush2.bf16.msra.mxu0 %v3099
        %3137 = vmatprep.subr.bf16.mxu0 0
        %3138 = vmatpush2.bf16.msra.mxu0 %v3098
        %3139 = vmatprep.subr.bf16.mxu0 0
        %3140 = vmatpush2.bf16.msra.mxu0 %v3097
        %3141 = vmatprep.subr.bf16.mxu0 0
        %3142 = vmatpush2.bf16.msra.mxu0 %v3096
        %3143 = vmatprep.subr.bf16.mxu0 0
        %3144 = vmatpush2.bf16.msra.mxu0 %v3095
        %3145 = vmatprep.subr.bf16.mxu0 0
        %3146 = vmatpush2.bf16.msra.mxu0 %v3094
        %3147 = vmatprep.subr.bf16.mxu0 0
        %3148 = vmatpush2.bf16.msra.mxu0 %v3093
        %3149 = vmatprep.mubr.bf16.mxu0 %v2979
        %3150 = vmatmul.mubr.bf16.gmra.mxu0 %v2978
        %v3151 = vpop.f32.mrf.mxu0
        %v3152 = vadd.f32 %v3019, %v3151
        %v3153 = vpop.f32.mrf.mxu0
        %v3154 = vpop.f32.mrf.mxu0
        %v3155 = vadd.f32 %v3019, %v3154
        %v3156 = vpop.f32.mrf.mxu0
        %3157 = vmatprep.mubr.bf16.mxu0 %v2981
        %3158 = vmatmul.mubr.bf16.gmra.mxu0 %v2980
        %v3159 = vpop.f32.mrf.mxu0
        %v3160 = vadd.f32 %v3019, %v3159
        %v3161 = vpop.f32.mrf.mxu0
        %v3162 = vpop.f32.mrf.mxu0
        %v3163 = vadd.f32 %v3019, %v3162
        %v3164 = vpop.f32.mrf.mxu0
        %3165 = vdwg.mxu0
        %v3166 = vadd.f32 %v2770, %v3152
        %v3167 = vadd.f32 %v2771, %v3155
        %v3168 = vadd.f32 %v2772, %v3160
        %v3169 = vadd.f32 %v2773, %v3163
        %v3170 = vld [vmem:[%s1001] sm:$0x1]
        %v3171 = vld [vmem:[%s1004] sm:$0x1]
        %3172 = vadd.xlane.f32.xlu0 %v3166
        %v3173 = vpop.xlane.xlu0 %3172
        %3174 = vadd.xlane.f32.xlu0 %v3167
        %v3175 = vpop.xlane.xlu0 %3174
        %3176 = vadd.xlane.f32.xlu0 %v3168
        %v3177 = vpop.xlane.xlu0 %3176
        %3178 = vadd.xlane.f32.xlu0 %v3169
        %v3179 = vpop.xlane.xlu0 %3178
        %v3180 = vmul.f32 %v3173, %v2717
        %v3181 = vmul.f32 %v3175, %v2717
        %v3182 = vmul.f32 %v3177, %v2717
        %v3183 = vmul.f32 %v3179, %v2717
        %v3184 = vsub.f32 %v3166, %v3180
        %v3185 = vsub.f32 %v3167, %v3181
        %v3186 = vsub.f32 %v3168, %v3182
        %v3187 = vsub.f32 %v3169, %v3183
        %v3188 = vmul.f32 %v3184, %v3184
        %v3189 = vmul.f32 %v3185, %v3185
        %v3190 = vmul.f32 %v3186, %v3186
        %v3191 = vmul.f32 %v3187, %v3187
        %3192 = vadd.xlane.f32.xlu0 %v3188
        %v3193 = vpop.xlane.xlu0 %3192
        %3194 = vadd.xlane.f32.xlu0 %v3189
        %v3195 = vpop.xlane.xlu0 %3194
        %3196 = vadd.xlane.f32.xlu0 %v3190
        %v3197 = vpop.xlane.xlu0 %3196
        %3198 = vadd.xlane.f32.xlu0 %v3191
        %v3199 = vpop.xlane.xlu0 %3198
        %v3200 = vmul.f32 %v3193, %v2717
        %v3201 = vmul.f32 %v3195, %v2717
        %v3202 = vmul.f32 %v3197, %v2717
        %v3203 = vmul.f32 %v3199, %v2717
        %v3204 = vadd.f32 %v3200, 1e-12
        %v3205 = vadd.f32 %v3201, 1e-12
        %v3206 = vadd.f32 %v3202, 1e-12
        %v3207 = vadd.f32 %v3203, 1e-12
        %v3208 = vrsqrt.pop %v3204
        %v3209 = vrsqrt.pop %v3205
        %v3210 = vrsqrt.pop %v3206
        %v3211 = vrsqrt.pop %v3207
        %v3212 = vmul.f32 %v3184, %v3208
        %v3213 = vmul.f32 %v3185, %v3209
        %v3214 = vmul.f32 %v3186, %v3210
        %v3215 = vmul.f32 %v3187, %v3211
        %v3217 = vlaneseq
        %v3218 = vshrl.u32 %v3217, 7
        %v3219 = vsub.s32 0, %v3218
        %v3220 = vrot.slane %v3170, %v3219
        %v3222 = vmul.f32 %v3220, %v3212
        %v3223 = vmul.f32 %v3220, %v3213
        %v3224 = vmul.f32 %v3220, %v3214
        %v3225 = vmul.f32 %v3220, %v3215
        %v3227 = vlaneseq
        %v3228 = vshrl.u32 %v3227, 7
        %v3229 = vsub.s32 0, %v3228
        %v3230 = vrot.slane %v3171, %v3229
        %v3232 = vadd.f32 %v3222, %v3230
        %v3233 = vadd.f32 %v3223, %v3230
        %v3234 = vadd.f32 %v3224, %v3230
        %v3235 = vadd.f32 %v3225, %v3230
        %3236 = vst [vmem:[#allocation2] sm:$0xff] %v3232
        %3237 = vst [vmem:[#allocation2 + $0x8] sm:$0xff] %v3233
        %3238 = vst [vmem:[#allocation2 + $0x10] sm:$0xff] %v3234
        %3239 = vst [vmem:[#allocation2 + $0x18] sm:$0xff] %v3235
        %p3240 = scmp.eq.s32.totalorder %s44, 2
        // Predicated region
        $region145: #{tpu_custom_call.1} parent=91 // pred_check
          %p3241 = pneg %p3240
        $region146: #{tpu_custom_call.1} parent=91 // pred_check_branch
          %3243 = sbr.rel (%p3241) target = $region148
        $region147: #{tpu_custom_call.1} parent=91 // pred_region
          %v3244 = vld [vmem:[#allocation18] sm:$0xff]
          %v3245 = vld [vmem:[#allocation18 + $0x8] sm:$0xff]
          %v3246 = vld [vmem:[#allocation18 + $0x10] sm:$0xff]
          %v3247 = vld [vmem:[#allocation18 + $0x18] sm:$0xff]
          %v3248 = vld [vmem:[#allocation18 + $0x20] sm:$0xff]
          %v3249 = vld [vmem:[#allocation18 + $0x28] sm:$0xff]
          %v3250 = vld [vmem:[#allocation18 + $0x30] sm:$0xff]
          %v3251 = vld [vmem:[#allocation18 + $0x38] sm:$0xff]
          %v3252 = vld [vmem:[#allocation18 + $0x40] sm:$0xff]
          %v3253 = vld [vmem:[#allocation18 + $0x48] sm:$0xff]
          %v3254 = vld [vmem:[#allocation18 + $0x50] sm:$0xff]
          %v3255 = vld [vmem:[#allocation18 + $0x58] sm:$0xff]
          %v3256 = vld [vmem:[#allocation18 + $0x60] sm:$0xff]
          %v3257 = vld [vmem:[#allocation18 + $0x68] sm:$0xff]
          %v3258 = vld [vmem:[#allocation18 + $0x70] sm:$0xff]
          %v3259 = vld [vmem:[#allocation18 + $0x78] sm:$0xff]
          %v3260 = vld [vmem:[%s17] sm:$0x1]
          %v3262 = vlaneseq
          %v3263 = vshrl.u32 %v3262, 7
          %v3264 = vsub.s32 0, %v3263
          %v3265 = vrot.slane %v3260, %v3264
          %v3269 = vrot.slane %v3234, 7
          %vm3270 = vcmask 1041409
          %v3271 = vsel %vm3270, %v3269, %v3232
          %3273 = vmatprep.subr.mxu0 0.0
          %3274 = vmatpush1.msra.mxu0 %v3259
          %3275 = vmatprep.subr.mxu0 0.0
          %3276 = vmatpush1.msra.mxu0 %v3258
          %3277 = vmatprep.subr.mxu0 0.0
          %3278 = vmatpush1.msra.mxu0 %v3257
          %3279 = vmatprep.subr.mxu0 0.0
          %3280 = vmatpush1.msra.mxu0 %v3256
          %3281 = vmatprep.subr.mxu0 0.0
          %3282 = vmatpush1.msra.mxu0 %v3255
          %3283 = vmatprep.subr.mxu0 0.0
          %3284 = vmatpush1.msra.mxu0 %v3254
          %3285 = vmatprep.subr.mxu0 0.0
          %3286 = vmatpush1.msra.mxu0 %v3253
          %3287 = vmatprep.subr.mxu0 0.0
          %3288 = vmatpush1.msra.mxu0 %v3252
          %3289 = vmatprep.subr.mxu0 0.0
          %3290 = vmatpush1.msra.mxu0 %v3251
          %3291 = vmatprep.subr.mxu0 0.0
          %3292 = vmatpush1.msra.mxu0 %v3250
          %3293 = vmatprep.subr.mxu0 0.0
          %3294 = vmatpush1.msra.mxu0 %v3249
          %3295 = vmatprep.subr.mxu0 0.0
          %3296 = vmatpush1.msra.mxu0 %v3248
          %3297 = vmatprep.subr.mxu0 0.0
          %3298 = vmatpush1.msra.mxu0 %v3247
          %3299 = vmatprep.subr.mxu0 0.0
          %3300 = vmatpush1.msra.mxu0 %v3246
          %3301 = vmatprep.subr.mxu0 0.0
          %3302 = vmatpush1.msra.mxu0 %v3245
          %3303 = vmatprep.subr.mxu0 0.0
          %3304 = vmatpush1.msra.mxu0 %v3244
          %3305 = vmatprep.subr.mxu0 0.0
          %3306 = vmatpush2.msra.mxu0 0.0
          %3307 = vmatprep.subr.mxu0 0.0
          %3308 = vmatpush2.msra.mxu0 0.0
          %3309 = vmatprep.subr.mxu0 0.0
          %3310 = vmatpush2.msra.mxu0 0.0
          %3311 = vmatprep.subr.mxu0 0.0
          %3312 = vmatpush2.msra.mxu0 0.0
          %3313 = vmatprep.subr.mxu0 0.0
          %3314 = vmatpush2.msra.mxu0 0.0
          %3315 = vmatprep.subr.mxu0 0.0
          %3316 = vmatpush2.msra.mxu0 0.0
          %3317 = vmatprep.subr.mxu0 0.0
          %3318 = vmatpush2.msra.mxu0 0.0
          %3319 = vmatprep.subr.mxu0 0.0
          %3320 = vmatpush2.msra.mxu0 0.0
          %3321 = vmatprep.subr.mxu0 0.0
          %3322 = vmatpush2.msra.mxu0 0.0
          %3323 = vmatprep.subr.mxu0 0.0
          %3324 = vmatpush2.msra.mxu0 0.0
          %3325 = vmatprep.subr.mxu0 0.0
          %3326 = vmatpush2.msra.mxu0 0.0
          %3327 = vmatprep.subr.mxu0 0.0
          %3328 = vmatpush2.msra.mxu0 0.0
          %3329 = vmatprep.subr.mxu0 0.0
          %3330 = vmatpush2.msra.mxu0 0.0
          %3331 = vmatprep.subr.mxu0 0.0
          %3332 = vmatpush2.msra.mxu0 0.0
          %3333 = vmatprep.subr.mxu0 0.0
          %3334 = vmatpush2.msra.mxu0 0.0
          %3335 = vmatprep.subr.mxu0 0.0
          %3336 = vmatpush2.msra.mxu0 0.0
          %3337 = vmatprep.mubr.f32.mxu0 0.0
          %3338 = vmatmul.mubr.f32.gmra.mxu0 %v3271
          %v3339 = vpop.f32.mrf.mxu0
          %v3340 = vadd.f32 %v3265, %v3339
          %v3341 = vpop.f32.mrf.mxu0
          %3342 = vdwg.mxu0
          %v3345 = vunpack.c.l.s4 1966171168
          %v3346 = vunpack.c.0.s8 %v3345
          %v3347 = vlaneseq
          %v3348 = vshrl.u32 %v3347, 7
          %v3349 = vsub.s32 %v3346, %v3348
          %v3350 = vrot.slane %v3340, %v3349
          %v3351 = vcombine.high %v3350, %v3350
          %v3353 = vunpack.c.l.s4 1966171168
          %v3354 = vunpack.c.0.s8 %v3353
          %v3355 = vlaneseq
          %v3356 = vshrl.u32 %v3355, 7
          %v3357 = vsub.s32 %v3354, %v3356
          %v3358 = vrot.slane %v3350, %v3357
          %v3360 = vunpack.c.l.s4 1966171168
          %v3361 = vunpack.c.0.s8 %v3360
          %v3362 = vlaneseq
          %v3363 = vshrl.u32 %v3362, 7
          %v3364 = vsub.s32 %v3361, %v3363
          %v3365 = vrot.slane %v3351, %v3364
          %3368 = vst [vmem:[%s985] sm:$0x1] %v3358
          %3369 = vst [vmem:[%s985 + $0x1] sm:$0x1] %v3365
        $region148: #{tpu_custom_call.1} parent=91 // pred_fallthru
          _
        %s3370 = sand.u32 %s507, 1
        %s3371 = scalar_lea.sflag [#allocation5], %s3370
        %s3372 = sand.u32 %s507, 1
        %s3373 = smul.addr %s3372, 2
        %s3374 = scalar_lea.vmem [#allocation19], %s3373
        // Predicated region
        $region149: #{tpu_custom_call.1} parent=91 // pred_check
          %p3375 = pneg %p517
        $region150: #{tpu_custom_call.1} parent=91 // pred_check_branch
          %3377 = sbr.rel (%p3375) target = $region152
        $region151: #{tpu_custom_call.1} parent=91 // pred_region
          %s3378 = smul.u32 2, %s43
          %s3380 = ssub.s32 32, 32
          %3381 = vsyncadd %s3371, %s3380
          %s3382 = smul.addr %s3378, 16
          %s3383 = scalar_lea.hbm %s18, %s3382
          %s3384 = sshll.u32 %s3374, 4
          %s3385 = int_to_ptr.vmem [resolvable:$true] %s3384
          %3390 = dma.vmem_to_hbm [thread:$0]  %s3385, 32, %s3383, %s3371, 16, 16, 1
        $region152: #{tpu_custom_call.1} parent=91 // pred_fallthru
          _
      $region92: #{tpu_custom_call.1} parent=5 // pred_fallthru
        _
      %p3391 = scmp.le.s32.totalorder 2, %s34
      // Predicated region
      $region153: #{tpu_custom_call.1} parent=5 // pred_check
        %p3392 = pneg %p3391
      $region154: #{tpu_custom_call.1} parent=5 // pred_check_branch
        %3394 = sbr.rel (%p3392) target = $region156
      $region155: #{tpu_custom_call.1} parent=5 // pred_region
        %s3395 = ssub.s32 %s34, 2
        // Predicated region
        $region157: #{tpu_custom_call.1} parent=155 // pred_check
          %p3396 = pneg %p523
        $region158: #{tpu_custom_call.1} parent=155 // pred_check_branch
          %3398 = sbr.rel (%p3396) target = $region160
        $region159: #{tpu_custom_call.1} parent=155 // pred_region
          %s3399 = sand.u32 %s508, 1
          %s3400 = scalar_lea.sflag [#allocation5], %s3399
          %s3401 = sand.u32 %s508, 1
          %s3402 = smul.addr %s3401, 2
          %s3403 = scalar_lea.vmem [#allocation19], %s3402
          %3404 = dma.done %s3400, 32
        $region160: #{tpu_custom_call.1} parent=155 // pred_fallthru
          _
      $region156: #{tpu_custom_call.1} parent=5 // pred_fallthru
        _
    $region6: #{tpu_custom_call.1} parent=1 // loop_footer
      %s38 = sadd.s32 1, %s34
    $region7: #{tpu_custom_call.1} parent=1 // loop_footer_branch
      %33 = sbr.rel target = $region3
    $region8: #{tpu_custom_call.1} parent=1 // loop_exit
      _
    %3405 = vsyncpa [#allocation4], 1
    %s3406 = scalar_lea.sflag [#allocation4], 1
    %3407 = vsyncpa %s3406, 1
    %3408 = vsyncpa [#allocation7], 1
    %s3409 = scalar_lea.sflag [#allocation7], 1
    %3410 = vsyncpa %s3409, 1
    %3411 = vsyncpa [#allocation10], 1
    %3412 = vsyncpa [#allocation5], 1
    %s3413 = scalar_lea.sflag [#allocation5], 1
    %3414 = vsyncpa %s3413, 1

</llo_original>
